<compile_context>
chip_gen: v6e
topology: v6e:2x2x1
jax: 0.10.0
libtpu: 0.0.40
codegen_flags: <defaults>
</compile_context>

<pallas_src>
import functools
import math

import jax
import jax.numpy as jnp
from jax.experimental import pallas as pl
from jax.experimental.pallas import tpu as pltpu


_VMEM_LIMIT = 32 * 1024 * 1024  # safe on v5e/v6e/v7x; actual tile working sets are far below this


def _cparams(*sems):
    return pltpu.CompilerParams(dimension_semantics=tuple(sems),
                                vmem_limit_bytes=_VMEM_LIMIT)


def _row_tile(m, target):
    """Largest row-tile (multiple of 8) dividing m, capped at `target`; falls back to full m."""
    if m <= target:
        return m
    for t in (target, 512, 256, 128, 64, 32, 16, 8):
        if t <= target and m % t == 0:
            return t
    return m


# ----------------------------------------------------------------------------- Pallas kernels

def _linear_kernel(x_ref, w_ref, b_ref, o_ref, *, act):
    # x: (tm, K), w: (K, N), b: (1, N) -> o: (tm, N).  bf16 MXU matmul, f32 accumulate.
    y = jnp.dot(x_ref[...].astype(jnp.bfloat16), w_ref[...].astype(jnp.bfloat16),
                preferred_element_type=jnp.float32) + b_ref[...]
    if act == "leaky_relu":
        y = jnp.where(y >= 0.0, y, 0.01 * y)   # PyTorch LeakyReLU default slope
    o_ref[...] = y.astype(o_ref.dtype)


def _linear_ln_kernel(x_ref, w_ref, b_ref, g_ref, be_ref, o_ref, *, act):
    # Fused Linear -> (LeakyReLU) -> LayerNorm (eps=1e-5, f32 statistics).
    y = jnp.dot(x_ref[...].astype(jnp.bfloat16), w_ref[...].astype(jnp.bfloat16),
                preferred_element_type=jnp.float32) + b_ref[...]
    if act == "leaky_relu":
        y = jnp.where(y >= 0.0, y, 0.01 * y)
    mean = jnp.mean(y, axis=-1, keepdims=True)
    var = jnp.mean((y - mean) ** 2, axis=-1, keepdims=True)
    yn = (y - mean) * jax.lax.rsqrt(var + 1e-5)
    o_ref[...] = (yn * g_ref[...] + be_ref[...]).astype(o_ref.dtype)


def _add_ln_kernel(x_ref, y_ref, g_ref, b_ref, o_ref):
    # Fused residual-add + LayerNorm: o = LN(x + y).
    z = x_ref[...].astype(jnp.float32) + y_ref[...].astype(jnp.float32)
    mean = jnp.mean(z, axis=-1, keepdims=True)
    var = jnp.mean((z - mean) ** 2, axis=-1, keepdims=True)
    zn = (z - mean) * jax.lax.rsqrt(var + 1e-5)
    o_ref[...] = (zn * g_ref[...] + b_ref[...]).astype(o_ref.dtype)


def _ffn_ln_kernel(x_ref, w1_ref, b1_ref, w2_ref, b2_ref, g_ref, be_ref, o_ref):
    # Fused FFN block: o = LN(x + W2 @ leaky(W1 @ x + b1) + b2); d_ff intermediate stays in VMEM.
    x = x_ref[...].astype(jnp.float32)
    h = jnp.dot(x.astype(jnp.bfloat16), w1_ref[...].astype(jnp.bfloat16),
                preferred_element_type=jnp.float32) + b1_ref[...]
    h = jnp.where(h >= 0.0, h, 0.01 * h)
    y = jnp.dot(h.astype(jnp.bfloat16), w2_ref[...].astype(jnp.bfloat16),
                preferred_element_type=jnp.float32) + b2_ref[...]
    z = x + y
    mean = jnp.mean(z, axis=-1, keepdims=True)
    var = jnp.mean((z - mean) ** 2, axis=-1, keepdims=True)
    zn = (z - mean) * jax.lax.rsqrt(var + 1e-5)
    o_ref[...] = (zn * g_ref[...] + be_ref[...]).astype(o_ref.dtype)


def _attn_kernel(q_ref, kv_ref, o_ref, *, num_heads, d, kv_off, scale):
    # q_ref block : (1, tq, Cq)   -- q columns are [0, d)      (Cq = d or 3d when QKV-packed)
    # kv_ref block: (1, Lk, Ckv)  -- k columns [kv_off, kv_off+d), v columns [kv_off+d, kv_off+2d)
    # All heads of this (batch, q-tile) are processed in one program (static unrolled head loop).
    dh = d // num_heads
    q_full = q_ref[0]
    kv_full = kv_ref[0]
    head_outs = []
    for h in range(num_heads):
        c0 = h * dh
        qh = q_full[:, c0:c0 + dh].astype(jnp.bfloat16)                       # (tq, dh)
        kh = kv_full[:, kv_off + c0:kv_off + c0 + dh].astype(jnp.bfloat16)    # (Lk, dh)
        vh = kv_full[:, kv_off + d + c0:kv_off + d + c0 + dh].astype(jnp.bfloat16)
        # scores = q @ k^T without materializing a transpose of K (contract last dims).
        s = jax.lax.dot_general(qh, kh, (((1,), (1,)), ((), ())),
                                preferred_element_type=jnp.float32) * scale   # (tq, Lk)
        m = jnp.max(s, axis=-1, keepdims=True)
        p = jnp.exp(s - m)
        p = p * pl.reciprocal(jnp.sum(p, axis=-1, keepdims=True), approx=True)
        head_outs.append(jnp.dot(p.astype(jnp.bfloat16), vh,
                                 preferred_element_type=jnp.float32))          # (tq, dh)
    o_ref[0] = jnp.concatenate(head_outs, axis=-1).astype(o_ref.dtype)


def _maxpool_kernel(x_ref, o_ref):
    # x block: (B, tn, D); output (B, D) is a resident accumulator across the point-tile axis.
    tile_max = jnp.max(x_ref[...], axis=1)

    @pl.when(pl.program_id(0) == 0)
    def _():
        o_ref[...] = tile_max

    @pl.when(pl.program_id(0) > 0)
    def _():
        o_ref[...] = jnp.maximum(o_ref[...], tile_max)


# ----------------------------------------------------------------------------- kernel wrappers

def pallas_linear(x, w, b, act=None, ln=None):
    """y = [LN](act(x @ w + b)); row-tiled, weight VMEM-resident, bf16 MXU / f32 accumulation."""
    K, N = w.shape
    lead = x.shape[:-1]
    M = max(1, math.prod(lead))
    x2d = x.reshape(M, K)

    # Pad a tiny contraction dim (input projection K=3) up to 8 for the MXU.
    if K < 8:
        x2d = jnp.pad(x2d, ((0, 0), (0, 8 - K)))
        w = jnp.pad(w, ((0, 8 - K), (0, 0)))
        K = 8

    # Pad a tiny output dim (output projection N=3) to a lane-dense width; slice after the call.
    Np = N
    if ln is None and N < 8:
        Np = 128
        w = jnp.pad(w, ((0, 0), (0, Np - N)))
        b = jnp.pad(b, (0, Np - N))

    tm = _row_tile(M, 256)
    in_specs = [pl.BlockSpec((tm, K), lambda i: (i, 0)),
                pl.BlockSpec((K, Np), lambda i: (0, 0)),
                pl.BlockSpec((1, Np), lambda i: (0, 0))]
    args = [x2d, w, b.reshape(1, Np)]
    if ln is None:
        kernel = functools.partial(_linear_kernel, act=act)
    else:
        gamma, beta = ln
        kernel = functools.partial(_linear_ln_kernel, act=act)
        in_specs += [pl.BlockSpec((1, Np), lambda i: (0, 0)),
                     pl.BlockSpec((1, Np), lambda i: (0, 0))]
        args += [gamma.reshape(1, Np), beta.reshape(1, Np)]

    out = pl.pallas_call(
        kernel,
        grid=(M // tm,),
        in_specs=in_specs,
        out_specs=pl.BlockSpec((tm, Np), lambda i: (i, 0)),
        out_shape=jax.ShapeDtypeStruct((M, Np), jnp.float32),
        compiler_params=_cparams("parallel"),
    )(*args)
    if Np != N:
        out = out[:, :N]
    return out.reshape(lead + (N,))


def pallas_add_ln(x, y, gamma, beta):
    """LN(x + y) fused (residual add + LayerNorm), row-tiled."""
    D = x.shape[-1]
    lead = x.shape[:-1]
    M = max(1, math.prod(lead))
    tm = _row_tile(M, 512)
    out = pl.pallas_call(
        _add_ln_kernel,
        grid=(M // tm,),
        in_specs=[pl.BlockSpec((tm, D), lambda i: (i, 0)),
                  pl.BlockSpec((tm, D), lambda i: (i, 0)),
                  pl.BlockSpec((1, D), lambda i: (0, 0)),
                  pl.BlockSpec((1, D), lambda i: (0, 0))],
        out_specs=pl.BlockSpec((tm, D), lambda i: (i, 0)),
        out_shape=jax.ShapeDtypeStruct((M, D), jnp.float32),
        compiler_params=_cparams("parallel"),
    )(x.reshape(M, D), y.reshape(M, D), gamma.reshape(1, D), beta.reshape(1, D))
    return out.reshape(lead + (D,))


def pallas_ffn_ln(x, w1, b1, w2, b2, gamma, beta):
    """LN(x + FFN(x)) fully fused; d_ff intermediate never leaves VMEM."""
    D = x.shape[-1]
    F = w1.shape[1]
    lead = x.shape[:-1]
    M = max(1, math.prod(lead))
    tm = _row_tile(M, 256)
    out = pl.pallas_call(
        _ffn_ln_kernel,
        grid=(M // tm,),
        in_specs=[pl.BlockSpec((tm, D), lambda i: (i, 0)),
                  pl.BlockSpec((D, F), lambda i: (0, 0)),
                  pl.BlockSpec((1, F), lambda i: (0, 0)),
                  pl.BlockSpec((F, D), lambda i: (0, 0)),
                  pl.BlockSpec((1, D), lambda i: (0, 0)),
                  pl.BlockSpec((1, D), lambda i: (0, 0)),
                  pl.BlockSpec((1, D), lambda i: (0, 0))],
        out_specs=pl.BlockSpec((tm, D), lambda i: (i, 0)),
        out_shape=jax.ShapeDtypeStruct((M, D), jnp.float32),
        compiler_params=_cparams("parallel"),
    )(x.reshape(M, D), w1, b1.reshape(1, F), w2, b2.reshape(1, D),
      gamma.reshape(1, D), beta.reshape(1, D))
    return out.reshape(lead + (D,))


def pallas_maxpool(x):
    """Global max over the point axis, tiled over N with a resident (B, D) accumulator."""
    B, N, D = x.shape
    tn = _row_tile(N, 512)
    return pl.pallas_call(
        _maxpool_kernel,
        grid=(N // tn,),
        in_specs=[pl.BlockSpec((B, tn, D), lambda j: (0, j, 0))],
        out_specs=pl.BlockSpec((B, D), lambda j: (0, 0)),
        out_shape=jax.ShapeDtypeStruct((B, D), jnp.float32),
        compiler_params=_cparams("arbitrary"),
    )(x)


def _attention(q_arr, kv_arr, num_heads, d, kv_off):
    """softmax(QK^T/sqrt(dh))V for all heads; grid = (batch, q-row tiles); K/V block resident."""
    B, Lq, Cq = q_arr.shape
    _, Lk, Ckv = kv_arr.shape
    dh = d // num_heads
    tq = _row_tile(Lq, 256)
    kernel = functools.partial(_attn_kernel, num_heads=num_heads, d=d,
                               kv_off=kv_off, scale=1.0 / math.sqrt(dh))
    return pl.pallas_call(
        kernel,
        grid=(B, Lq // tq),
        in_specs=[pl.BlockSpec((1, tq, Cq), lambda b, i: (b, i, 0)),
                  pl.BlockSpec((1, Lk, Ckv), lambda b, i: (b, 0, 0))],
        out_specs=pl.BlockSpec((1, tq, d), lambda b, i: (b, i, 0)),
        out_shape=jax.ShapeDtypeStruct((B, Lq, d), jnp.float32),
        compiler_params=_cparams("parallel", "parallel"),
    )(q_arr, kv_arr)


def self_attention(x, p, num_heads):
    """MHA with fused QKV projection (one (D, 3D) matmul); heads handled inside the kernel."""
    D = x.shape[-1]
    qkv = pallas_linear(x, p["wqkv"], p["bqkv"])          # (B, L, 3D)
    ctx = _attention(qkv, qkv, num_heads, D, kv_off=D)    # q cols [0,D); k/v cols [D,3D)
    return pallas_linear(ctx, p["wo"], p["bo"])


def cross_attention(xq, xkv, p, num_heads):
    """MHA with separate Q projection and fused K/V projection (one (D, 2D) matmul)."""
    D = xq.shape[-1]
    q = pallas_linear(xq, p["wq"], p["bq"])               # (B, Lq, D)
    kv = pallas_linear(xkv, p["wkv"], p["bkv"])           # (B, Lk, 2D), lane-dense 128-wide
    ctx = _attention(q, kv, num_heads, D, kv_off=0)
    return pallas_linear(ctx, p["wo"], p["bo"])


# ----------------------------------------------------------------------------- parameter init

def _dense_init(key, fan_in, fan_out):
    k1, k2 = jax.random.split(key)
    bound = 1.0 / math.sqrt(fan_in)
    w = jax.random.uniform(k1, (fan_in, fan_out), jnp.float32, -bound, bound)
    b = jax.random.uniform(k2, (fan_out,), jnp.float32, -bound, bound)
    return w, b


def _ln_init(d):
    return jnp.ones((d,), jnp.float32), jnp.zeros((d,), jnp.float32)


def _self_attn_init(key, d):
    ks = jax.random.split(key, 4)
    wq, bq = _dense_init(ks[0], d, d)
    wk, bk = _dense_init(ks[1], d, d)
    wv, bv = _dense_init(ks[2], d, d)
    wo, bo = _dense_init(ks[3], d, d)
    return dict(wqkv=jnp.concatenate([wq, wk, wv], axis=1),
                bqkv=jnp.concatenate([bq, bk, bv]),
                wo=wo, bo=bo)


def _cross_attn_init(key, d):
    ks = jax.random.split(key, 4)
    wq, bq = _dense_init(ks[0], d, d)
    wk, bk = _dense_init(ks[1], d, d)
    wv, bv = _dense_init(ks[2], d, d)
    wo, bo = _dense_init(ks[3], d, d)
    return dict(wq=wq, bq=bq,
                wkv=jnp.concatenate([wk, wv], axis=1),
                bkv=jnp.concatenate([bk, bv]),
                wo=wo, bo=bo)


def init_params(key, *, num_layers, num_queries, d_model, d_ff):
    keys = iter(jax.random.split(key, 512))

    def proj_init(d_in, d_out):
        # Linear, LeakyReLU, LN, Linear, LeakyReLU, LN, Linear
        w1, b1 = _dense_init(next(keys), d_in, d_model)
        g1, be1 = _ln_init(d_model)
        w2, b2 = _dense_init(next(keys), d_model, d_model)
        g2, be2 = _ln_init(d_model)
        w3, b3 = _dense_init(next(keys), d_model, d_out)
        return dict(w1=w1, b1=b1, ln1=(g1, be1), w2=w2, b2=b2, ln2=(g2, be2), w3=w3, b3=b3)

    params = dict(
        input_projection=proj_init(3, d_model),
        output_projection=proj_init(d_model, 3),
    )

    enc_layers = []
    for _ in range(num_layers):
        fw1, fb1 = _dense_init(next(keys), d_model, d_ff)
        fw2, fb2 = _dense_init(next(keys), d_ff, d_model)
        enc_layers.append(dict(
            attn=_self_attn_init(next(keys), d_model),
            ln1=_ln_init(d_model),
            ffn_w1=fw1, ffn_b1=fb1, ffn_w2=fw2, ffn_b2=fb2,
            ln2=_ln_init(d_model),
        ))
    params["encoder"] = enc_layers

    qg_layers = []
    for li in range(num_layers):
        d_out = d_model if li < num_layers - 1 else num_queries * d_model
        qg_layers.append(_dense_init(next(keys), d_model, d_out))
    params["query_generator"] = qg_layers

    dec_layers = []
    for _ in range(num_layers):
        fw1, fb1 = _dense_init(next(keys), d_model, d_ff)
        fw2, fb2 = _dense_init(next(keys), d_ff, d_model)
        dec_layers.append(dict(
            self_attn=_self_attn_init(next(keys), d_model),
            ln1=_ln_init(d_model),
            cross_attn=_cross_attn_init(next(keys), d_model),
            ln2=_ln_init(d_model),
            ffn_w1=fw1, ffn_b1=fb1, ffn_w2=fw2, ffn_b2=fb2,
            ln3=_ln_init(d_model),
        ))
    params["decoder"] = dec_layers
    return params


# ----------------------------------------------------------------------------- model forward

def _projection(x, p):
    # nn.Sequential(Linear, LeakyReLU, LN, Linear, LeakyReLU, LN, Linear) with Linear+Act+LN fused.
    h = pallas_linear(x, p["w1"], p["b1"], act="leaky_relu", ln=p["ln1"])
    h = pallas_linear(h, p["w2"], p["b2"], act="leaky_relu", ln=p["ln2"])
    h = pallas_linear(h, p["w3"], p["b3"])
    return h


def _encoder_layer(x, lp, num_heads):
    a = self_attention(x, lp["attn"], num_heads)
    x = pallas_add_ln(x, a, *lp["ln1"])
    x = pallas_ffn_ln(x, lp["ffn_w1"], lp["ffn_b1"], lp["ffn_w2"], lp["ffn_b2"], *lp["ln2"])
    return x


def _decoder_layer(q, enc, lp, num_heads):
    a = self_attention(q, lp["self_attn"], num_heads)
    q = pallas_add_ln(q, a, *lp["ln1"])
    a = cross_attention(q, enc, lp["cross_attn"], num_heads)
    q = pallas_add_ln(q, a, *lp["ln2"])
    q = pallas_ffn_ln(q, lp["ffn_w1"], lp["ffn_b1"], lp["ffn_w2"], lp["ffn_b2"], *lp["ln3"])
    return q


def _query_generator(enc, layers, num_queries, d_model):
    B = enc.shape[0]
    g = pallas_maxpool(enc)            # (B, d_model) global feature, tiled/accumulated over points
    h = g
    for li, (w, b) in enumerate(layers):
        act = "leaky_relu" if li < len(layers) - 1 else None
        h = pallas_linear(h, w, b, act=act)
    return h.reshape(B, num_queries, d_model)


def completion_transformer_forward(params, point_cloud, *, num_heads, num_queries, d_model):
    # point_cloud: (B, N, 3)
    point_embeddings = _projection(point_cloud, params["input_projection"])            # (B, N, d)
    enc = point_embeddings
    for lp in params["encoder"]:
        enc = _encoder_layer(enc, lp, num_heads)                                       # (B, N, d)
    queries = _query_generator(enc, params["query_generator"], num_queries, d_model)   # (B, Q, d)
    dec = queries
    for lp in params["decoder"]:
        dec = _decoder_layer(dec, enc, lp, num_heads)                                  # (B, Q, d)
    estimated_points = _projection(dec, params["output_projection"])                   # (B, Q, 3)
    return jnp.concatenate([point_cloud, estimated_points], axis=1)                    # (B, N+Q, 3)


# ----------------------------------------------------------------------------- main

if __name__ == "__main__":
    # Small, deterministic configuration consistent with the module defaults (scaled down).
    B, N = 2, 16            # batch, input points
    D_MODEL = 64
    NUM_HEADS = 8
    NUM_LAYERS = 2
    NUM_QUERIES = 16
    D_FF = 4 * D_MODEL

    key = jax.random.PRNGKey(0)
    k_param, k_data = jax.random.split(key)

    params = init_params(k_param, num_layers=NUM_LAYERS, num_queries=NUM_QUERIES,
                         d_model=D_MODEL, d_ff=D_FF)
    point_cloud = jax.random.normal(k_data, (B, N, 3), jnp.float32)

    fwd = jax.jit(functools.partial(
        completion_transformer_forward,
        num_heads=NUM_HEADS, num_queries=NUM_QUERIES, d_model=D_MODEL))

    out = fwd(params, point_cloud)
    out = jax.block_until_ready(out)

    assert out.shape == (B, N + NUM_QUERIES, 3), out.shape
    assert bool(jnp.all(jnp.isfinite(out)))
    # First N rows must be the untouched input point cloud (torch.cat([point_cloud, est], dim=1)).
    assert bool(jnp.allclose(out[:, :N, :], point_cloud))
    print("KERNEL_OK")
</pallas_src>

<mosaic_0001>
module attributes {stable_mosaic.version = 11 : i64} {
  func.func @_linear_ln_kernel(%arg0: i32, %arg1: memref<32x8xf32, #tpu.memory_space<vmem>>, %arg2: memref<8x64xf32, #tpu.memory_space<vmem>>, %arg3: memref<1x64xf32, #tpu.memory_space<vmem>>, %arg4: memref<1x64xf32, #tpu.memory_space<vmem>>, %arg5: memref<1x64xf32, #tpu.memory_space<vmem>>, %arg6: memref<32x64xf32, #tpu.memory_space<vmem>>) attributes {dimension_semantics = [#tpu.dimension_semantics<parallel>], iteration_bounds = array<i64: 1>, scalar_prefetch = 0 : i64, scratch_operands = 0 : i64, tpu.core_type = #tpu.core_type<tc>, window_params = [{transform_indices = @transform_0, window_bounds = array<i64: 32, 8>}, {pipeline_mode = #tpu.pipeline_mode<synchronous>, transform_indices = @transform_1, window_bounds = array<i64: 8, 64>}, {pipeline_mode = #tpu.pipeline_mode<synchronous>, transform_indices = @transform_2, window_bounds = array<i64: 1, 64>}, {pipeline_mode = #tpu.pipeline_mode<synchronous>, transform_indices = @transform_3, window_bounds = array<i64: 1, 64>}, {pipeline_mode = #tpu.pipeline_mode<synchronous>, transform_indices = @transform_4, window_bounds = array<i64: 1, 64>}, {transform_indices = @transform_5, window_bounds = array<i64: 32, 64>}]} {
    %c0 = arith.constant 0 : index
    %c0_0 = arith.constant 0 : index
    %0 = vector.load %arg1[%c0, %c0_0] : memref<32x8xf32, #tpu.memory_space<vmem>>, vector<32x8xf32>
    %1 = arith.truncf %0 : vector<32x8xf32> to vector<32x8xbf16>
    %c0_1 = arith.constant 0 : index
    %c0_2 = arith.constant 0 : index
    %2 = vector.load %arg2[%c0_1, %c0_2] : memref<8x64xf32, #tpu.memory_space<vmem>>, vector<8x64xf32>
    %3 = arith.truncf %2 : vector<8x64xf32> to vector<8x64xbf16>
    %cst = arith.constant dense<0.000000e+00> : vector<32x64xf32>
    %4 = tpu.matmul %1, %3, %cst {dimension_numbers = #tpu.dot_dimension_numbers<[1], [0], [0], [1], [0, 0, 1, 1], [], []>} : vector<32x8xbf16>, vector<8x64xbf16>, vector<32x64xf32> -> vector<32x64xf32>
    %c0_3 = arith.constant 0 : index
    %c0_4 = arith.constant 0 : index
    %5 = vector.load %arg3[%c0_3, %c0_4] : memref<1x64xf32, #tpu.memory_space<vmem>>, vector<1x64xf32>
    %6 = vector.broadcast %5 : vector<1x64xf32> to vector<32x64xf32>
    %7 = arith.addf %4, %6 : vector<32x64xf32>
    %cst_5 = arith.constant 0.000000e+00 : f32
    %8 = vector.broadcast %cst_5 : f32 to vector<32x64xf32>
    %9 = arith.cmpf oge, %7, %8 : vector<32x64xf32>
    %cst_6 = arith.constant 0.00999999977 : f32
    %10 = vector.broadcast %cst_6 : f32 to vector<32x64xf32>
    %11 = arith.mulf %10, %7 : vector<32x64xf32>
    %12 = arith.select %9, %7, %11 : vector<32x64xi1>, vector<32x64xf32>
    %cst_7 = arith.constant dense<0.000000e+00> : vector<32xf32>
    %13 = vector.multi_reduction <add>, %12, %cst_7 [1] : vector<32x64xf32> to vector<32xf32>
    %14 = vector.shape_cast %13 : vector<32xf32> to vector<32x1xf32>
    %cst_8 = arith.constant 6.400000e+01 : f32
    %15 = vector.broadcast %cst_8 : f32 to vector<32x1xf32>
    %16 = arith.divf %14, %15 : vector<32x1xf32>
    %17 = vector.broadcast %16 : vector<32x1xf32> to vector<32x64xf32>
    %18 = arith.subf %12, %17 : vector<32x64xf32>
    %19 = arith.mulf %18, %18 : vector<32x64xf32>
    %cst_9 = arith.constant dense<0.000000e+00> : vector<32xf32>
    %20 = vector.multi_reduction <add>, %19, %cst_9 [1] : vector<32x64xf32> to vector<32xf32>
    %21 = vector.shape_cast %20 : vector<32xf32> to vector<32x1xf32>
    %cst_10 = arith.constant 6.400000e+01 : f32
    %22 = vector.broadcast %cst_10 : f32 to vector<32x1xf32>
    %23 = arith.divf %21, %22 : vector<32x1xf32>
    %24 = vector.broadcast %16 : vector<32x1xf32> to vector<32x64xf32>
    %25 = arith.subf %12, %24 : vector<32x64xf32>
    %cst_11 = arith.constant 9.99999974E-6 : f32
    %26 = vector.broadcast %cst_11 : f32 to vector<32x1xf32>
    %27 = arith.addf %23, %26 : vector<32x1xf32>
    %28 = math.rsqrt %27 : vector<32x1xf32>
    %29 = vector.broadcast %28 : vector<32x1xf32> to vector<32x64xf32>
    %30 = arith.mulf %25, %29 : vector<32x64xf32>
    %c0_12 = arith.constant 0 : index
    %c0_13 = arith.constant 0 : index
    %31 = vector.load %arg4[%c0_12, %c0_13] : memref<1x64xf32, #tpu.memory_space<vmem>>, vector<1x64xf32>
    %32 = vector.broadcast %31 : vector<1x64xf32> to vector<32x64xf32>
    %33 = arith.mulf %30, %32 : vector<32x64xf32>
    %c0_14 = arith.constant 0 : index
    %c0_15 = arith.constant 0 : index
    %34 = vector.load %arg5[%c0_14, %c0_15] : memref<1x64xf32, #tpu.memory_space<vmem>>, vector<1x64xf32>
    %35 = vector.broadcast %34 : vector<1x64xf32> to vector<32x64xf32>
    %36 = arith.addf %33, %35 : vector<32x64xf32>
    %c0_16 = arith.constant 0 : index
    %c0_17 = arith.constant 0 : index
    %37 = vector.load %arg6[%c0_16, %c0_17] : memref<32x64xf32, #tpu.memory_space<vmem>>, vector<32x64xf32>
    tpu.vector_store %arg6[%c0_16, %c0_17], %36 {strides = array<i32>} : memref<32x64xf32, #tpu.memory_space<vmem>>, vector<32x64xf32>,
    return
  }
  func.func @transform_0(%arg0: i32) -> (i32, i32) {
    %c0_i32 = arith.constant 0 : i32
    %c0_i32_0 = arith.constant 0 : i32
    return %arg0, %c0_i32 : i32, i32
  }
  func.func @transform_1(%arg0: i32) -> (i32, i32) {
    %c0_i32 = arith.constant 0 : i32
    %c0_i32_0 = arith.constant 0 : i32
    %c0_i32_1 = arith.constant 0 : i32
    return %c0_i32, %c0_i32_0 : i32, i32
  }
  func.func @transform_2(%arg0: i32) -> (i32, i32) {
    %c0_i32 = arith.constant 0 : i32
    %c0_i32_0 = arith.constant 0 : i32
    %c0_i32_1 = arith.constant 0 : i32
    return %c0_i32, %c0_i32_0 : i32, i32
  }
  func.func @transform_3(%arg0: i32) -> (i32, i32) {
    %c0_i32 = arith.constant 0 : i32
    %c0_i32_0 = arith.constant 0 : i32
    %c0_i32_1 = arith.constant 0 : i32
    return %c0_i32, %c0_i32_0 : i32, i32
  }
  func.func @transform_4(%arg0: i32) -> (i32, i32) {
    %c0_i32 = arith.constant 0 : i32
    %c0_i32_0 = arith.constant 0 : i32
    %c0_i32_1 = arith.constant 0 : i32
    return %c0_i32, %c0_i32_0 : i32, i32
  }
  func.func @transform_5(%arg0: i32) -> (i32, i32) {
    %c0_i32 = arith.constant 0 : i32
    %c0_i32_0 = arith.constant 0 : i32
    return %arg0, %c0_i32 : i32, i32
  }
}

module attributes {stable_mosaic.version = 11 : i64} {
  func.func @_linear_kernel(%arg0: i32, %arg1: memref<32x64xf32, #tpu.memory_space<vmem>>, %arg2: memref<64x64xf32, #tpu.memory_space<vmem>>, %arg3: memref<1x64xf32, #tpu.memory_space<vmem>>, %arg4: memref<32x64xf32, #tpu.memory_space<vmem>>) attributes {dimension_semantics = [#tpu.dimension_semantics<parallel>], iteration_bounds = array<i64: 1>, scalar_prefetch = 0 : i64, scratch_operands = 0 : i64, tpu.core_type = #tpu.core_type<tc>, window_params = [{transform_indices = @transform_0, window_bounds = array<i64: 32, 64>}, {pipeline_mode = #tpu.pipeline_mode<synchronous>, transform_indices = @transform_1, window_bounds = array<i64: 64, 64>}, {pipeline_mode = #tpu.pipeline_mode<synchronous>, transform_indices = @transform_2, window_bounds = array<i64: 1, 64>}, {transform_indices = @transform_3, window_bounds = array<i64: 32, 64>}]} {
    %c0 = arith.constant 0 : index
    %c0_0 = arith.constant 0 : index
    %0 = vector.load %arg1[%c0, %c0_0] : memref<32x64xf32, #tpu.memory_space<vmem>>, vector<32x64xf32>
    %1 = arith.truncf %0 : vector<32x64xf32> to vector<32x64xbf16>
    %c0_1 = arith.constant 0 : index
    %c0_2 = arith.constant 0 : index
    %2 = vector.load %arg2[%c0_1, %c0_2] : memref<64x64xf32, #tpu.memory_space<vmem>>, vector<64x64xf32>
    %3 = arith.truncf %2 : vector<64x64xf32> to vector<64x64xbf16>
    %cst = arith.constant dense<0.000000e+00> : vector<32x64xf32>
    %4 = tpu.matmul %1, %3, %cst {dimension_numbers = #tpu.dot_dimension_numbers<[1], [0], [0], [1], [0, 0, 1, 1], [], []>} : vector<32x64xbf16>, vector<64x64xbf16>, vector<32x64xf32> -> vector<32x64xf32>
    %c0_3 = arith.constant 0 : index
    %c0_4 = arith.constant 0 : index
    %5 = vector.load %arg3[%c0_3, %c0_4] : memref<1x64xf32, #tpu.memory_space<vmem>>, vector<1x64xf32>
    %6 = vector.broadcast %5 : vector<1x64xf32> to vector<32x64xf32>
    %7 = arith.addf %4, %6 : vector<32x64xf32>
    %c0_5 = arith.constant 0 : index
    %c0_6 = arith.constant 0 : index
    %8 = vector.load %arg4[%c0_5, %c0_6] : memref<32x64xf32, #tpu.memory_space<vmem>>, vector<32x64xf32>
    tpu.vector_store %arg4[%c0_5, %c0_6], %7 {strides = array<i32>} : memref<32x64xf32, #tpu.memory_space<vmem>>, vector<32x64xf32>,
    return
  }
  func.func @transform_0(%arg0: i32) -> (i32, i32) {
    %c0_i32 = arith.constant 0 : i32
    %c0_i32_0 = arith.constant 0 : i32
    return %arg0, %c0_i32 : i32, i32
  }
  func.func @transform_1(%arg0: i32) -> (i32, i32) {
    %c0_i32 = arith.constant 0 : i32
    %c0_i32_0 = arith.constant 0 : i32
    %c0_i32_1 = arith.constant 0 : i32
    return %c0_i32, %c0_i32_0 : i32, i32
  }
  func.func @transform_2(%arg0: i32) -> (i32, i32) {
    %c0_i32 = arith.constant 0 : i32
    %c0_i32_0 = arith.constant 0 : i32
    %c0_i32_1 = arith.constant 0 : i32
    return %c0_i32, %c0_i32_0 : i32, i32
  }
  func.func @transform_3(%arg0: i32) -> (i32, i32) {
    %c0_i32 = arith.constant 0 : i32
    %c0_i32_0 = arith.constant 0 : i32
    return %arg0, %c0_i32 : i32, i32
  }
}

module attributes {stable_mosaic.version = 11 : i64} {
  func.func @_linear_ln_kernel(%arg0: i32, %arg1: memref<32x64xf32, #tpu.memory_space<vmem>>, %arg2: memref<64x64xf32, #tpu.memory_space<vmem>>, %arg3: memref<1x64xf32, #tpu.memory_space<vmem>>, %arg4: memref<1x64xf32, #tpu.memory_space<vmem>>, %arg5: memref<1x64xf32, #tpu.memory_space<vmem>>, %arg6: memref<32x64xf32, #tpu.memory_space<vmem>>) attributes {dimension_semantics = [#tpu.dimension_semantics<parallel>], iteration_bounds = array<i64: 1>, scalar_prefetch = 0 : i64, scratch_operands = 0 : i64, tpu.core_type = #tpu.core_type<tc>, window_params = [{transform_indices = @transform_0, window_bounds = array<i64: 32, 64>}, {pipeline_mode = #tpu.pipeline_mode<synchronous>, transform_indices = @transform_1, window_bounds = array<i64: 64, 64>}, {pipeline_mode = #tpu.pipeline_mode<synchronous>, transform_indices = @transform_2, window_bounds = array<i64: 1, 64>}, {pipeline_mode = #tpu.pipeline_mode<synchronous>, transform_indices = @transform_3, window_bounds = array<i64: 1, 64>}, {pipeline_mode = #tpu.pipeline_mode<synchronous>, transform_indices = @transform_4, window_bounds = array<i64: 1, 64>}, {transform_indices = @transform_5, window_bounds = array<i64: 32, 64>}]} {
    %c0 = arith.constant 0 : index
    %c0_0 = arith.constant 0 : index
    %0 = vector.load %arg1[%c0, %c0_0] : memref<32x64xf32, #tpu.memory_space<vmem>>, vector<32x64xf32>
    %1 = arith.truncf %0 : vector<32x64xf32> to vector<32x64xbf16>
    %c0_1 = arith.constant 0 : index
    %c0_2 = arith.constant 0 : index
    %2 = vector.load %arg2[%c0_1, %c0_2] : memref<64x64xf32, #tpu.memory_space<vmem>>, vector<64x64xf32>
    %3 = arith.truncf %2 : vector<64x64xf32> to vector<64x64xbf16>
    %cst = arith.constant dense<0.000000e+00> : vector<32x64xf32>
    %4 = tpu.matmul %1, %3, %cst {dimension_numbers = #tpu.dot_dimension_numbers<[1], [0], [0], [1], [0, 0, 1, 1], [], []>} : vector<32x64xbf16>, vector<64x64xbf16>, vector<32x64xf32> -> vector<32x64xf32>
    %c0_3 = arith.constant 0 : index
    %c0_4 = arith.constant 0 : index
    %5 = vector.load %arg3[%c0_3, %c0_4] : memref<1x64xf32, #tpu.memory_space<vmem>>, vector<1x64xf32>
    %6 = vector.broadcast %5 : vector<1x64xf32> to vector<32x64xf32>
    %7 = arith.addf %4, %6 : vector<32x64xf32>
    %cst_5 = arith.constant 0.000000e+00 : f32
    %8 = vector.broadcast %cst_5 : f32 to vector<32x64xf32>
    %9 = arith.cmpf oge, %7, %8 : vector<32x64xf32>
    %cst_6 = arith.constant 0.00999999977 : f32
    %10 = vector.broadcast %cst_6 : f32 to vector<32x64xf32>
    %11 = arith.mulf %10, %7 : vector<32x64xf32>
    %12 = arith.select %9, %7, %11 : vector<32x64xi1>, vector<32x64xf32>
    %cst_7 = arith.constant dense<0.000000e+00> : vector<32xf32>
    %13 = vector.multi_reduction <add>, %12, %cst_7 [1] : vector<32x64xf32> to vector<32xf32>
    %14 = vector.shape_cast %13 : vector<32xf32> to vector<32x1xf32>
    %cst_8 = arith.constant 6.400000e+01 : f32
    %15 = vector.broadcast %cst_8 : f32 to vector<32x1xf32>
    %16 = arith.divf %14, %15 : vector<32x1xf32>
    %17 = vector.broadcast %16 : vector<32x1xf32> to vector<32x64xf32>
    %18 = arith.subf %12, %17 : vector<32x64xf32>
    %19 = arith.mulf %18, %18 : vector<32x64xf32>
    %cst_9 = arith.constant dense<0.000000e+00> : vector<32xf32>
    %20 = vector.multi_reduction <add>, %19, %cst_9 [1] : vector<32x64xf32> to vector<32xf32>
    %21 = vector.shape_cast %20 : vector<32xf32> to vector<32x1xf32>
    %cst_10 = arith.constant 6.400000e+01 : f32
    %22 = vector.broadcast %cst_10 : f32 to vector<32x1xf32>
    %23 = arith.divf %21, %22 : vector<32x1xf32>
    %24 = vector.broadcast %16 : vector<32x1xf32> to vector<32x64xf32>
    %25 = arith.subf %12, %24 : vector<32x64xf32>
    %cst_11 = arith.constant 9.99999974E-6 : f32
    %26 = vector.broadcast %cst_11 : f32 to vector<32x1xf32>
    %27 = arith.addf %23, %26 : vector<32x1xf32>
    %28 = math.rsqrt %27 : vector<32x1xf32>
    %29 = vector.broadcast %28 : vector<32x1xf32> to vector<32x64xf32>
    %30 = arith.mulf %25, %29 : vector<32x64xf32>
    %c0_12 = arith.constant 0 : index
    %c0_13 = arith.constant 0 : index
    %31 = vector.load %arg4[%c0_12, %c0_13] : memref<1x64xf32, #tpu.memory_space<vmem>>, vector<1x64xf32>
    %32 = vector.broadcast %31 : vector<1x64xf32> to vector<32x64xf32>
    %33 = arith.mulf %30, %32 : vector<32x64xf32>
    %c0_14 = arith.constant 0 : index
    %c0_15 = arith.constant 0 : index
    %34 = vector.load %arg5[%c0_14, %c0_15] : memref<1x64xf32, #tpu.memory_space<vmem>>, vector<1x64xf32>
    %35 = vector.broadcast %34 : vector<1x64xf32> to vector<32x64xf32>
    %36 = arith.addf %33, %35 : vector<32x64xf32>
    %c0_16 = arith.constant 0 : index
    %c0_17 = arith.constant 0 : index
    %37 = vector.load %arg6[%c0_16, %c0_17] : memref<32x64xf32, #tpu.memory_space<vmem>>, vector<32x64xf32>
    tpu.vector_store %arg6[%c0_16, %c0_17], %36 {strides = array<i32>} : memref<32x64xf32, #tpu.memory_space<vmem>>, vector<32x64xf32>,
    return
  }
  func.func @transform_0(%arg0: i32) -> (i32, i32) {
    %c0_i32 = arith.constant 0 : i32
    %c0_i32_0 = arith.constant 0 : i32
    return %arg0, %c0_i32 : i32, i32
  }
  func.func @transform_1(%arg0: i32) -> (i32, i32) {
    %c0_i32 = arith.constant 0 : i32
    %c0_i32_0 = arith.constant 0 : i32
    %c0_i32_1 = arith.constant 0 : i32
    return %c0_i32, %c0_i32_0 : i32, i32
  }
  func.func @transform_2(%arg0: i32) -> (i32, i32) {
    %c0_i32 = arith.constant 0 : i32
    %c0_i32_0 = arith.constant 0 : i32
    %c0_i32_1 = arith.constant 0 : i32
    return %c0_i32, %c0_i32_0 : i32, i32
  }
  func.func @transform_3(%arg0: i32) -> (i32, i32) {
    %c0_i32 = arith.constant 0 : i32
    %c0_i32_0 = arith.constant 0 : i32
    %c0_i32_1 = arith.constant 0 : i32
    return %c0_i32, %c0_i32_0 : i32, i32
  }
  func.func @transform_4(%arg0: i32) -> (i32, i32) {
    %c0_i32 = arith.constant 0 : i32
    %c0_i32_0 = arith.constant 0 : i32
    %c0_i32_1 = arith.constant 0 : i32
    return %c0_i32, %c0_i32_0 : i32, i32
  }
  func.func @transform_5(%arg0: i32) -> (i32, i32) {
    %c0_i32 = arith.constant 0 : i32
    %c0_i32_0 = arith.constant 0 : i32
    return %arg0, %c0_i32 : i32, i32
  }
}

module attributes {stable_mosaic.version = 11 : i64} {
  func.func @_linear_kernel(%arg0: i32, %arg1: memref<32x64xf32, #tpu.memory_space<vmem>>, %arg2: memref<64x192xf32, #tpu.memory_space<vmem>>, %arg3: memref<1x192xf32, #tpu.memory_space<vmem>>, %arg4: memref<32x192xf32, #tpu.memory_space<vmem>>) attributes {dimension_semantics = [#tpu.dimension_semantics<parallel>], iteration_bounds = array<i64: 1>, scalar_prefetch = 0 : i64, scratch_operands = 0 : i64, tpu.core_type = #tpu.core_type<tc>, window_params = [{transform_indices = @transform_0, window_bounds = array<i64: 32, 64>}, {pipeline_mode = #tpu.pipeline_mode<synchronous>, transform_indices = @transform_1, window_bounds = array<i64: 64, 192>}, {pipeline_mode = #tpu.pipeline_mode<synchronous>, transform_indices = @transform_2, window_bounds = array<i64: 1, 192>}, {transform_indices = @transform_3, window_bounds = array<i64: 32, 192>}]} {
    %c0 = arith.constant 0 : index
    %c0_0 = arith.constant 0 : index
    %0 = vector.load %arg1[%c0, %c0_0] : memref<32x64xf32, #tpu.memory_space<vmem>>, vector<32x64xf32>
    %1 = arith.truncf %0 : vector<32x64xf32> to vector<32x64xbf16>
    %c0_1 = arith.constant 0 : index
    %c0_2 = arith.constant 0 : index
    %2 = vector.load %arg2[%c0_1, %c0_2] : memref<64x192xf32, #tpu.memory_space<vmem>>, vector<64x192xf32>
    %3 = arith.truncf %2 : vector<64x192xf32> to vector<64x192xbf16>
    %cst = arith.constant dense<0.000000e+00> : vector<32x192xf32>
    %4 = tpu.matmul %1, %3, %cst {dimension_numbers = #tpu.dot_dimension_numbers<[1], [0], [0], [1], [0, 0, 1, 1], [], []>} : vector<32x64xbf16>, vector<64x192xbf16>, vector<32x192xf32> -> vector<32x192xf32>
    %c0_3 = arith.constant 0 : index
    %c0_4 = arith.constant 0 : index
    %5 = vector.load %arg3[%c0_3, %c0_4] : memref<1x192xf32, #tpu.memory_space<vmem>>, vector<1x192xf32>
    %6 = vector.broadcast %5 : vector<1x192xf32> to vector<32x192xf32>
    %7 = arith.addf %4, %6 : vector<32x192xf32>
    %c0_5 = arith.constant 0 : index
    %c0_6 = arith.constant 0 : index
    %8 = vector.load %arg4[%c0_5, %c0_6] : memref<32x192xf32, #tpu.memory_space<vmem>>, vector<32x192xf32>
    tpu.vector_store %arg4[%c0_5, %c0_6], %7 {strides = array<i32>} : memref<32x192xf32, #tpu.memory_space<vmem>>, vector<32x192xf32>,
    return
  }
  func.func @transform_0(%arg0: i32) -> (i32, i32) {
    %c0_i32 = arith.constant 0 : i32
    %c0_i32_0 = arith.constant 0 : i32
    return %arg0, %c0_i32 : i32, i32
  }
  func.func @transform_1(%arg0: i32) -> (i32, i32) {
    %c0_i32 = arith.constant 0 : i32
    %c0_i32_0 = arith.constant 0 : i32
    %c0_i32_1 = arith.constant 0 : i32
    return %c0_i32, %c0_i32_0 : i32, i32
  }
  func.func @transform_2(%arg0: i32) -> (i32, i32) {
    %c0_i32 = arith.constant 0 : i32
    %c0_i32_0 = arith.constant 0 : i32
    %c0_i32_1 = arith.constant 0 : i32
    return %c0_i32, %c0_i32_0 : i32, i32
  }
  func.func @transform_3(%arg0: i32) -> (i32, i32) {
    %c0_i32 = arith.constant 0 : i32
    %c0_i32_0 = arith.constant 0 : i32
    return %arg0, %c0_i32 : i32, i32
  }
}

module attributes {stable_mosaic.version = 11 : i64} {
  func.func @_add_ln_kernel(%arg0: i32, %arg1: memref<32x64xf32, #tpu.memory_space<vmem>>, %arg2: memref<32x64xf32, #tpu.memory_space<vmem>>, %arg3: memref<1x64xf32, #tpu.memory_space<vmem>>, %arg4: memref<1x64xf32, #tpu.memory_space<vmem>>, %arg5: memref<32x64xf32, #tpu.memory_space<vmem>>) attributes {dimension_semantics = [#tpu.dimension_semantics<parallel>], iteration_bounds = array<i64: 1>, scalar_prefetch = 0 : i64, scratch_operands = 0 : i64, tpu.core_type = #tpu.core_type<tc>, window_params = [{transform_indices = @transform_0, window_bounds = array<i64: 32, 64>}, {transform_indices = @transform_1, window_bounds = array<i64: 32, 64>}, {pipeline_mode = #tpu.pipeline_mode<synchronous>, transform_indices = @transform_2, window_bounds = array<i64: 1, 64>}, {pipeline_mode = #tpu.pipeline_mode<synchronous>, transform_indices = @transform_3, window_bounds = array<i64: 1, 64>}, {transform_indices = @transform_4, window_bounds = array<i64: 32, 64>}]} {
    %c0 = arith.constant 0 : index
    %c0_0 = arith.constant 0 : index
    %0 = vector.load %arg1[%c0, %c0_0] : memref<32x64xf32, #tpu.memory_space<vmem>>, vector<32x64xf32>
    %c0_1 = arith.constant 0 : index
    %c0_2 = arith.constant 0 : index
    %1 = vector.load %arg2[%c0_1, %c0_2] : memref<32x64xf32, #tpu.memory_space<vmem>>, vector<32x64xf32>
    %2 = arith.addf %0, %1 : vector<32x64xf32>
    %cst = arith.constant dense<0.000000e+00> : vector<32xf32>
    %3 = vector.multi_reduction <add>, %2, %cst [1] : vector<32x64xf32> to vector<32xf32>
    %4 = vector.shape_cast %3 : vector<32xf32> to vector<32x1xf32>
    %cst_3 = arith.constant 6.400000e+01 : f32
    %5 = vector.broadcast %cst_3 : f32 to vector<32x1xf32>
    %6 = arith.divf %4, %5 : vector<32x1xf32>
    %7 = vector.broadcast %6 : vector<32x1xf32> to vector<32x64xf32>
    %8 = arith.subf %2, %7 : vector<32x64xf32>
    %9 = arith.mulf %8, %8 : vector<32x64xf32>
    %cst_4 = arith.constant dense<0.000000e+00> : vector<32xf32>
    %10 = vector.multi_reduction <add>, %9, %cst_4 [1] : vector<32x64xf32> to vector<32xf32>
    %11 = vector.shape_cast %10 : vector<32xf32> to vector<32x1xf32>
    %cst_5 = arith.constant 6.400000e+01 : f32
    %12 = vector.broadcast %cst_5 : f32 to vector<32x1xf32>
    %13 = arith.divf %11, %12 : vector<32x1xf32>
    %14 = vector.broadcast %6 : vector<32x1xf32> to vector<32x64xf32>
    %15 = arith.subf %2, %14 : vector<32x64xf32>
    %cst_6 = arith.constant 9.99999974E-6 : f32
    %16 = vector.broadcast %cst_6 : f32 to vector<32x1xf32>
    %17 = arith.addf %13, %16 : vector<32x1xf32>
    %18 = math.rsqrt %17 : vector<32x1xf32>
    %19 = vector.broadcast %18 : vector<32x1xf32> to vector<32x64xf32>
    %20 = arith.mulf %15, %19 : vector<32x64xf32>
    %c0_7 = arith.constant 0 : index
    %c0_8 = arith.constant 0 : index
    %21 = vector.load %arg3[%c0_7, %c0_8] : memref<1x64xf32, #tpu.memory_space<vmem>>, vector<1x64xf32>
    %22 = vector.broadcast %21 : vector<1x64xf32> to vector<32x64xf32>
    %23 = arith.mulf %20, %22 : vector<32x64xf32>
    %c0_9 = arith.constant 0 : index
    %c0_10 = arith.constant 0 : index
    %24 = vector.load %arg4[%c0_9, %c0_10] : memref<1x64xf32, #tpu.memory_space<vmem>>, vector<1x64xf32>
    %25 = vector.broadcast %24 : vector<1x64xf32> to vector<32x64xf32>
    %26 = arith.addf %23, %25 : vector<32x64xf32>
    %c0_11 = arith.constant 0 : index
    %c0_12 = arith.constant 0 : index
    %27 = vector.load %arg5[%c0_11, %c0_12] : memref<32x64xf32, #tpu.memory_space<vmem>>, vector<32x64xf32>
    tpu.vector_store %arg5[%c0_11, %c0_12], %26 {strides = array<i32>} : memref<32x64xf32, #tpu.memory_space<vmem>>, vector<32x64xf32>,
    return
  }
  func.func @transform_0(%arg0: i32) -> (i32, i32) {
    %c0_i32 = arith.constant 0 : i32
    %c0_i32_0 = arith.constant 0 : i32
    return %arg0, %c0_i32 : i32, i32
  }
  func.func @transform_1(%arg0: i32) -> (i32, i32) {
    %c0_i32 = arith.constant 0 : i32
    %c0_i32_0 = arith.constant 0 : i32
    return %arg0, %c0_i32 : i32, i32
  }
  func.func @transform_2(%arg0: i32) -> (i32, i32) {
    %c0_i32 = arith.constant 0 : i32
    %c0_i32_0 = arith.constant 0 : i32
    %c0_i32_1 = arith.constant 0 : i32
    return %c0_i32, %c0_i32_0 : i32, i32
  }
  func.func @transform_3(%arg0: i32) -> (i32, i32) {
    %c0_i32 = arith.constant 0 : i32
    %c0_i32_0 = arith.constant 0 : i32
    %c0_i32_1 = arith.constant 0 : i32
    return %c0_i32, %c0_i32_0 : i32, i32
  }
  func.func @transform_4(%arg0: i32) -> (i32, i32) {
    %c0_i32 = arith.constant 0 : i32
    %c0_i32_0 = arith.constant 0 : i32
    return %arg0, %c0_i32 : i32, i32
  }
}

module attributes {stable_mosaic.version = 11 : i64} {
  func.func @_ffn_ln_kernel(%arg0: i32, %arg1: memref<32x64xf32, #tpu.memory_space<vmem>>, %arg2: memref<64x256xf32, #tpu.memory_space<vmem>>, %arg3: memref<1x256xf32, #tpu.memory_space<vmem>>, %arg4: memref<256x64xf32, #tpu.memory_space<vmem>>, %arg5: memref<1x64xf32, #tpu.memory_space<vmem>>, %arg6: memref<1x64xf32, #tpu.memory_space<vmem>>, %arg7: memref<1x64xf32, #tpu.memory_space<vmem>>, %arg8: memref<32x64xf32, #tpu.memory_space<vmem>>) attributes {dimension_semantics = [#tpu.dimension_semantics<parallel>], iteration_bounds = array<i64: 1>, scalar_prefetch = 0 : i64, scratch_operands = 0 : i64, tpu.core_type = #tpu.core_type<tc>, window_params = [{transform_indices = @transform_0, window_bounds = array<i64: 32, 64>}, {pipeline_mode = #tpu.pipeline_mode<synchronous>, transform_indices = @transform_1, window_bounds = array<i64: 64, 256>}, {pipeline_mode = #tpu.pipeline_mode<synchronous>, transform_indices = @transform_2, window_bounds = array<i64: 1, 256>}, {pipeline_mode = #tpu.pipeline_mode<synchronous>, transform_indices = @transform_3, window_bounds = array<i64: 256, 64>}, {pipeline_mode = #tpu.pipeline_mode<synchronous>, transform_indices = @transform_4, window_bounds = array<i64: 1, 64>}, {pipeline_mode = #tpu.pipeline_mode<synchronous>, transform_indices = @transform_5, window_bounds = array<i64: 1, 64>}, {pipeline_mode = #tpu.pipeline_mode<synchronous>, transform_indices = @transform_6, window_bounds = array<i64: 1, 64>}, {transform_indices = @transform_7, window_bounds = array<i64: 32, 64>}]} {
    %c0 = arith.constant 0 : index
    %c0_0 = arith.constant 0 : index
    %0 = vector.load %arg1[%c0, %c0_0] : memref<32x64xf32, #tpu.memory_space<vmem>>, vector<32x64xf32>
    %1 = arith.truncf %0 : vector<32x64xf32> to vector<32x64xbf16>
    %c0_1 = arith.constant 0 : index
    %c0_2 = arith.constant 0 : index
    %2 = vector.load %arg2[%c0_1, %c0_2] : memref<64x256xf32, #tpu.memory_space<vmem>>, vector<64x256xf32>
    %3 = arith.truncf %2 : vector<64x256xf32> to vector<64x256xbf16>
    %cst = arith.constant dense<0.000000e+00> : vector<32x256xf32>
    %4 = tpu.matmul %1, %3, %cst {dimension_numbers = #tpu.dot_dimension_numbers<[1], [0], [0], [1], [0, 0, 1, 1], [], []>} : vector<32x64xbf16>, vector<64x256xbf16>, vector<32x256xf32> -> vector<32x256xf32>
    %c0_3 = arith.constant 0 : index
    %c0_4 = arith.constant 0 : index
    %5 = vector.load %arg3[%c0_3, %c0_4] : memref<1x256xf32, #tpu.memory_space<vmem>>, vector<1x256xf32>
    %6 = vector.broadcast %5 : vector<1x256xf32> to vector<32x256xf32>
    %7 = arith.addf %4, %6 : vector<32x256xf32>
    %cst_5 = arith.constant 0.000000e+00 : f32
    %8 = vector.broadcast %cst_5 : f32 to vector<32x256xf32>
    %9 = arith.cmpf oge, %7, %8 : vector<32x256xf32>
    %cst_6 = arith.constant 0.00999999977 : f32
    %10 = vector.broadcast %cst_6 : f32 to vector<32x256xf32>
    %11 = arith.mulf %10, %7 : vector<32x256xf32>
    %12 = arith.select %9, %7, %11 : vector<32x256xi1>, vector<32x256xf32>
    %13 = arith.truncf %12 : vector<32x256xf32> to vector<32x256xbf16>
    %c0_7 = arith.constant 0 : index
    %c0_8 = arith.constant 0 : index
    %14 = vector.load %arg4[%c0_7, %c0_8] : memref<256x64xf32, #tpu.memory_space<vmem>>, vector<256x64xf32>
    %15 = arith.truncf %14 : vector<256x64xf32> to vector<256x64xbf16>
    %cst_9 = arith.constant dense<0.000000e+00> : vector<32x64xf32>
    %16 = tpu.matmul %13, %15, %cst_9 {dimension_numbers = #tpu.dot_dimension_numbers<[1], [0], [0], [1], [0, 0, 1, 1], [], []>} : vector<32x256xbf16>, vector<256x64xbf16>, vector<32x64xf32> -> vector<32x64xf32>
    %c0_10 = arith.constant 0 : index
    %c0_11 = arith.constant 0 : index
    %17 = vector.load %arg5[%c0_10, %c0_11] : memref<1x64xf32, #tpu.memory_space<vmem>>, vector<1x64xf32>
    %18 = vector.broadcast %17 : vector<1x64xf32> to vector<32x64xf32>
    %19 = arith.addf %16, %18 : vector<32x64xf32>
    %20 = arith.addf %0, %19 : vector<32x64xf32>
    %cst_12 = arith.constant dense<0.000000e+00> : vector<32xf32>
    %21 = vector.multi_reduction <add>, %20, %cst_12 [1] : vector<32x64xf32> to vector<32xf32>
    %22 = vector.shape_cast %21 : vector<32xf32> to vector<32x1xf32>
    %cst_13 = arith.constant 6.400000e+01 : f32
    %23 = vector.broadcast %cst_13 : f32 to vector<32x1xf32>
    %24 = arith.divf %22, %23 : vector<32x1xf32>
    %25 = vector.broadcast %24 : vector<32x1xf32> to vector<32x64xf32>
    %26 = arith.subf %20, %25 : vector<32x64xf32>
    %27 = arith.mulf %26, %26 : vector<32x64xf32>
    %cst_14 = arith.constant dense<0.000000e+00> : vector<32xf32>
    %28 = vector.multi_reduction <add>, %27, %cst_14 [1] : vector<32x64xf32> to vector<32xf32>
    %29 = vector.shape_cast %28 : vector<32xf32> to vector<32x1xf32>
    %cst_15 = arith.constant 6.400000e+01 : f32
    %30 = vector.broadcast %cst_15 : f32 to vector<32x1xf32>
    %31 = arith.divf %29, %30 : vector<32x1xf32>
    %32 = vector.broadcast %24 : vector<32x1xf32> to vector<32x64xf32>
    %33 = arith.subf %20, %32 : vector<32x64xf32>
    %cst_16 = arith.constant 9.99999974E-6 : f32
    %34 = vector.broadcast %cst_16 : f32 to vector<32x1xf32>
    %35 = arith.addf %31, %34 : vector<32x1xf32>
    %36 = math.rsqrt %35 : vector<32x1xf32>
    %37 = vector.broadcast %36 : vector<32x1xf32> to vector<32x64xf32>
    %38 = arith.mulf %33, %37 : vector<32x64xf32>
    %c0_17 = arith.constant 0 : index
    %c0_18 = arith.constant 0 : index
    %39 = vector.load %arg6[%c0_17, %c0_18] : memref<1x64xf32, #tpu.memory_space<vmem>>, vector<1x64xf32>
    %40 = vector.broadcast %39 : vector<1x64xf32> to vector<32x64xf32>
    %41 = arith.mulf %38, %40 : vector<32x64xf32>
    %c0_19 = arith.constant 0 : index
    %c0_20 = arith.constant 0 : index
    %42 = vector.load %arg7[%c0_19, %c0_20] : memref<1x64xf32, #tpu.memory_space<vmem>>, vector<1x64xf32>
    %43 = vector.broadcast %42 : vector<1x64xf32> to vector<32x64xf32>
    %44 = arith.addf %41, %43 : vector<32x64xf32>
    %c0_21 = arith.constant 0 : index
    %c0_22 = arith.constant 0 : index
    %45 = vector.load %arg8[%c0_21, %c0_22] : memref<32x64xf32, #tpu.memory_space<vmem>>, vector<32x64xf32>
    tpu.vector_store %arg8[%c0_21, %c0_22], %44 {strides = array<i32>} : memref<32x64xf32, #tpu.memory_space<vmem>>, vector<32x64xf32>,
    return
  }
  func.func @transform_0(%arg0: i32) -> (i32, i32) {
    %c0_i32 = arith.constant 0 : i32
    %c0_i32_0 = arith.constant 0 : i32
    return %arg0, %c0_i32 : i32, i32
  }
  func.func @transform_1(%arg0: i32) -> (i32, i32) {
    %c0_i32 = arith.constant 0 : i32
    %c0_i32_0 = arith.constant 0 : i32
    %c0_i32_1 = arith.constant 0 : i32
    return %c0_i32, %c0_i32_0 : i32, i32
  }
  func.func @transform_2(%arg0: i32) -> (i32, i32) {
    %c0_i32 = arith.constant 0 : i32
    %c0_i32_0 = arith.constant 0 : i32
    %c0_i32_1 = arith.constant 0 : i32
    return %c0_i32, %c0_i32_0 : i32, i32
  }
  func.func @transform_3(%arg0: i32) -> (i32, i32) {
    %c0_i32 = arith.constant 0 : i32
    %c0_i32_0 = arith.constant 0 : i32
    %c0_i32_1 = arith.constant 0 : i32
    return %c0_i32, %c0_i32_0 : i32, i32
  }
  func.func @transform_4(%arg0: i32) -> (i32, i32) {
    %c0_i32 = arith.constant 0 : i32
    %c0_i32_0 = arith.constant 0 : i32
    %c0_i32_1 = arith.constant 0 : i32
    return %c0_i32, %c0_i32_0 : i32, i32
  }
  func.func @transform_5(%arg0: i32) -> (i32, i32) {
    %c0_i32 = arith.constant 0 : i32
    %c0_i32_0 = arith.constant 0 : i32
    %c0_i32_1 = arith.constant 0 : i32
    return %c0_i32, %c0_i32_0 : i32, i32
  }
  func.func @transform_6(%arg0: i32) -> (i32, i32) {
    %c0_i32 = arith.constant 0 : i32
    %c0_i32_0 = arith.constant 0 : i32
    %c0_i32_1 = arith.constant 0 : i32
    return %c0_i32, %c0_i32_0 : i32, i32
  }
  func.func @transform_7(%arg0: i32) -> (i32, i32) {
    %c0_i32 = arith.constant 0 : i32
    %c0_i32_0 = arith.constant 0 : i32
    return %arg0, %c0_i32 : i32, i32
  }
}

module attributes {stable_mosaic.version = 11 : i64} {
  func.func @_attn_kernel(%arg0: i32, %arg1: i32, %arg2: memref<1x16x192xf32, #tpu.memory_space<vmem>>, %arg3: memref<1x16x192xf32, #tpu.memory_space<vmem>>, %arg4: memref<1x16x64xf32, #tpu.memory_space<vmem>>) attributes {dimension_semantics = [#tpu.dimension_semantics<parallel>, #tpu.dimension_semantics<parallel>], iteration_bounds = array<i64: 2, 1>, scalar_prefetch = 0 : i64, scratch_operands = 0 : i64, tpu.core_type = #tpu.core_type<tc>, window_params = [{transform_indices = @transform_0, window_bounds = array<i64: 1, 16, 192>}, {transform_indices = @transform_1, window_bounds = array<i64: 1, 16, 192>}, {transform_indices = @transform_2, window_bounds = array<i64: 1, 16, 64>}]} {
    %c0 = arith.constant 0 : index
    %c0_0 = arith.constant 0 : index
    %c0_1 = arith.constant 0 : index
    %0 = vector.load %arg2[%c0, %c0_0, %c0_1] : memref<1x16x192xf32, #tpu.memory_space<vmem>>, vector<1x16x192xf32>
    %1 = vector.shape_cast %0 : vector<1x16x192xf32> to vector<16x192xf32>
    %c0_2 = arith.constant 0 : index
    %c0_3 = arith.constant 0 : index
    %c0_4 = arith.constant 0 : index
    %2 = vector.load %arg3[%c0_2, %c0_3, %c0_4] : memref<1x16x192xf32, #tpu.memory_space<vmem>>, vector<1x16x192xf32>
    %3 = vector.shape_cast %2 : vector<1x16x192xf32> to vector<16x192xf32>
    %4 = vector.extract_strided_slice %1 {offsets = [0, 0], sizes = [16, 8], strides = [1, 1]} : vector<16x192xf32> to vector<16x8xf32>
    %5 = arith.truncf %4 : vector<16x8xf32> to vector<16x8xbf16>
    %6 = vector.extract_strided_slice %3 {offsets = [0, 64], sizes = [16, 8], strides = [1, 1]} : vector<16x192xf32> to vector<16x8xf32>
    %7 = arith.truncf %6 : vector<16x8xf32> to vector<16x8xbf16>
    %8 = vector.extract_strided_slice %3 {offsets = [0, 128], sizes = [16, 8], strides = [1, 1]} : vector<16x192xf32> to vector<16x8xf32>
    %9 = arith.truncf %8 : vector<16x8xf32> to vector<16x8xbf16>
    %cst = arith.constant dense<0.000000e+00> : vector<16x16xf32>
    %10 = tpu.matmul %5, %7, %cst {dimension_numbers = #tpu.dot_dimension_numbers<[1], [1], [0], [0], [0, 0, 1, 0], [], []>} : vector<16x8xbf16>, vector<16x8xbf16>, vector<16x16xf32> -> vector<16x16xf32>
    %cst_5 = arith.constant 0.353553385 : f32
    %11 = vector.broadcast %cst_5 : f32 to vector<16x16xf32>
    %12 = arith.mulf %10, %11 : vector<16x16xf32>
    %cst_6 = arith.constant dense<0xFF800000> : vector<16xf32>
    %13 = vector.multi_reduction <maximumf>, %12, %cst_6 [1] : vector<16x16xf32> to vector<16xf32>
    %14 = vector.shape_cast %13 : vector<16xf32> to vector<16x1xf32>
    %15 = vector.broadcast %14 : vector<16x1xf32> to vector<16x16xf32>
    %16 = arith.subf %12, %15 : vector<16x16xf32>
    %17 = math.exp %16 : vector<16x16xf32>
    %cst_7 = arith.constant dense<0.000000e+00> : vector<16xf32>
    %18 = vector.multi_reduction <add>, %17, %cst_7 [1] : vector<16x16xf32> to vector<16xf32>
    %19 = vector.shape_cast %18 : vector<16xf32> to vector<16x1xf32>
    %20 = tpu.reciprocal %19 {approx = true} : vector<16x1xf32> -> vector<16x1xf32>
    %21 = vector.broadcast %20 : vector<16x1xf32> to vector<16x16xf32>
    %22 = arith.mulf %17, %21 : vector<16x16xf32>
    %23 = arith.truncf %22 : vector<16x16xf32> to vector<16x16xbf16>
    %cst_8 = arith.constant dense<0.000000e+00> : vector<16x8xf32>
    %24 = tpu.matmul %23, %9, %cst_8 {dimension_numbers = #tpu.dot_dimension_numbers<[1], [0], [0], [1], [0, 0, 1, 1], [], []>} : vector<16x16xbf16>, vector<16x8xbf16>, vector<16x8xf32> -> vector<16x8xf32>
    %25 = vector.extract_strided_slice %1 {offsets = [0, 8], sizes = [16, 8], strides = [1, 1]} : vector<16x192xf32> to vector<16x8xf32>
    %26 = arith.truncf %25 : vector<16x8xf32> to vector<16x8xbf16>
    %27 = vector.extract_strided_slice %3 {offsets = [0, 72], sizes = [16, 8], strides = [1, 1]} : vector<16x192xf32> to vector<16x8xf32>
    %28 = arith.truncf %27 : vector<16x8xf32> to vector<16x8xbf16>
    %29 = vector.extract_strided_slice %3 {offsets = [0, 136], sizes = [16, 8], strides = [1, 1]} : vector<16x192xf32> to vector<16x8xf32>
    %30 = arith.truncf %29 : vector<16x8xf32> to vector<16x8xbf16>
    %cst_9 = arith.constant dense<0.000000e+00> : vector<16x16xf32>
    %31 = tpu.matmul %26, %28, %cst_9 {dimension_numbers = #tpu.dot_dimension_numbers<[1], [1], [0], [0], [0, 0, 1, 0], [], []>} : vector<16x8xbf16>, vector<16x8xbf16>, vector<16x16xf32> -> vector<16x16xf32>
    %cst_10 = arith.constant 0.353553385 : f32
    %32 = vector.broadcast %cst_10 : f32 to vector<16x16xf32>
    %33 = arith.mulf %31, %32 : vector<16x16xf32>
    %cst_11 = arith.constant dense<0xFF800000> : vector<16xf32>
    %34 = vector.multi_reduction <maximumf>, %33, %cst_11 [1] : vector<16x16xf32> to vector<16xf32>
    %35 = vector.shape_cast %34 : vector<16xf32> to vector<16x1xf32>
    %36 = vector.broadcast %35 : vector<16x1xf32> to vector<16x16xf32>
    %37 = arith.subf %33, %36 : vector<16x16xf32>
    %38 = math.exp %37 : vector<16x16xf32>
    %cst_12 = arith.constant dense<0.000000e+00> : vector<16xf32>
    %39 = vector.multi_reduction <add>, %38, %cst_12 [1] : vector<16x16xf32> to vector<16xf32>
    %40 = vector.shape_cast %39 : vector<16xf32> to vector<16x1xf32>
    %41 = tpu.reciprocal %40 {approx = true} : vector<16x1xf32> -> vector<16x1xf32>
    %42 = vector.broadcast %41 : vector<16x1xf32> to vector<16x16xf32>
    %43 = arith.mulf %38, %42 : vector<16x16xf32>
    %44 = arith.truncf %43 : vector<16x16xf32> to vector<16x16xbf16>
    %cst_13 = arith.constant dense<0.000000e+00> : vector<16x8xf32>
    %45 = tpu.matmul %44, %30, %cst_13 {dimension_numbers = #tpu.dot_dimension_numbers<[1], [0], [0], [1], [0, 0, 1, 1], [], []>} : vector<16x16xbf16>, vector<16x8xbf16>, vector<16x8xf32> -> vector<16x8xf32>
    %46 = vector.extract_strided_slice %1 {offsets = [0, 16], sizes = [16, 8], strides = [1, 1]} : vector<16x192xf32> to vector<16x8xf32>
    %47 = arith.truncf %46 : vector<16x8xf32> to vector<16x8xbf16>
    %48 = vector.extract_strided_slice %3 {offsets = [0, 80], sizes = [16, 8], strides = [1, 1]} : vector<16x192xf32> to vector<16x8xf32>
    %49 = arith.truncf %48 : vector<16x8xf32> to vector<16x8xbf16>
    %50 = vector.extract_strided_slice %3 {offsets = [0, 144], sizes = [16, 8], strides = [1, 1]} : vector<16x192xf32> to vector<16x8xf32>
    %51 = arith.truncf %50 : vector<16x8xf32> to vector<16x8xbf16>
    %cst_14 = arith.constant dense<0.000000e+00> : vector<16x16xf32>
    %52 = tpu.matmul %47, %49, %cst_14 {dimension_numbers = #tpu.dot_dimension_numbers<[1], [1], [0], [0], [0, 0, 1, 0], [], []>} : vector<16x8xbf16>, vector<16x8xbf16>, vector<16x16xf32> -> vector<16x16xf32>
    %cst_15 = arith.constant 0.353553385 : f32
    %53 = vector.broadcast %cst_15 : f32 to vector<16x16xf32>
    %54 = arith.mulf %52, %53 : vector<16x16xf32>
    %cst_16 = arith.constant dense<0xFF800000> : vector<16xf32>
    %55 = vector.multi_reduction <maximumf>, %54, %cst_16 [1] : vector<16x16xf32> to vector<16xf32>
    %56 = vector.shape_cast %55 : vector<16xf32> to vector<16x1xf32>
    %57 = vector.broadcast %56 : vector<16x1xf32> to vector<16x16xf32>
    %58 = arith.subf %54, %57 : vector<16x16xf32>
    %59 = math.exp %58 : vector<16x16xf32>
    %cst_17 = arith.constant dense<0.000000e+00> : vector<16xf32>
    %60 = vector.multi_reduction <add>, %59, %cst_17 [1] : vector<16x16xf32> to vector<16xf32>
    %61 = vector.shape_cast %60 : vector<16xf32> to vector<16x1xf32>
    %62 = tpu.reciprocal %61 {approx = true} : vector<16x1xf32> -> vector<16x1xf32>
    %63 = vector.broadcast %62 : vector<16x1xf32> to vector<16x16xf32>
    %64 = arith.mulf %59, %63 : vector<16x16xf32>
    %65 = arith.truncf %64 : vector<16x16xf32> to vector<16x16xbf16>
    %cst_18 = arith.constant dense<0.000000e+00> : vector<16x8xf32>
    %66 = tpu.matmul %65, %51, %cst_18 {dimension_numbers = #tpu.dot_dimension_numbers<[1], [0], [0], [1], [0, 0, 1, 1], [], []>} : vector<16x16xbf16>, vector<16x8xbf16>, vector<16x8xf32> -> vector<16x8xf32>
    %67 = vector.extract_strided_slice %1 {offsets = [0, 24], sizes = [16, 8], strides = [1, 1]} : vector<16x192xf32> to vector<16x8xf32>
    %68 = arith.truncf %67 : vector<16x8xf32> to vector<16x8xbf16>
    %69 = vector.extract_strided_slice %3 {offsets = [0, 88], sizes = [16, 8], strides = [1, 1]} : vector<16x192xf32> to vector<16x8xf32>
    %70 = arith.truncf %69 : vector<16x8xf32> to vector<16x8xbf16>
    %71 = vector.extract_strided_slice %3 {offsets = [0, 152], sizes = [16, 8], strides = [1, 1]} : vector<16x192xf32> to vector<16x8xf32>
    %72 = arith.truncf %71 : vector<16x8xf32> to vector<16x8xbf16>
    %cst_19 = arith.constant dense<0.000000e+00> : vector<16x16xf32>
    %73 = tpu.matmul %68, %70, %cst_19 {dimension_numbers = #tpu.dot_dimension_numbers<[1], [1], [0], [0], [0, 0, 1, 0], [], []>} : vector<16x8xbf16>, vector<16x8xbf16>, vector<16x16xf32> -> vector<16x16xf32>
    %cst_20 = arith.constant 0.353553385 : f32
    %74 = vector.broadcast %cst_20 : f32 to vector<16x16xf32>
    %75 = arith.mulf %73, %74 : vector<16x16xf32>
    %cst_21 = arith.constant dense<0xFF800000> : vector<16xf32>
    %76 = vector.multi_reduction <maximumf>, %75, %cst_21 [1] : vector<16x16xf32> to vector<16xf32>
    %77 = vector.shape_cast %76 : vector<16xf32> to vector<16x1xf32>
    %78 = vector.broadcast %77 : vector<16x1xf32> to vector<16x16xf32>
    %79 = arith.subf %75, %78 : vector<16x16xf32>
    %80 = math.exp %79 : vector<16x16xf32>
    %cst_22 = arith.constant dense<0.000000e+00> : vector<16xf32>
    %81 = vector.multi_reduction <add>, %80, %cst_22 [1] : vector<16x16xf32> to vector<16xf32>
    %82 = vector.shape_cast %81 : vector<16xf32> to vector<16x1xf32>
    %83 = tpu.reciprocal %82 {approx = true} : vector<16x1xf32> -> vector<16x1xf32>
    %84 = vector.broadcast %83 : vector<16x1xf32> to vector<16x16xf32>
    %85 = arith.mulf %80, %84 : vector<16x16xf32>
    %86 = arith.truncf %85 : vector<16x16xf32> to vector<16x16xbf16>
    %cst_23 = arith.constant dense<0.000000e+00> : vector<16x8xf32>
    %87 = tpu.matmul %86, %72, %cst_23 {dimension_numbers = #tpu.dot_dimension_numbers<[1], [0], [0], [1], [0, 0, 1, 1], [], []>} : vector<16x16xbf16>, vector<16x8xbf16>, vector<16x8xf32> -> vector<16x8xf32>
    %88 = vector.extract_strided_slice %1 {offsets = [0, 32], sizes = [16, 8], strides = [1, 1]} : vector<16x192xf32> to vector<16x8xf32>
    %89 = arith.truncf %88 : vector<16x8xf32> to vector<16x8xbf16>
    %90 = vector.extract_strided_slice %3 {offsets = [0, 96], sizes = [16, 8], strides = [1, 1]} : vector<16x192xf32> to vector<16x8xf32>
    %91 = arith.truncf %90 : vector<16x8xf32> to vector<16x8xbf16>
    %92 = vector.extract_strided_slice %3 {offsets = [0, 160], sizes = [16, 8], strides = [1, 1]} : vector<16x192xf32> to vector<16x8xf32>
    %93 = arith.truncf %92 : vector<16x8xf32> to vector<16x8xbf16>
    %cst_24 = arith.constant dense<0.000000e+00> : vector<16x16xf32>
    %94 = tpu.matmul %89, %91, %cst_24 {dimension_numbers = #tpu.dot_dimension_numbers<[1], [1], [0], [0], [0, 0, 1, 0], [], []>} : vector<16x8xbf16>, vector<16x8xbf16>, vector<16x16xf32> -> vector<16x16xf32>
    %cst_25 = arith.constant 0.353553385 : f32
    %95 = vector.broadcast %cst_25 : f32 to vector<16x16xf32>
    %96 = arith.mulf %94, %95 : vector<16x16xf32>
    %cst_26 = arith.constant dense<0xFF800000> : vector<16xf32>
    %97 = vector.multi_reduction <maximumf>, %96, %cst_26 [1] : vector<16x16xf32> to vector<16xf32>
    %98 = vector.shape_cast %97 : vector<16xf32> to vector<16x1xf32>
    %99 = vector.broadcast %98 : vector<16x1xf32> to vector<16x16xf32>
    %100 = arith.subf %96, %99 : vector<16x16xf32>
    %101 = math.exp %100 : vector<16x16xf32>
    %cst_27 = arith.constant dense<0.000000e+00> : vector<16xf32>
    %102 = vector.multi_reduction <add>, %101, %cst_27 [1] : vector<16x16xf32> to vector<16xf32>
    %103 = vector.shape_cast %102 : vector<16xf32> to vector<16x1xf32>
    %104 = tpu.reciprocal %103 {approx = true} : vector<16x1xf32> -> vector<16x1xf32>
    %105 = vector.broadcast %104 : vector<16x1xf32> to vector<16x16xf32>
    %106 = arith.mulf %101, %105 : vector<16x16xf32>
    %107 = arith.truncf %106 : vector<16x16xf32> to vector<16x16xbf16>
    %cst_28 = arith.constant dense<0.000000e+00> : vector<16x8xf32>
    %108 = tpu.matmul %107, %93, %cst_28 {dimension_numbers = #tpu.dot_dimension_numbers<[1], [0], [0], [1], [0, 0, 1, 1], [], []>} : vector<16x16xbf16>, vector<16x8xbf16>, vector<16x8xf32> -> vector<16x8xf32>
    %109 = vector.extract_strided_slice %1 {offsets = [0, 40], sizes = [16, 8], strides = [1, 1]} : vector<16x192xf32> to vector<16x8xf32>
    %110 = arith.truncf %109 : vector<16x8xf32> to vector<16x8xbf16>
    %111 = vector.extract_strided_slice %3 {offsets = [0, 104], sizes = [16, 8], strides = [1, 1]} : vector<16x192xf32> to vector<16x8xf32>
    %112 = arith.truncf %111 : vector<16x8xf32> to vector<16x8xbf16>
    %113 = vector.extract_strided_slice %3 {offsets = [0, 168], sizes = [16, 8], strides = [1, 1]} : vector<16x192xf32> to vector<16x8xf32>
    %114 = arith.truncf %113 : vector<16x8xf32> to vector<16x8xbf16>
    %cst_29 = arith.constant dense<0.000000e+00> : vector<16x16xf32>
    %115 = tpu.matmul %110, %112, %cst_29 {dimension_numbers = #tpu.dot_dimension_numbers<[1], [1], [0], [0], [0, 0, 1, 0], [], []>} : vector<16x8xbf16>, vector<16x8xbf16>, vector<16x16xf32> -> vector<16x16xf32>
    %cst_30 = arith.constant 0.353553385 : f32
    %116 = vector.broadcast %cst_30 : f32 to vector<16x16xf32>
    %117 = arith.mulf %115, %116 : vector<16x16xf32>
    %cst_31 = arith.constant dense<0xFF800000> : vector<16xf32>
    %118 = vector.multi_reduction <maximumf>, %117, %cst_31 [1] : vector<16x16xf32> to vector<16xf32>
    %119 = vector.shape_cast %118 : vector<16xf32> to vector<16x1xf32>
    %120 = vector.broadcast %119 : vector<16x1xf32> to vector<16x16xf32>
    %121 = arith.subf %117, %120 : vector<16x16xf32>
    %122 = math.exp %121 : vector<16x16xf32>
    %cst_32 = arith.constant dense<0.000000e+00> : vector<16xf32>
    %123 = vector.multi_reduction <add>, %122, %cst_32 [1] : vector<16x16xf32> to vector<16xf32>
    %124 = vector.shape_cast %123 : vector<16xf32> to vector<16x1xf32>
    %125 = tpu.reciprocal %124 {approx = true} : vector<16x1xf32> -> vector<16x1xf32>
    %126 = vector.broadcast %125 : vector<16x1xf32> to vector<16x16xf32>
    %127 = arith.mulf %122, %126 : vector<16x16xf32>
    %128 = arith.truncf %127 : vector<16x16xf32> to vector<16x16xbf16>
    %cst_33 = arith.constant dense<0.000000e+00> : vector<16x8xf32>
    %129 = tpu.matmul %128, %114, %cst_33 {dimension_numbers = #tpu.dot_dimension_numbers<[1], [0], [0], [1], [0, 0, 1, 1], [], []>} : vector<16x16xbf16>, vector<16x8xbf16>, vector<16x8xf32> -> vector<16x8xf32>
    %130 = vector.extract_strided_slice %1 {offsets = [0, 48], sizes = [16, 8], strides = [1, 1]} : vector<16x192xf32> to vector<16x8xf32>
    %131 = arith.truncf %130 : vector<16x8xf32> to vector<16x8xbf16>
    %132 = vector.extract_strided_slice %3 {offsets = [0, 112], sizes = [16, 8], strides = [1, 1]} : vector<16x192xf32> to vector<16x8xf32>
    %133 = arith.truncf %132 : vector<16x8xf32> to vector<16x8xbf16>
    %134 = vector.extract_strided_slice %3 {offsets = [0, 176], sizes = [16, 8], strides = [1, 1]} : vector<16x192xf32> to vector<16x8xf32>
    %135 = arith.truncf %134 : vector<16x8xf32> to vector<16x8xbf16>
    %cst_34 = arith.constant dense<0.000000e+00> : vector<16x16xf32>
    %136 = tpu.matmul %131, %133, %cst_34 {dimension_numbers = #tpu.dot_dimension_numbers<[1], [1], [0], [0], [0, 0, 1, 0], [], []>} : vector<16x8xbf16>, vector<16x8xbf16>, vector<16x16xf32> -> vector<16x16xf32>
    %cst_35 = arith.constant 0.353553385 : f32
    %137 = vector.broadcast %cst_35 : f32 to vector<16x16xf32>
    %138 = arith.mulf %136, %137 : vector<16x16xf32>
    %cst_36 = arith.constant dense<0xFF800000> : vector<16xf32>
    %139 = vector.multi_reduction <maximumf>, %138, %cst_36 [1] : vector<16x16xf32> to vector<16xf32>
    %140 = vector.shape_cast %139 : vector<16xf32> to vector<16x1xf32>
    %141 = vector.broadcast %140 : vector<16x1xf32> to vector<16x16xf32>
    %142 = arith.subf %138, %141 : vector<16x16xf32>
    %143 = math.exp %142 : vector<16x16xf32>
    %cst_37 = arith.constant dense<0.000000e+00> : vector<16xf32>
    %144 = vector.multi_reduction <add>, %143, %cst_37 [1] : vector<16x16xf32> to vector<16xf32>
    %145 = vector.shape_cast %144 : vector<16xf32> to vector<16x1xf32>
    %146 = tpu.reciprocal %145 {approx = true} : vector<16x1xf32> -> vector<16x1xf32>
    %147 = vector.broadcast %146 : vector<16x1xf32> to vector<16x16xf32>
    %148 = arith.mulf %143, %147 : vector<16x16xf32>
    %149 = arith.truncf %148 : vector<16x16xf32> to vector<16x16xbf16>
    %cst_38 = arith.constant dense<0.000000e+00> : vector<16x8xf32>
    %150 = tpu.matmul %149, %135, %cst_38 {dimension_numbers = #tpu.dot_dimension_numbers<[1], [0], [0], [1], [0, 0, 1, 1], [], []>} : vector<16x16xbf16>, vector<16x8xbf16>, vector<16x8xf32> -> vector<16x8xf32>
    %151 = vector.extract_strided_slice %1 {offsets = [0, 56], sizes = [16, 8], strides = [1, 1]} : vector<16x192xf32> to vector<16x8xf32>
    %152 = arith.truncf %151 : vector<16x8xf32> to vector<16x8xbf16>
    %153 = vector.extract_strided_slice %3 {offsets = [0, 120], sizes = [16, 8], strides = [1, 1]} : vector<16x192xf32> to vector<16x8xf32>
    %154 = arith.truncf %153 : vector<16x8xf32> to vector<16x8xbf16>
    %155 = vector.extract_strided_slice %3 {offsets = [0, 184], sizes = [16, 8], strides = [1, 1]} : vector<16x192xf32> to vector<16x8xf32>
    %156 = arith.truncf %155 : vector<16x8xf32> to vector<16x8xbf16>
    %cst_39 = arith.constant dense<0.000000e+00> : vector<16x16xf32>
    %157 = tpu.matmul %152, %154, %cst_39 {dimension_numbers = #tpu.dot_dimension_numbers<[1], [1], [0], [0], [0, 0, 1, 0], [], []>} : vector<16x8xbf16>, vector<16x8xbf16>, vector<16x16xf32> -> vector<16x16xf32>
    %cst_40 = arith.constant 0.353553385 : f32
    %158 = vector.broadcast %cst_40 : f32 to vector<16x16xf32>
    %159 = arith.mulf %157, %158 : vector<16x16xf32>
    %cst_41 = arith.constant dense<0xFF800000> : vector<16xf32>
    %160 = vector.multi_reduction <maximumf>, %159, %cst_41 [1] : vector<16x16xf32> to vector<16xf32>
    %161 = vector.shape_cast %160 : vector<16xf32> to vector<16x1xf32>
    %162 = vector.broadcast %161 : vector<16x1xf32> to vector<16x16xf32>
    %163 = arith.subf %159, %162 : vector<16x16xf32>
    %164 = math.exp %163 : vector<16x16xf32>
    %cst_42 = arith.constant dense<0.000000e+00> : vector<16xf32>
    %165 = vector.multi_reduction <add>, %164, %cst_42 [1] : vector<16x16xf32> to vector<16xf32>
    %166 = vector.shape_cast %165 : vector<16xf32> to vector<16x1xf32>
    %167 = tpu.reciprocal %166 {approx = true} : vector<16x1xf32> -> vector<16x1xf32>
    %168 = vector.broadcast %167 : vector<16x1xf32> to vector<16x16xf32>
    %169 = arith.mulf %164, %168 : vector<16x16xf32>
    %170 = arith.truncf %169 : vector<16x16xf32> to vector<16x16xbf16>
    %cst_43 = arith.constant dense<0.000000e+00> : vector<16x8xf32>
    %171 = tpu.matmul %170, %156, %cst_43 {dimension_numbers = #tpu.dot_dimension_numbers<[1], [0], [0], [1], [0, 0, 1, 1], [], []>} : vector<16x16xbf16>, vector<16x8xbf16>, vector<16x8xf32> -> vector<16x8xf32>
    %172 = tpu.concatenate %24, %45, %66, %87, %108, %129, %150, %171 in 1 : vector<16x8xf32>, vector<16x8xf32>, vector<16x8xf32>, vector<16x8xf32>, vector<16x8xf32>, vector<16x8xf32>, vector<16x8xf32>, vector<16x8xf32> -> vector<16x64xf32>
    %c0_44 = arith.constant 0 : index
    %c0_45 = arith.constant 0 : index
    %c0_46 = arith.constant 0 : index
    %173 = vector.load %arg4[%c0_44, %c0_45, %c0_46] : memref<1x16x64xf32, #tpu.memory_space<vmem>>, vector<1x16x64xf32>
    %174 = vector.shape_cast %173 : vector<1x16x64xf32> to vector<16x64xf32>
    %175 = vector.shape_cast %172 : vector<16x64xf32> to vector<1x16x64xf32>
    tpu.vector_store %arg4[%c0_44, %c0_45, %c0_46], %175 {strides = array<i32>} : memref<1x16x64xf32, #tpu.memory_space<vmem>>, vector<1x16x64xf32>,
    return
  }
  func.func @transform_0(%arg0: i32, %arg1: i32) -> (i32, i32, i32) {
    %c0_i32 = arith.constant 0 : i32
    %c0_i32_0 = arith.constant 0 : i32
    return %arg0, %arg1, %c0_i32 : i32, i32, i32
  }
  func.func @transform_1(%arg0: i32, %arg1: i32) -> (i32, i32, i32) {
    %c0_i32 = arith.constant 0 : i32
    %c0_i32_0 = arith.constant 0 : i32
    %c0_i32_1 = arith.constant 0 : i32
    return %arg0, %c0_i32, %c0_i32_0 : i32, i32, i32
  }
  func.func @transform_2(%arg0: i32, %arg1: i32) -> (i32, i32, i32) {
    %c0_i32 = arith.constant 0 : i32
    %c0_i32_0 = arith.constant 0 : i32
    return %arg0, %arg1, %c0_i32 : i32, i32, i32
  }
}

module attributes {stable_mosaic.version = 11 : i64} {
  func.func @_maxpool_kernel(%arg0: i32, %arg1: memref<2x16x64xf32, #tpu.memory_space<vmem>>, %arg2: memref<2x64xf32, #tpu.memory_space<vmem>>) attributes {dimension_semantics = [#tpu.dimension_semantics<arbitrary>], iteration_bounds = array<i64: 1>, scalar_prefetch = 0 : i64, scratch_operands = 0 : i64, tpu.core_type = #tpu.core_type<tc>, window_params = [{transform_indices = @transform_0, window_bounds = array<i64: 2, 16, 64>}, {pipeline_mode = #tpu.pipeline_mode<synchronous>, transform_indices = @transform_1, window_bounds = array<i64: 2, 64>}]} {
    %c0 = arith.constant 0 : index
    %c0_0 = arith.constant 0 : index
    %c0_1 = arith.constant 0 : index
    %0 = vector.load %arg1[%c0, %c0_0, %c0_1] : memref<2x16x64xf32, #tpu.memory_space<vmem>>, vector<2x16x64xf32>
    %cst = arith.constant dense<0xFF800000> : vector<2x64xf32>
    %1 = vector.multi_reduction <maximumf>, %0, %cst [1] : vector<2x16x64xf32> to vector<2x64xf32>
    %c0_i32 = arith.constant 0 : i32
    %2 = arith.cmpi eq, %arg0, %c0_i32 : i32
    %3 = arith.extui %2 : i1 to i32
    %c0_i32_2 = arith.constant 0 : i32
    %4 = arith.cmpi ne, %3, %c0_i32_2 : i32
    scf.if %4 {
      %c0_5 = arith.constant 0 : index
      %c0_6 = arith.constant 0 : index
      %8 = vector.load %arg2[%c0_5, %c0_6] : memref<2x64xf32, #tpu.memory_space<vmem>>, vector<2x64xf32>
      tpu.vector_store %arg2[%c0_5, %c0_6], %1 {strides = array<i32>} : memref<2x64xf32, #tpu.memory_space<vmem>>, vector<2x64xf32>,
    } else {
    }
    %c0_i32_3 = arith.constant 0 : i32
    %5 = arith.cmpi sgt, %arg0, %c0_i32_3 : i32
    %6 = arith.extui %5 : i1 to i32
    %c0_i32_4 = arith.constant 0 : i32
    %7 = arith.cmpi ne, %6, %c0_i32_4 : i32
    scf.if %7 {
      %c0_5 = arith.constant 0 : index
      %c0_6 = arith.constant 0 : index
      %8 = vector.load %arg2[%c0_5, %c0_6] : memref<2x64xf32, #tpu.memory_space<vmem>>, vector<2x64xf32>
      %9 = arith.maximumf %8, %1 : vector<2x64xf32>
      %c0_7 = arith.constant 0 : index
      %c0_8 = arith.constant 0 : index
      %10 = vector.load %arg2[%c0_7, %c0_8] : memref<2x64xf32, #tpu.memory_space<vmem>>, vector<2x64xf32>
      tpu.vector_store %arg2[%c0_7, %c0_8], %9 {strides = array<i32>} : memref<2x64xf32, #tpu.memory_space<vmem>>, vector<2x64xf32>,
    } else {
    }
    return
  }
  func.func @transform_0(%arg0: i32) -> (i32, i32, i32) {
    %c0_i32 = arith.constant 0 : i32
    %c0_i32_0 = arith.constant 0 : i32
    %c0_i32_1 = arith.constant 0 : i32
    return %c0_i32, %arg0, %c0_i32_0 : i32, i32, i32
  }
  func.func @transform_1(%arg0: i32) -> (i32, i32) {
    %c0_i32 = arith.constant 0 : i32
    %c0_i32_0 = arith.constant 0 : i32
    %c0_i32_1 = arith.constant 0 : i32
    return %c0_i32, %c0_i32_0 : i32, i32
  }
}

module attributes {stable_mosaic.version = 11 : i64} {
  func.func @_linear_kernel(%arg0: i32, %arg1: memref<2x64xf32, #tpu.memory_space<vmem>>, %arg2: memref<64x64xf32, #tpu.memory_space<vmem>>, %arg3: memref<1x64xf32, #tpu.memory_space<vmem>>, %arg4: memref<2x64xf32, #tpu.memory_space<vmem>>) attributes {dimension_semantics = [#tpu.dimension_semantics<parallel>], iteration_bounds = array<i64: 1>, scalar_prefetch = 0 : i64, scratch_operands = 0 : i64, tpu.core_type = #tpu.core_type<tc>, window_params = [{transform_indices = @transform_0, window_bounds = array<i64: 2, 64>}, {pipeline_mode = #tpu.pipeline_mode<synchronous>, transform_indices = @transform_1, window_bounds = array<i64: 64, 64>}, {pipeline_mode = #tpu.pipeline_mode<synchronous>, transform_indices = @transform_2, window_bounds = array<i64: 1, 64>}, {transform_indices = @transform_3, window_bounds = array<i64: 2, 64>}]} {
    %c0 = arith.constant 0 : index
    %c0_0 = arith.constant 0 : index
    %0 = vector.load %arg1[%c0, %c0_0] : memref<2x64xf32, #tpu.memory_space<vmem>>, vector<2x64xf32>
    %1 = arith.truncf %0 : vector<2x64xf32> to vector<2x64xbf16>
    %c0_1 = arith.constant 0 : index
    %c0_2 = arith.constant 0 : index
    %2 = vector.load %arg2[%c0_1, %c0_2] : memref<64x64xf32, #tpu.memory_space<vmem>>, vector<64x64xf32>
    %3 = arith.truncf %2 : vector<64x64xf32> to vector<64x64xbf16>
    %cst = arith.constant dense<0.000000e+00> : vector<2x64xf32>
    %4 = tpu.matmul %1, %3, %cst {dimension_numbers = #tpu.dot_dimension_numbers<[1], [0], [0], [1], [0, 0, 1, 1], [], []>} : vector<2x64xbf16>, vector<64x64xbf16>, vector<2x64xf32> -> vector<2x64xf32>
    %c0_3 = arith.constant 0 : index
    %c0_4 = arith.constant 0 : index
    %5 = vector.load %arg3[%c0_3, %c0_4] : memref<1x64xf32, #tpu.memory_space<vmem>>, vector<1x64xf32>
    %6 = vector.broadcast %5 : vector<1x64xf32> to vector<2x64xf32>
    %7 = arith.addf %4, %6 : vector<2x64xf32>
    %cst_5 = arith.constant 0.000000e+00 : f32
    %8 = vector.broadcast %cst_5 : f32 to vector<2x64xf32>
    %9 = arith.cmpf oge, %7, %8 : vector<2x64xf32>
    %cst_6 = arith.constant 0.00999999977 : f32
    %10 = vector.broadcast %cst_6 : f32 to vector<2x64xf32>
    %11 = arith.mulf %10, %7 : vector<2x64xf32>
    %12 = arith.select %9, %7, %11 : vector<2x64xi1>, vector<2x64xf32>
    %c0_7 = arith.constant 0 : index
    %c0_8 = arith.constant 0 : index
    %13 = vector.load %arg4[%c0_7, %c0_8] : memref<2x64xf32, #tpu.memory_space<vmem>>, vector<2x64xf32>
    tpu.vector_store %arg4[%c0_7, %c0_8], %12 {strides = array<i32>} : memref<2x64xf32, #tpu.memory_space<vmem>>, vector<2x64xf32>,
    return
  }
  func.func @transform_0(%arg0: i32) -> (i32, i32) {
    %c0_i32 = arith.constant 0 : i32
    %c0_i32_0 = arith.constant 0 : i32
    return %arg0, %c0_i32 : i32, i32
  }
  func.func @transform_1(%arg0: i32) -> (i32, i32) {
    %c0_i32 = arith.constant 0 : i32
    %c0_i32_0 = arith.constant 0 : i32
    %c0_i32_1 = arith.constant 0 : i32
    return %c0_i32, %c0_i32_0 : i32, i32
  }
  func.func @transform_2(%arg0: i32) -> (i32, i32) {
    %c0_i32 = arith.constant 0 : i32
    %c0_i32_0 = arith.constant 0 : i32
    %c0_i32_1 = arith.constant 0 : i32
    return %c0_i32, %c0_i32_0 : i32, i32
  }
  func.func @transform_3(%arg0: i32) -> (i32, i32) {
    %c0_i32 = arith.constant 0 : i32
    %c0_i32_0 = arith.constant 0 : i32
    return %arg0, %c0_i32 : i32, i32
  }
}

module attributes {stable_mosaic.version = 11 : i64} {
  func.func @_linear_kernel(%arg0: i32, %arg1: memref<2x64xf32, #tpu.memory_space<vmem>>, %arg2: memref<64x1024xf32, #tpu.memory_space<vmem>>, %arg3: memref<1x1024xf32, #tpu.memory_space<vmem>>, %arg4: memref<2x1024xf32, #tpu.memory_space<vmem>>) attributes {dimension_semantics = [#tpu.dimension_semantics<parallel>], iteration_bounds = array<i64: 1>, scalar_prefetch = 0 : i64, scratch_operands = 0 : i64, tpu.core_type = #tpu.core_type<tc>, window_params = [{transform_indices = @transform_0, window_bounds = array<i64: 2, 64>}, {pipeline_mode = #tpu.pipeline_mode<synchronous>, transform_indices = @transform_1, window_bounds = array<i64: 64, 1024>}, {pipeline_mode = #tpu.pipeline_mode<synchronous>, transform_indices = @transform_2, window_bounds = array<i64: 1, 1024>}, {transform_indices = @transform_3, window_bounds = array<i64: 2, 1024>}]} {
    %c0 = arith.constant 0 : index
    %c0_0 = arith.constant 0 : index
    %0 = vector.load %arg1[%c0, %c0_0] : memref<2x64xf32, #tpu.memory_space<vmem>>, vector<2x64xf32>
    %1 = arith.truncf %0 : vector<2x64xf32> to vector<2x64xbf16>
    %c0_1 = arith.constant 0 : index
    %c0_2 = arith.constant 0 : index
    %2 = vector.load %arg2[%c0_1, %c0_2] : memref<64x1024xf32, #tpu.memory_space<vmem>>, vector<64x1024xf32>
    %3 = arith.truncf %2 : vector<64x1024xf32> to vector<64x1024xbf16>
    %cst = arith.constant dense<0.000000e+00> : vector<2x1024xf32>
    %4 = tpu.matmul %1, %3, %cst {dimension_numbers = #tpu.dot_dimension_numbers<[1], [0], [0], [1], [0, 0, 1, 1], [], []>} : vector<2x64xbf16>, vector<64x1024xbf16>, vector<2x1024xf32> -> vector<2x1024xf32>
    %c0_3 = arith.constant 0 : index
    %c0_4 = arith.constant 0 : index
    %5 = vector.load %arg3[%c0_3, %c0_4] : memref<1x1024xf32, #tpu.memory_space<vmem>>, vector<1x1024xf32>
    %6 = vector.broadcast %5 : vector<1x1024xf32> to vector<2x1024xf32>
    %7 = arith.addf %4, %6 : vector<2x1024xf32>
    %c0_5 = arith.constant 0 : index
    %c0_6 = arith.constant 0 : index
    %8 = vector.load %arg4[%c0_5, %c0_6] : memref<2x1024xf32, #tpu.memory_space<vmem>>, vector<2x1024xf32>
    tpu.vector_store %arg4[%c0_5, %c0_6], %7 {strides = array<i32>} : memref<2x1024xf32, #tpu.memory_space<vmem>>, vector<2x1024xf32>,
    return
  }
  func.func @transform_0(%arg0: i32) -> (i32, i32) {
    %c0_i32 = arith.constant 0 : i32
    %c0_i32_0 = arith.constant 0 : i32
    return %arg0, %c0_i32 : i32, i32
  }
  func.func @transform_1(%arg0: i32) -> (i32, i32) {
    %c0_i32 = arith.constant 0 : i32
    %c0_i32_0 = arith.constant 0 : i32
    %c0_i32_1 = arith.constant 0 : i32
    return %c0_i32, %c0_i32_0 : i32, i32
  }
  func.func @transform_2(%arg0: i32) -> (i32, i32) {
    %c0_i32 = arith.constant 0 : i32
    %c0_i32_0 = arith.constant 0 : i32
    %c0_i32_1 = arith.constant 0 : i32
    return %c0_i32, %c0_i32_0 : i32, i32
  }
  func.func @transform_3(%arg0: i32) -> (i32, i32) {
    %c0_i32 = arith.constant 0 : i32
    %c0_i32_0 = arith.constant 0 : i32
    return %arg0, %c0_i32 : i32, i32
  }
}

module attributes {stable_mosaic.version = 11 : i64} {
  func.func @_attn_kernel(%arg0: i32, %arg1: i32, %arg2: memref<1x16x64xf32, #tpu.memory_space<vmem>>, %arg3: memref<1x16x128xf32, #tpu.memory_space<vmem>>, %arg4: memref<1x16x64xf32, #tpu.memory_space<vmem>>) attributes {dimension_semantics = [#tpu.dimension_semantics<parallel>, #tpu.dimension_semantics<parallel>], iteration_bounds = array<i64: 2, 1>, scalar_prefetch = 0 : i64, scratch_operands = 0 : i64, tpu.core_type = #tpu.core_type<tc>, window_params = [{transform_indices = @transform_0, window_bounds = array<i64: 1, 16, 64>}, {transform_indices = @transform_1, window_bounds = array<i64: 1, 16, 128>}, {transform_indices = @transform_2, window_bounds = array<i64: 1, 16, 64>}]} {
    %c0 = arith.constant 0 : index
    %c0_0 = arith.constant 0 : index
    %c0_1 = arith.constant 0 : index
    %0 = vector.load %arg2[%c0, %c0_0, %c0_1] : memref<1x16x64xf32, #tpu.memory_space<vmem>>, vector<1x16x64xf32>
    %1 = vector.shape_cast %0 : vector<1x16x64xf32> to vector<16x64xf32>
    %c0_2 = arith.constant 0 : index
    %c0_3 = arith.constant 0 : index
    %c0_4 = arith.constant 0 : index
    %2 = vector.load %arg3[%c0_2, %c0_3, %c0_4] : memref<1x16x128xf32, #tpu.memory_space<vmem>>, vector<1x16x128xf32>
    %3 = vector.shape_cast %2 : vector<1x16x128xf32> to vector<16x128xf32>
    %4 = vector.extract_strided_slice %1 {offsets = [0, 0], sizes = [16, 8], strides = [1, 1]} : vector<16x64xf32> to vector<16x8xf32>
    %5 = arith.truncf %4 : vector<16x8xf32> to vector<16x8xbf16>
    %6 = vector.extract_strided_slice %3 {offsets = [0, 0], sizes = [16, 8], strides = [1, 1]} : vector<16x128xf32> to vector<16x8xf32>
    %7 = arith.truncf %6 : vector<16x8xf32> to vector<16x8xbf16>
    %8 = vector.extract_strided_slice %3 {offsets = [0, 64], sizes = [16, 8], strides = [1, 1]} : vector<16x128xf32> to vector<16x8xf32>
    %9 = arith.truncf %8 : vector<16x8xf32> to vector<16x8xbf16>
    %cst = arith.constant dense<0.000000e+00> : vector<16x16xf32>
    %10 = tpu.matmul %5, %7, %cst {dimension_numbers = #tpu.dot_dimension_numbers<[1], [1], [0], [0], [0, 0, 1, 0], [], []>} : vector<16x8xbf16>, vector<16x8xbf16>, vector<16x16xf32> -> vector<16x16xf32>
    %cst_5 = arith.constant 0.353553385 : f32
    %11 = vector.broadcast %cst_5 : f32 to vector<16x16xf32>
    %12 = arith.mulf %10, %11 : vector<16x16xf32>
    %cst_6 = arith.constant dense<0xFF800000> : vector<16xf32>
    %13 = vector.multi_reduction <maximumf>, %12, %cst_6 [1] : vector<16x16xf32> to vector<16xf32>
    %14 = vector.shape_cast %13 : vector<16xf32> to vector<16x1xf32>
    %15 = vector.broadcast %14 : vector<16x1xf32> to vector<16x16xf32>
    %16 = arith.subf %12, %15 : vector<16x16xf32>
    %17 = math.exp %16 : vector<16x16xf32>
    %cst_7 = arith.constant dense<0.000000e+00> : vector<16xf32>
    %18 = vector.multi_reduction <add>, %17, %cst_7 [1] : vector<16x16xf32> to vector<16xf32>
    %19 = vector.shape_cast %18 : vector<16xf32> to vector<16x1xf32>
    %20 = tpu.reciprocal %19 {approx = true} : vector<16x1xf32> -> vector<16x1xf32>
    %21 = vector.broadcast %20 : vector<16x1xf32> to vector<16x16xf32>
    %22 = arith.mulf %17, %21 : vector<16x16xf32>
    %23 = arith.truncf %22 : vector<16x16xf32> to vector<16x16xbf16>
    %cst_8 = arith.constant dense<0.000000e+00> : vector<16x8xf32>
    %24 = tpu.matmul %23, %9, %cst_8 {dimension_numbers = #tpu.dot_dimension_numbers<[1], [0], [0], [1], [0, 0, 1, 1], [], []>} : vector<16x16xbf16>, vector<16x8xbf16>, vector<16x8xf32> -> vector<16x8xf32>
    %25 = vector.extract_strided_slice %1 {offsets = [0, 8], sizes = [16, 8], strides = [1, 1]} : vector<16x64xf32> to vector<16x8xf32>
    %26 = arith.truncf %25 : vector<16x8xf32> to vector<16x8xbf16>
    %27 = vector.extract_strided_slice %3 {offsets = [0, 8], sizes = [16, 8], strides = [1, 1]} : vector<16x128xf32> to vector<16x8xf32>
    %28 = arith.truncf %27 : vector<16x8xf32> to vector<16x8xbf16>
    %29 = vector.extract_strided_slice %3 {offsets = [0, 72], sizes = [16, 8], strides = [1, 1]} : vector<16x128xf32> to vector<16x8xf32>
    %30 = arith.truncf %29 : vector<16x8xf32> to vector<16x8xbf16>
    %cst_9 = arith.constant dense<0.000000e+00> : vector<16x16xf32>
    %31 = tpu.matmul %26, %28, %cst_9 {dimension_numbers = #tpu.dot_dimension_numbers<[1], [1], [0], [0], [0, 0, 1, 0], [], []>} : vector<16x8xbf16>, vector<16x8xbf16>, vector<16x16xf32> -> vector<16x16xf32>
    %cst_10 = arith.constant 0.353553385 : f32
    %32 = vector.broadcast %cst_10 : f32 to vector<16x16xf32>
    %33 = arith.mulf %31, %32 : vector<16x16xf32>
    %cst_11 = arith.constant dense<0xFF800000> : vector<16xf32>
    %34 = vector.multi_reduction <maximumf>, %33, %cst_11 [1] : vector<16x16xf32> to vector<16xf32>
    %35 = vector.shape_cast %34 : vector<16xf32> to vector<16x1xf32>
    %36 = vector.broadcast %35 : vector<16x1xf32> to vector<16x16xf32>
    %37 = arith.subf %33, %36 : vector<16x16xf32>
    %38 = math.exp %37 : vector<16x16xf32>
    %cst_12 = arith.constant dense<0.000000e+00> : vector<16xf32>
    %39 = vector.multi_reduction <add>, %38, %cst_12 [1] : vector<16x16xf32> to vector<16xf32>
    %40 = vector.shape_cast %39 : vector<16xf32> to vector<16x1xf32>
    %41 = tpu.reciprocal %40 {approx = true} : vector<16x1xf32> -> vector<16x1xf32>
    %42 = vector.broadcast %41 : vector<16x1xf32> to vector<16x16xf32>
    %43 = arith.mulf %38, %42 : vector<16x16xf32>
    %44 = arith.truncf %43 : vector<16x16xf32> to vector<16x16xbf16>
    %cst_13 = arith.constant dense<0.000000e+00> : vector<16x8xf32>
    %45 = tpu.matmul %44, %30, %cst_13 {dimension_numbers = #tpu.dot_dimension_numbers<[1], [0], [0], [1], [0, 0, 1, 1], [], []>} : vector<16x16xbf16>, vector<16x8xbf16>, vector<16x8xf32> -> vector<16x8xf32>
    %46 = vector.extract_strided_slice %1 {offsets = [0, 16], sizes = [16, 8], strides = [1, 1]} : vector<16x64xf32> to vector<16x8xf32>
    %47 = arith.truncf %46 : vector<16x8xf32> to vector<16x8xbf16>
    %48 = vector.extract_strided_slice %3 {offsets = [0, 16], sizes = [16, 8], strides = [1, 1]} : vector<16x128xf32> to vector<16x8xf32>
    %49 = arith.truncf %48 : vector<16x8xf32> to vector<16x8xbf16>
    %50 = vector.extract_strided_slice %3 {offsets = [0, 80], sizes = [16, 8], strides = [1, 1]} : vector<16x128xf32> to vector<16x8xf32>
    %51 = arith.truncf %50 : vector<16x8xf32> to vector<16x8xbf16>
    %cst_14 = arith.constant dense<0.000000e+00> : vector<16x16xf32>
    %52 = tpu.matmul %47, %49, %cst_14 {dimension_numbers = #tpu.dot_dimension_numbers<[1], [1], [0], [0], [0, 0, 1, 0], [], []>} : vector<16x8xbf16>, vector<16x8xbf16>, vector<16x16xf32> -> vector<16x16xf32>
    %cst_15 = arith.constant 0.353553385 : f32
    %53 = vector.broadcast %cst_15 : f32 to vector<16x16xf32>
    %54 = arith.mulf %52, %53 : vector<16x16xf32>
    %cst_16 = arith.constant dense<0xFF800000> : vector<16xf32>
    %55 = vector.multi_reduction <maximumf>, %54, %cst_16 [1] : vector<16x16xf32> to vector<16xf32>
    %56 = vector.shape_cast %55 : vector<16xf32> to vector<16x1xf32>
    %57 = vector.broadcast %56 : vector<16x1xf32> to vector<16x16xf32>
    %58 = arith.subf %54, %57 : vector<16x16xf32>
    %59 = math.exp %58 : vector<16x16xf32>
    %cst_17 = arith.constant dense<0.000000e+00> : vector<16xf32>
    %60 = vector.multi_reduction <add>, %59, %cst_17 [1] : vector<16x16xf32> to vector<16xf32>
    %61 = vector.shape_cast %60 : vector<16xf32> to vector<16x1xf32>
    %62 = tpu.reciprocal %61 {approx = true} : vector<16x1xf32> -> vector<16x1xf32>
    %63 = vector.broadcast %62 : vector<16x1xf32> to vector<16x16xf32>
    %64 = arith.mulf %59, %63 : vector<16x16xf32>
    %65 = arith.truncf %64 : vector<16x16xf32> to vector<16x16xbf16>
    %cst_18 = arith.constant dense<0.000000e+00> : vector<16x8xf32>
    %66 = tpu.matmul %65, %51, %cst_18 {dimension_numbers = #tpu.dot_dimension_numbers<[1], [0], [0], [1], [0, 0, 1, 1], [], []>} : vector<16x16xbf16>, vector<16x8xbf16>, vector<16x8xf32> -> vector<16x8xf32>
    %67 = vector.extract_strided_slice %1 {offsets = [0, 24], sizes = [16, 8], strides = [1, 1]} : vector<16x64xf32> to vector<16x8xf32>
    %68 = arith.truncf %67 : vector<16x8xf32> to vector<16x8xbf16>
    %69 = vector.extract_strided_slice %3 {offsets = [0, 24], sizes = [16, 8], strides = [1, 1]} : vector<16x128xf32> to vector<16x8xf32>
    %70 = arith.truncf %69 : vector<16x8xf32> to vector<16x8xbf16>
    %71 = vector.extract_strided_slice %3 {offsets = [0, 88], sizes = [16, 8], strides = [1, 1]} : vector<16x128xf32> to vector<16x8xf32>
    %72 = arith.truncf %71 : vector<16x8xf32> to vector<16x8xbf16>
    %cst_19 = arith.constant dense<0.000000e+00> : vector<16x16xf32>
    %73 = tpu.matmul %68, %70, %cst_19 {dimension_numbers = #tpu.dot_dimension_numbers<[1], [1], [0], [0], [0, 0, 1, 0], [], []>} : vector<16x8xbf16>, vector<16x8xbf16>, vector<16x16xf32> -> vector<16x16xf32>
    %cst_20 = arith.constant 0.353553385 : f32
    %74 = vector.broadcast %cst_20 : f32 to vector<16x16xf32>
    %75 = arith.mulf %73, %74 : vector<16x16xf32>
    %cst_21 = arith.constant dense<0xFF800000> : vector<16xf32>
    %76 = vector.multi_reduction <maximumf>, %75, %cst_21 [1] : vector<16x16xf32> to vector<16xf32>
    %77 = vector.shape_cast %76 : vector<16xf32> to vector<16x1xf32>
    %78 = vector.broadcast %77 : vector<16x1xf32> to vector<16x16xf32>
    %79 = arith.subf %75, %78 : vector<16x16xf32>
    %80 = math.exp %79 : vector<16x16xf32>
    %cst_22 = arith.constant dense<0.000000e+00> : vector<16xf32>
    %81 = vector.multi_reduction <add>, %80, %cst_22 [1] : vector<16x16xf32> to vector<16xf32>
    %82 = vector.shape_cast %81 : vector<16xf32> to vector<16x1xf32>
    %83 = tpu.reciprocal %82 {approx = true} : vector<16x1xf32> -> vector<16x1xf32>
    %84 = vector.broadcast %83 : vector<16x1xf32> to vector<16x16xf32>
    %85 = arith.mulf %80, %84 : vector<16x16xf32>
    %86 = arith.truncf %85 : vector<16x16xf32> to vector<16x16xbf16>
    %cst_23 = arith.constant dense<0.000000e+00> : vector<16x8xf32>
    %87 = tpu.matmul %86, %72, %cst_23 {dimension_numbers = #tpu.dot_dimension_numbers<[1], [0], [0], [1], [0, 0, 1, 1], [], []>} : vector<16x16xbf16>, vector<16x8xbf16>, vector<16x8xf32> -> vector<16x8xf32>
    %88 = vector.extract_strided_slice %1 {offsets = [0, 32], sizes = [16, 8], strides = [1, 1]} : vector<16x64xf32> to vector<16x8xf32>
    %89 = arith.truncf %88 : vector<16x8xf32> to vector<16x8xbf16>
    %90 = vector.extract_strided_slice %3 {offsets = [0, 32], sizes = [16, 8], strides = [1, 1]} : vector<16x128xf32> to vector<16x8xf32>
    %91 = arith.truncf %90 : vector<16x8xf32> to vector<16x8xbf16>
    %92 = vector.extract_strided_slice %3 {offsets = [0, 96], sizes = [16, 8], strides = [1, 1]} : vector<16x128xf32> to vector<16x8xf32>
    %93 = arith.truncf %92 : vector<16x8xf32> to vector<16x8xbf16>
    %cst_24 = arith.constant dense<0.000000e+00> : vector<16x16xf32>
    %94 = tpu.matmul %89, %91, %cst_24 {dimension_numbers = #tpu.dot_dimension_numbers<[1], [1], [0], [0], [0, 0, 1, 0], [], []>} : vector<16x8xbf16>, vector<16x8xbf16>, vector<16x16xf32> -> vector<16x16xf32>
    %cst_25 = arith.constant 0.353553385 : f32
    %95 = vector.broadcast %cst_25 : f32 to vector<16x16xf32>
    %96 = arith.mulf %94, %95 : vector<16x16xf32>
    %cst_26 = arith.constant dense<0xFF800000> : vector<16xf32>
    %97 = vector.multi_reduction <maximumf>, %96, %cst_26 [1] : vector<16x16xf32> to vector<16xf32>
    %98 = vector.shape_cast %97 : vector<16xf32> to vector<16x1xf32>
    %99 = vector.broadcast %98 : vector<16x1xf32> to vector<16x16xf32>
    %100 = arith.subf %96, %99 : vector<16x16xf32>
    %101 = math.exp %100 : vector<16x16xf32>
    %cst_27 = arith.constant dense<0.000000e+00> : vector<16xf32>
    %102 = vector.multi_reduction <add>, %101, %cst_27 [1] : vector<16x16xf32> to vector<16xf32>
    %103 = vector.shape_cast %102 : vector<16xf32> to vector<16x1xf32>
    %104 = tpu.reciprocal %103 {approx = true} : vector<16x1xf32> -> vector<16x1xf32>
    %105 = vector.broadcast %104 : vector<16x1xf32> to vector<16x16xf32>
    %106 = arith.mulf %101, %105 : vector<16x16xf32>
    %107 = arith.truncf %106 : vector<16x16xf32> to vector<16x16xbf16>
    %cst_28 = arith.constant dense<0.000000e+00> : vector<16x8xf32>
    %108 = tpu.matmul %107, %93, %cst_28 {dimension_numbers = #tpu.dot_dimension_numbers<[1], [0], [0], [1], [0, 0, 1, 1], [], []>} : vector<16x16xbf16>, vector<16x8xbf16>, vector<16x8xf32> -> vector<16x8xf32>
    %109 = vector.extract_strided_slice %1 {offsets = [0, 40], sizes = [16, 8], strides = [1, 1]} : vector<16x64xf32> to vector<16x8xf32>
    %110 = arith.truncf %109 : vector<16x8xf32> to vector<16x8xbf16>
    %111 = vector.extract_strided_slice %3 {offsets = [0, 40], sizes = [16, 8], strides = [1, 1]} : vector<16x128xf32> to vector<16x8xf32>
    %112 = arith.truncf %111 : vector<16x8xf32> to vector<16x8xbf16>
    %113 = vector.extract_strided_slice %3 {offsets = [0, 104], sizes = [16, 8], strides = [1, 1]} : vector<16x128xf32> to vector<16x8xf32>
    %114 = arith.truncf %113 : vector<16x8xf32> to vector<16x8xbf16>
    %cst_29 = arith.constant dense<0.000000e+00> : vector<16x16xf32>
    %115 = tpu.matmul %110, %112, %cst_29 {dimension_numbers = #tpu.dot_dimension_numbers<[1], [1], [0], [0], [0, 0, 1, 0], [], []>} : vector<16x8xbf16>, vector<16x8xbf16>, vector<16x16xf32> -> vector<16x16xf32>
    %cst_30 = arith.constant 0.353553385 : f32
    %116 = vector.broadcast %cst_30 : f32 to vector<16x16xf32>
    %117 = arith.mulf %115, %116 : vector<16x16xf32>
    %cst_31 = arith.constant dense<0xFF800000> : vector<16xf32>
    %118 = vector.multi_reduction <maximumf>, %117, %cst_31 [1] : vector<16x16xf32> to vector<16xf32>
    %119 = vector.shape_cast %118 : vector<16xf32> to vector<16x1xf32>
    %120 = vector.broadcast %119 : vector<16x1xf32> to vector<16x16xf32>
    %121 = arith.subf %117, %120 : vector<16x16xf32>
    %122 = math.exp %121 : vector<16x16xf32>
    %cst_32 = arith.constant dense<0.000000e+00> : vector<16xf32>
    %123 = vector.multi_reduction <add>, %122, %cst_32 [1] : vector<16x16xf32> to vector<16xf32>
    %124 = vector.shape_cast %123 : vector<16xf32> to vector<16x1xf32>
    %125 = tpu.reciprocal %124 {approx = true} : vector<16x1xf32> -> vector<16x1xf32>
    %126 = vector.broadcast %125 : vector<16x1xf32> to vector<16x16xf32>
    %127 = arith.mulf %122, %126 : vector<16x16xf32>
    %128 = arith.truncf %127 : vector<16x16xf32> to vector<16x16xbf16>
    %cst_33 = arith.constant dense<0.000000e+00> : vector<16x8xf32>
    %129 = tpu.matmul %128, %114, %cst_33 {dimension_numbers = #tpu.dot_dimension_numbers<[1], [0], [0], [1], [0, 0, 1, 1], [], []>} : vector<16x16xbf16>, vector<16x8xbf16>, vector<16x8xf32> -> vector<16x8xf32>
    %130 = vector.extract_strided_slice %1 {offsets = [0, 48], sizes = [16, 8], strides = [1, 1]} : vector<16x64xf32> to vector<16x8xf32>
    %131 = arith.truncf %130 : vector<16x8xf32> to vector<16x8xbf16>
    %132 = vector.extract_strided_slice %3 {offsets = [0, 48], sizes = [16, 8], strides = [1, 1]} : vector<16x128xf32> to vector<16x8xf32>
    %133 = arith.truncf %132 : vector<16x8xf32> to vector<16x8xbf16>
    %134 = vector.extract_strided_slice %3 {offsets = [0, 112], sizes = [16, 8], strides = [1, 1]} : vector<16x128xf32> to vector<16x8xf32>
    %135 = arith.truncf %134 : vector<16x8xf32> to vector<16x8xbf16>
    %cst_34 = arith.constant dense<0.000000e+00> : vector<16x16xf32>
    %136 = tpu.matmul %131, %133, %cst_34 {dimension_numbers = #tpu.dot_dimension_numbers<[1], [1], [0], [0], [0, 0, 1, 0], [], []>} : vector<16x8xbf16>, vector<16x8xbf16>, vector<16x16xf32> -> vector<16x16xf32>
    %cst_35 = arith.constant 0.353553385 : f32
    %137 = vector.broadcast %cst_35 : f32 to vector<16x16xf32>
    %138 = arith.mulf %136, %137 : vector<16x16xf32>
    %cst_36 = arith.constant dense<0xFF800000> : vector<16xf32>
    %139 = vector.multi_reduction <maximumf>, %138, %cst_36 [1] : vector<16x16xf32> to vector<16xf32>
    %140 = vector.shape_cast %139 : vector<16xf32> to vector<16x1xf32>
    %141 = vector.broadcast %140 : vector<16x1xf32> to vector<16x16xf32>
    %142 = arith.subf %138, %141 : vector<16x16xf32>
    %143 = math.exp %142 : vector<16x16xf32>
    %cst_37 = arith.constant dense<0.000000e+00> : vector<16xf32>
    %144 = vector.multi_reduction <add>, %143, %cst_37 [1] : vector<16x16xf32> to vector<16xf32>
    %145 = vector.shape_cast %144 : vector<16xf32> to vector<16x1xf32>
    %146 = tpu.reciprocal %145 {approx = true} : vector<16x1xf32> -> vector<16x1xf32>
    %147 = vector.broadcast %146 : vector<16x1xf32> to vector<16x16xf32>
    %148 = arith.mulf %143, %147 : vector<16x16xf32>
    %149 = arith.truncf %148 : vector<16x16xf32> to vector<16x16xbf16>
    %cst_38 = arith.constant dense<0.000000e+00> : vector<16x8xf32>
    %150 = tpu.matmul %149, %135, %cst_38 {dimension_numbers = #tpu.dot_dimension_numbers<[1], [0], [0], [1], [0, 0, 1, 1], [], []>} : vector<16x16xbf16>, vector<16x8xbf16>, vector<16x8xf32> -> vector<16x8xf32>
    %151 = vector.extract_strided_slice %1 {offsets = [0, 56], sizes = [16, 8], strides = [1, 1]} : vector<16x64xf32> to vector<16x8xf32>
    %152 = arith.truncf %151 : vector<16x8xf32> to vector<16x8xbf16>
    %153 = vector.extract_strided_slice %3 {offsets = [0, 56], sizes = [16, 8], strides = [1, 1]} : vector<16x128xf32> to vector<16x8xf32>
    %154 = arith.truncf %153 : vector<16x8xf32> to vector<16x8xbf16>
    %155 = vector.extract_strided_slice %3 {offsets = [0, 120], sizes = [16, 8], strides = [1, 1]} : vector<16x128xf32> to vector<16x8xf32>
    %156 = arith.truncf %155 : vector<16x8xf32> to vector<16x8xbf16>
    %cst_39 = arith.constant dense<0.000000e+00> : vector<16x16xf32>
    %157 = tpu.matmul %152, %154, %cst_39 {dimension_numbers = #tpu.dot_dimension_numbers<[1], [1], [0], [0], [0, 0, 1, 0], [], []>} : vector<16x8xbf16>, vector<16x8xbf16>, vector<16x16xf32> -> vector<16x16xf32>
    %cst_40 = arith.constant 0.353553385 : f32
    %158 = vector.broadcast %cst_40 : f32 to vector<16x16xf32>
    %159 = arith.mulf %157, %158 : vector<16x16xf32>
    %cst_41 = arith.constant dense<0xFF800000> : vector<16xf32>
    %160 = vector.multi_reduction <maximumf>, %159, %cst_41 [1] : vector<16x16xf32> to vector<16xf32>
    %161 = vector.shape_cast %160 : vector<16xf32> to vector<16x1xf32>
    %162 = vector.broadcast %161 : vector<16x1xf32> to vector<16x16xf32>
    %163 = arith.subf %159, %162 : vector<16x16xf32>
    %164 = math.exp %163 : vector<16x16xf32>
    %cst_42 = arith.constant dense<0.000000e+00> : vector<16xf32>
    %165 = vector.multi_reduction <add>, %164, %cst_42 [1] : vector<16x16xf32> to vector<16xf32>
    %166 = vector.shape_cast %165 : vector<16xf32> to vector<16x1xf32>
    %167 = tpu.reciprocal %166 {approx = true} : vector<16x1xf32> -> vector<16x1xf32>
    %168 = vector.broadcast %167 : vector<16x1xf32> to vector<16x16xf32>
    %169 = arith.mulf %164, %168 : vector<16x16xf32>
    %170 = arith.truncf %169 : vector<16x16xf32> to vector<16x16xbf16>
    %cst_43 = arith.constant dense<0.000000e+00> : vector<16x8xf32>
    %171 = tpu.matmul %170, %156, %cst_43 {dimension_numbers = #tpu.dot_dimension_numbers<[1], [0], [0], [1], [0, 0, 1, 1], [], []>} : vector<16x16xbf16>, vector<16x8xbf16>, vector<16x8xf32> -> vector<16x8xf32>
    %172 = tpu.concatenate %24, %45, %66, %87, %108, %129, %150, %171 in 1 : vector<16x8xf32>, vector<16x8xf32>, vector<16x8xf32>, vector<16x8xf32>, vector<16x8xf32>, vector<16x8xf32>, vector<16x8xf32>, vector<16x8xf32> -> vector<16x64xf32>
    %c0_44 = arith.constant 0 : index
    %c0_45 = arith.constant 0 : index
    %c0_46 = arith.constant 0 : index
    %173 = vector.load %arg4[%c0_44, %c0_45, %c0_46] : memref<1x16x64xf32, #tpu.memory_space<vmem>>, vector<1x16x64xf32>
    %174 = vector.shape_cast %173 : vector<1x16x64xf32> to vector<16x64xf32>
    %175 = vector.shape_cast %172 : vector<16x64xf32> to vector<1x16x64xf32>
    tpu.vector_store %arg4[%c0_44, %c0_45, %c0_46], %175 {strides = array<i32>} : memref<1x16x64xf32, #tpu.memory_space<vmem>>, vector<1x16x64xf32>,
    return
  }
  func.func @transform_0(%arg0: i32, %arg1: i32) -> (i32, i32, i32) {
    %c0_i32 = arith.constant 0 : i32
    %c0_i32_0 = arith.constant 0 : i32
    return %arg0, %arg1, %c0_i32 : i32, i32, i32
  }
  func.func @transform_1(%arg0: i32, %arg1: i32) -> (i32, i32, i32) {
    %c0_i32 = arith.constant 0 : i32
    %c0_i32_0 = arith.constant 0 : i32
    %c0_i32_1 = arith.constant 0 : i32
    return %arg0, %c0_i32, %c0_i32_0 : i32, i32, i32
  }
  func.func @transform_2(%arg0: i32, %arg1: i32) -> (i32, i32, i32) {
    %c0_i32 = arith.constant 0 : i32
    %c0_i32_0 = arith.constant 0 : i32
    return %arg0, %arg1, %c0_i32 : i32, i32, i32
  }
}

module attributes {stable_mosaic.version = 11 : i64} {
  func.func @_linear_kernel(%arg0: i32, %arg1: memref<32x64xf32, #tpu.memory_space<vmem>>, %arg2: memref<64x128xf32, #tpu.memory_space<vmem>>, %arg3: memref<1x128xf32, #tpu.memory_space<vmem>>, %arg4: memref<32x128xf32, #tpu.memory_space<vmem>>) attributes {dimension_semantics = [#tpu.dimension_semantics<parallel>], iteration_bounds = array<i64: 1>, scalar_prefetch = 0 : i64, scratch_operands = 0 : i64, tpu.core_type = #tpu.core_type<tc>, window_params = [{transform_indices = @transform_0, window_bounds = array<i64: 32, 64>}, {pipeline_mode = #tpu.pipeline_mode<synchronous>, transform_indices = @transform_1, window_bounds = array<i64: 64, 128>}, {pipeline_mode = #tpu.pipeline_mode<synchronous>, transform_indices = @transform_2, window_bounds = array<i64: 1, 128>}, {transform_indices = @transform_3, window_bounds = array<i64: 32, 128>}]} {
    %c0 = arith.constant 0 : index
    %c0_0 = arith.constant 0 : index
    %0 = vector.load %arg1[%c0, %c0_0] : memref<32x64xf32, #tpu.memory_space<vmem>>, vector<32x64xf32>
    %1 = arith.truncf %0 : vector<32x64xf32> to vector<32x64xbf16>
    %c0_1 = arith.constant 0 : index
    %c0_2 = arith.constant 0 : index
    %2 = vector.load %arg2[%c0_1, %c0_2] : memref<64x128xf32, #tpu.memory_space<vmem>>, vector<64x128xf32>
    %3 = arith.truncf %2 : vector<64x128xf32> to vector<64x128xbf16>
    %cst = arith.constant dense<0.000000e+00> : vector<32x128xf32>
    %4 = tpu.matmul %1, %3, %cst {dimension_numbers = #tpu.dot_dimension_numbers<[1], [0], [0], [1], [0, 0, 1, 1], [], []>} : vector<32x64xbf16>, vector<64x128xbf16>, vector<32x128xf32> -> vector<32x128xf32>
    %c0_3 = arith.constant 0 : index
    %c0_4 = arith.constant 0 : index
    %5 = vector.load %arg3[%c0_3, %c0_4] : memref<1x128xf32, #tpu.memory_space<vmem>>, vector<1x128xf32>
    %6 = vector.broadcast %5 : vector<1x128xf32> to vector<32x128xf32>
    %7 = arith.addf %4, %6 : vector<32x128xf32>
    %c0_5 = arith.constant 0 : index
    %c0_6 = arith.constant 0 : index
    %8 = vector.load %arg4[%c0_5, %c0_6] : memref<32x128xf32, #tpu.memory_space<vmem>>, vector<32x128xf32>
    tpu.vector_store %arg4[%c0_5, %c0_6], %7 {strides = array<i32>} : memref<32x128xf32, #tpu.memory_space<vmem>>, vector<32x128xf32>,
    return
  }
  func.func @transform_0(%arg0: i32) -> (i32, i32) {
    %c0_i32 = arith.constant 0 : i32
    %c0_i32_0 = arith.constant 0 : i32
    return %arg0, %c0_i32 : i32, i32
  }
  func.func @transform_1(%arg0: i32) -> (i32, i32) {
    %c0_i32 = arith.constant 0 : i32
    %c0_i32_0 = arith.constant 0 : i32
    %c0_i32_1 = arith.constant 0 : i32
    return %c0_i32, %c0_i32_0 : i32, i32
  }
  func.func @transform_2(%arg0: i32) -> (i32, i32) {
    %c0_i32 = arith.constant 0 : i32
    %c0_i32_0 = arith.constant 0 : i32
    %c0_i32_1 = arith.constant 0 : i32
    return %c0_i32, %c0_i32_0 : i32, i32
  }
  func.func @transform_3(%arg0: i32) -> (i32, i32) {
    %c0_i32 = arith.constant 0 : i32
    %c0_i32_0 = arith.constant 0 : i32
    return %arg0, %c0_i32 : i32, i32
  }
}

</mosaic_0001>

<llo_original>
// kernel: completion_transformer_forward.41
$region0: #{completion_transformer_forward.41}
  #allocation0 [shape = 'u32[]', space=smem, size = 0x4, offset = 0x4, fixed_abs, tag = 'smem constant byte address 0x4 - core index']
  #allocation1 [shape = 'u32[144,128]{1,0:T(1,128)}', space=vmem, size = 0x12000, scoped, tag = 'internal scratch']
  %s0 = inlined_call_operand.vmem [shape: f32[32,64], index: 0, kind: input, shape index: {}]
  %s1 = inlined_call_operand.vmem [shape: f32[64,64], index: 1, kind: input, shape index: {}]
  %s2 = inlined_call_operand.vmem [shape: f32[1,64], index: 2, kind: input, shape index: {}]
  %s3 = inlined_call_operand.vmem [shape: f32[32,64], index: 3, kind: output, shape index: {}]
  %s4 = sld [smem:[#allocation0]]
  $region22: #{completion_transformer_forward.41} parent=0
    _
  %s6 = ssub.s32 1, %s4
  %s7 = scalar_select 0, %s6, %s4
  // Predicated region
  $region2: #{completion_transformer_forward.41} parent=0 // pred_check
    _
  $region3: #{completion_transformer_forward.41} parent=0 // pred_check_branch
    %9 = sbr.rel (0) target = $region5
  $region4: #{completion_transformer_forward.41} parent=0 // pred_region
    _
  $region5: #{completion_transformer_forward.41} parent=0 // pred_fallthru
    _
  // Predicated region
  $region6: #{completion_transformer_forward.41} parent=0 // pred_check
    _
  $region7: #{completion_transformer_forward.41} parent=0 // pred_check_branch
    %11 = sbr.rel (0) target = $region9
  $region8: #{completion_transformer_forward.41} parent=0 // pred_region
    _
  $region9: #{completion_transformer_forward.41} parent=0 // pred_fallthru
    _
  // Predicated region
  $region10: #{completion_transformer_forward.41} parent=0 // pred_check
    _
  $region11: #{completion_transformer_forward.41} parent=0 // pred_check_branch
    %13 = sbr.rel (0) target = $region13
  $region12: #{completion_transformer_forward.41} parent=0 // pred_region
    _
  $region13: #{completion_transformer_forward.41} parent=0 // pred_fallthru
    _
  %v15 = vld [vmem:[%s0] sm:$0xff]
  %v16 = vld [vmem:[%s0 + $0x8] sm:$0xff]
  %v17 = vld [vmem:[%s0 + $0x10] sm:$0xff]
  %v18 = vld [vmem:[%s0 + $0x18] sm:$0xff]
  %v19 = vpack.c.bf16 %v16, %v15
  %v20 = vpack.c.bf16 %v18, %v17
  %v21 = vld [vmem:[%s1] sm:$0xff]
  %v22 = vld [vmem:[%s1 + $0x8] sm:$0xff]
  %v23 = vld [vmem:[%s1 + $0x10] sm:$0xff]
  %v24 = vld [vmem:[%s1 + $0x18] sm:$0xff]
  %v25 = vld [vmem:[%s1 + $0x20] sm:$0xff]
  %v26 = vld [vmem:[%s1 + $0x28] sm:$0xff]
  %v27 = vld [vmem:[%s1 + $0x30] sm:$0xff]
  %v28 = vld [vmem:[%s1 + $0x38] sm:$0xff]
  %v29 = vpack.c.bf16 %v22, %v21
  %v30 = vpack.c.bf16 %v24, %v23
  %v31 = vpack.c.bf16 %v26, %v25
  %v32 = vpack.c.bf16 %v28, %v27
  %v33 = vld [vmem:[%s2] sm:$0x1]
  %v35 = vlaneseq
  %v36 = vshrl.u32 %v35, 7
  %v37 = vsub.s32 0, %v36
  %v38 = vrot.slane %v33, %v37
  %vm40 = vcmask 523264
  %v42 = vsel %vm40, %v19, 0
  %v45 = vsel %vm40, %v20, 0
  %47 = vmatprep.subr.bf16.mxu0 0
  %48 = vmatpush1.bf16.msra.mxu0 0
  %49 = vmatprep.subr.bf16.mxu0 0
  %50 = vmatpush1.bf16.msra.mxu0 0
  %51 = vmatprep.subr.bf16.mxu0 0
  %52 = vmatpush1.bf16.msra.mxu0 0
  %53 = vmatprep.subr.bf16.mxu0 0
  %54 = vmatpush1.bf16.msra.mxu0 0
  %55 = vmatprep.subr.bf16.mxu0 0
  %56 = vmatpush1.bf16.msra.mxu0 %v32
  %57 = vmatprep.subr.bf16.mxu0 0
  %58 = vmatpush1.bf16.msra.mxu0 %v31
  %59 = vmatprep.subr.bf16.mxu0 0
  %60 = vmatpush1.bf16.msra.mxu0 %v30
  %61 = vmatprep.subr.bf16.mxu0 0
  %62 = vmatpush1.bf16.msra.mxu0 %v29
  %63 = vmatprep.subr.bf16.mxu0 0
  %64 = vmatpush2.bf16.msra.mxu0 0
  %65 = vmatprep.subr.bf16.mxu0 0
  %66 = vmatpush2.bf16.msra.mxu0 0
  %67 = vmatprep.subr.bf16.mxu0 0
  %68 = vmatpush2.bf16.msra.mxu0 0
  %69 = vmatprep.subr.bf16.mxu0 0
  %70 = vmatpush2.bf16.msra.mxu0 0
  %71 = vmatprep.subr.bf16.mxu0 0
  %72 = vmatpush2.bf16.msra.mxu0 0
  %73 = vmatprep.subr.bf16.mxu0 0
  %74 = vmatpush2.bf16.msra.mxu0 0
  %75 = vmatprep.subr.bf16.mxu0 0
  %76 = vmatpush2.bf16.msra.mxu0 0
  %77 = vmatprep.subr.bf16.mxu0 0
  %78 = vmatpush2.bf16.msra.mxu0 0
  %79 = vmatprep.mubr.bf16.mxu0 0
  %80 = vmatmul.mubr.bf16.gmra.mxu0 %v42
  %v81 = vpop.f32.mrf.mxu0
  %v82 = vadd.f32 %v38, %v81
  %v83 = vpop.f32.mrf.mxu0
  %v84 = vpop.f32.mrf.mxu0
  %v85 = vadd.f32 %v38, %v84
  %v86 = vpop.f32.mrf.mxu0
  %87 = vmatprep.mubr.bf16.mxu0 0
  %88 = vmatmul.mubr.bf16.gmra.mxu0 %v45
  %v89 = vpop.f32.mrf.mxu0
  %v90 = vadd.f32 %v38, %v89
  %v91 = vpop.f32.mrf.mxu0
  %v92 = vpop.f32.mrf.mxu0
  %v93 = vadd.f32 %v38, %v92
  %v94 = vpop.f32.mrf.mxu0
  %95 = vdwg.mxu0
  %96 = vst.msk [vmem:[%s3] sm:$0xff] %vm40, %v82
  %97 = vst.msk [vmem:[%s3 + $0x8] sm:$0xff] %vm40, %v85
  %98 = vst.msk [vmem:[%s3 + $0x10] sm:$0xff] %vm40, %v90
  %99 = vst.msk [vmem:[%s3 + $0x18] sm:$0xff] %vm40, %v93
  // Predicated region
  $region14: #{completion_transformer_forward.41} parent=0 // pred_check
    _
  $region15: #{completion_transformer_forward.41} parent=0 // pred_check_branch
    %101 = sbr.rel (0) target = $region17
  $region16: #{completion_transformer_forward.41} parent=0 // pred_region
    _
  $region17: #{completion_transformer_forward.41} parent=0 // pred_fallthru
    _
  // Predicated region
  $region18: #{completion_transformer_forward.41} parent=0 // pred_check
    _
  $region19: #{completion_transformer_forward.41} parent=0 // pred_check_branch
    %103 = sbr.rel (0) target = $region21
  $region20: #{completion_transformer_forward.41} parent=0 // pred_region
    _
  $region21: #{completion_transformer_forward.41} parent=0 // pred_fallthru
    _

// kernel: completion_transformer_forward.42
$region0: #{completion_transformer_forward.42}
  #allocation0 [shape = 'u32[]', space=smem, size = 0x4, offset = 0x4, fixed_abs, tag = 'smem constant byte address 0x4 - core index']
  #allocation1 [shape = 'u32[144,128]{1,0:T(1,128)}', space=vmem, size = 0x12000, scoped, tag = 'internal scratch']
  %s0 = inlined_call_operand.vmem [shape: f32[32,64], index: 0, kind: input, shape index: {}]
  %s1 = inlined_call_operand.vmem [shape: f32[64,192], index: 1, kind: input, shape index: {}]
  %s2 = inlined_call_operand.vmem [shape: f32[1,192], index: 2, kind: input, shape index: {}]
  %s3 = inlined_call_operand.vmem [shape: f32[32,192], index: 3, kind: output, shape index: {}]
  %s4 = sld [smem:[#allocation0]]
  $region22: #{completion_transformer_forward.42} parent=0
    _
  %s6 = ssub.s32 1, %s4
  %s7 = scalar_select 0, %s6, %s4
  // Predicated region
  $region2: #{completion_transformer_forward.42} parent=0 // pred_check
    _
  $region3: #{completion_transformer_forward.42} parent=0 // pred_check_branch
    %9 = sbr.rel (0) target = $region5
  $region4: #{completion_transformer_forward.42} parent=0 // pred_region
    _
  $region5: #{completion_transformer_forward.42} parent=0 // pred_fallthru
    _
  // Predicated region
  $region6: #{completion_transformer_forward.42} parent=0 // pred_check
    _
  $region7: #{completion_transformer_forward.42} parent=0 // pred_check_branch
    %11 = sbr.rel (0) target = $region9
  $region8: #{completion_transformer_forward.42} parent=0 // pred_region
    _
  $region9: #{completion_transformer_forward.42} parent=0 // pred_fallthru
    _
  // Predicated region
  $region10: #{completion_transformer_forward.42} parent=0 // pred_check
    _
  $region11: #{completion_transformer_forward.42} parent=0 // pred_check_branch
    %13 = sbr.rel (0) target = $region13
  $region12: #{completion_transformer_forward.42} parent=0 // pred_region
    _
  $region13: #{completion_transformer_forward.42} parent=0 // pred_fallthru
    _
  %v15 = vld [vmem:[%s0] sm:$0xff]
  %v16 = vld [vmem:[%s0 + $0x8] sm:$0xff]
  %v17 = vld [vmem:[%s0 + $0x10] sm:$0xff]
  %v18 = vld [vmem:[%s0 + $0x18] sm:$0xff]
  %v19 = vpack.c.bf16 %v16, %v15
  %v20 = vpack.c.bf16 %v18, %v17
  %v21 = vld [vmem:[%s1] sm:$0xff]
  %v22 = vld [vmem:[%s1 + $0x8] sm:$0xff]
  %v23 = vld [vmem:[%s1 + $0x10] sm:$0xff]
  %v24 = vld [vmem:[%s1 + $0x18] sm:$0xff]
  %v25 = vld [vmem:[%s1 + $0x20] sm:$0xff]
  %v26 = vld [vmem:[%s1 + $0x28] sm:$0xff]
  %v27 = vld [vmem:[%s1 + $0x30] sm:$0xff]
  %v28 = vld [vmem:[%s1 + $0x38] sm:$0xff]
  %v29 = vld [vmem:[%s1 + $0x40] sm:$0xff]
  %v30 = vld [vmem:[%s1 + $0x48] sm:$0xff]
  %v31 = vld [vmem:[%s1 + $0x50] sm:$0xff]
  %v32 = vld [vmem:[%s1 + $0x58] sm:$0xff]
  %v33 = vld [vmem:[%s1 + $0x60] sm:$0xff]
  %v34 = vld [vmem:[%s1 + $0x68] sm:$0xff]
  %v35 = vld [vmem:[%s1 + $0x70] sm:$0xff]
  %v36 = vld [vmem:[%s1 + $0x78] sm:$0xff]
  %v37 = vpack.c.bf16 %v23, %v21
  %v38 = vpack.c.bf16 %v24, %v22
  %v39 = vpack.c.bf16 %v27, %v25
  %v40 = vpack.c.bf16 %v28, %v26
  %v41 = vpack.c.bf16 %v31, %v29
  %v42 = vpack.c.bf16 %v32, %v30
  %v43 = vpack.c.bf16 %v35, %v33
  %v44 = vpack.c.bf16 %v36, %v34
  %v45 = vld [vmem:[%s2] sm:$0x3]
  %v47 = vlaneseq
  %v48 = vshrl.u32 %v47, 7
  %v49 = vsub.s32 0, %v48
  %v50 = vrot.slane %v45, %v49
  %v51 = vlaneseq
  %v52 = vshrl.u32 %v51, 7
  %v53 = vsub.s32 1, %v52
  %v54 = vrot.slane %v45, %v53
  %vm57 = vcmask 523264
  %v59 = vsel %vm57, %v19, 0
  %v62 = vsel %vm57, %v20, 0
  %64 = vmatprep.subr.bf16.mxu0 0
  %65 = vmatpush1.bf16.msra.mxu0 0
  %66 = vmatprep.subr.bf16.mxu0 0
  %67 = vmatpush1.bf16.msra.mxu0 0
  %68 = vmatprep.subr.bf16.mxu0 0
  %69 = vmatpush1.bf16.msra.mxu0 0
  %70 = vmatprep.subr.bf16.mxu0 0
  %71 = vmatpush1.bf16.msra.mxu0 0
  %72 = vmatprep.subr.bf16.mxu0 %v44
  %73 = vmatpush1.bf16.msra.mxu0 %v43
  %74 = vmatprep.subr.bf16.mxu0 %v42
  %75 = vmatpush1.bf16.msra.mxu0 %v41
  %76 = vmatprep.subr.bf16.mxu0 %v40
  %77 = vmatpush1.bf16.msra.mxu0 %v39
  %78 = vmatprep.subr.bf16.mxu0 %v38
  %79 = vmatpush1.bf16.msra.mxu0 %v37
  %80 = vmatprep.subr.bf16.mxu0 0
  %81 = vmatpush2.bf16.msra.mxu0 0
  %82 = vmatprep.subr.bf16.mxu0 0
  %83 = vmatpush2.bf16.msra.mxu0 0
  %84 = vmatprep.subr.bf16.mxu0 0
  %85 = vmatpush2.bf16.msra.mxu0 0
  %86 = vmatprep.subr.bf16.mxu0 0
  %87 = vmatpush2.bf16.msra.mxu0 0
  %88 = vmatprep.subr.bf16.mxu0 0
  %89 = vmatpush2.bf16.msra.mxu0 0
  %90 = vmatprep.subr.bf16.mxu0 0
  %91 = vmatpush2.bf16.msra.mxu0 0
  %92 = vmatprep.subr.bf16.mxu0 0
  %93 = vmatpush2.bf16.msra.mxu0 0
  %94 = vmatprep.subr.bf16.mxu0 0
  %95 = vmatpush2.bf16.msra.mxu0 0
  %96 = vmatprep.mubr.bf16.mxu0 0
  %97 = vmatmul.mubr.bf16.gmra.mxu0 %v59
  %v98 = vpop.f32.mrf.mxu0
  %v99 = vadd.f32 %v50, %v98
  %v100 = vpop.f32.mrf.mxu0
  %v101 = vadd.f32 %v54, %v100
  %v102 = vpop.f32.mrf.mxu0
  %v103 = vadd.f32 %v50, %v102
  %v104 = vpop.f32.mrf.mxu0
  %v105 = vadd.f32 %v54, %v104
  %106 = vmatprep.mubr.bf16.mxu0 0
  %107 = vmatmul.mubr.bf16.gmra.mxu0 %v62
  %v108 = vpop.f32.mrf.mxu0
  %v109 = vadd.f32 %v50, %v108
  %v110 = vpop.f32.mrf.mxu0
  %v111 = vadd.f32 %v54, %v110
  %v112 = vpop.f32.mrf.mxu0
  %v113 = vadd.f32 %v50, %v112
  %v114 = vpop.f32.mrf.mxu0
  %v115 = vadd.f32 %v54, %v114
  %116 = vdwg.mxu0
  %117 = vst [vmem:[%s3] sm:$0xff] %v99
  %118 = vst.msk [vmem:[%s3 + $0x8] sm:$0xff] %vm57, %v101
  %119 = vst [vmem:[%s3 + $0x10] sm:$0xff] %v103
  %120 = vst.msk [vmem:[%s3 + $0x18] sm:$0xff] %vm57, %v105
  %121 = vst [vmem:[%s3 + $0x20] sm:$0xff] %v109
  %122 = vst.msk [vmem:[%s3 + $0x28] sm:$0xff] %vm57, %v111
  %123 = vst [vmem:[%s3 + $0x30] sm:$0xff] %v113
  %124 = vst.msk [vmem:[%s3 + $0x38] sm:$0xff] %vm57, %v115
  // Predicated region
  $region14: #{completion_transformer_forward.42} parent=0 // pred_check
    _
  $region15: #{completion_transformer_forward.42} parent=0 // pred_check_branch
    %126 = sbr.rel (0) target = $region17
  $region16: #{completion_transformer_forward.42} parent=0 // pred_region
    _
  $region17: #{completion_transformer_forward.42} parent=0 // pred_fallthru
    _
  // Predicated region
  $region18: #{completion_transformer_forward.42} parent=0 // pred_check
    _
  $region19: #{completion_transformer_forward.42} parent=0 // pred_check_branch
    %128 = sbr.rel (0) target = $region21
  $region20: #{completion_transformer_forward.42} parent=0 // pred_region
    _
  $region21: #{completion_transformer_forward.42} parent=0 // pred_fallthru
    _

// kernel: completion_transformer_forward.39
$region0: #{completion_transformer_forward.39}
  #allocation0 [shape = 'u32[]', space=smem, size = 0x4, offset = 0x4, fixed_abs, tag = 'smem constant byte address 0x4 - core index']
  #allocation1 [shape = 'u32[144,128]{1,0:T(1,128)}', space=vmem, size = 0x12000, scoped, tag = 'internal scratch']
  %s0 = inlined_call_operand.vmem [shape: f32[32,8], index: 0, kind: input, shape index: {}]
  %s1 = inlined_call_operand.vmem [shape: f32[8,64], index: 1, kind: input, shape index: {}]
  %s2 = inlined_call_operand.vmem [shape: f32[1,64], index: 2, kind: input, shape index: {}]
  %s3 = inlined_call_operand.vmem [shape: f32[1,64], index: 3, kind: input, shape index: {}]
  %s4 = inlined_call_operand.vmem [shape: f32[1,64], index: 4, kind: input, shape index: {}]
  %s5 = inlined_call_operand.vmem [shape: f32[32,64], index: 5, kind: output, shape index: {}]
  %s6 = sld [smem:[#allocation0]]
  $region30: #{completion_transformer_forward.39} parent=0
    _
  %s8 = ssub.s32 1, %s6
  %s9 = scalar_select 0, %s8, %s6
  // Predicated region
  $region2: #{completion_transformer_forward.39} parent=0 // pred_check
    _
  $region3: #{completion_transformer_forward.39} parent=0 // pred_check_branch
    %11 = sbr.rel (0) target = $region5
  $region4: #{completion_transformer_forward.39} parent=0 // pred_region
    _
  $region5: #{completion_transformer_forward.39} parent=0 // pred_fallthru
    _
  // Predicated region
  $region6: #{completion_transformer_forward.39} parent=0 // pred_check
    _
  $region7: #{completion_transformer_forward.39} parent=0 // pred_check_branch
    %13 = sbr.rel (0) target = $region9
  $region8: #{completion_transformer_forward.39} parent=0 // pred_region
    _
  $region9: #{completion_transformer_forward.39} parent=0 // pred_fallthru
    _
  // Predicated region
  $region10: #{completion_transformer_forward.39} parent=0 // pred_check
    _
  $region11: #{completion_transformer_forward.39} parent=0 // pred_check_branch
    %15 = sbr.rel (0) target = $region13
  $region12: #{completion_transformer_forward.39} parent=0 // pred_region
    _
  $region13: #{completion_transformer_forward.39} parent=0 // pred_fallthru
    _
  // Predicated region
  $region14: #{completion_transformer_forward.39} parent=0 // pred_check
    _
  $region15: #{completion_transformer_forward.39} parent=0 // pred_check_branch
    %17 = sbr.rel (0) target = $region17
  $region16: #{completion_transformer_forward.39} parent=0 // pred_region
    _
  $region17: #{completion_transformer_forward.39} parent=0 // pred_fallthru
    _
  // Predicated region
  $region18: #{completion_transformer_forward.39} parent=0 // pred_check
    _
  $region19: #{completion_transformer_forward.39} parent=0 // pred_check_branch
    %19 = sbr.rel (0) target = $region21
  $region20: #{completion_transformer_forward.39} parent=0 // pred_region
    _
  $region21: #{completion_transformer_forward.39} parent=0 // pred_fallthru
    _
  %v21 = vld [vmem:[%s0] sm:$0xff]
  %v22 = vld [vmem:[%s0 + $0x8] sm:$0xff]
  %v23 = vld [vmem:[%s0 + $0x10] sm:$0xff]
  %v24 = vld [vmem:[%s0 + $0x18] sm:$0xff]
  %v25 = vpack.c.bf16 %v22, %v21
  %v26 = vpack.c.bf16 %v24, %v23
  %v27 = vld [vmem:[%s1] sm:$0xff]
  %v28 = vpack.c.bf16 %v27, %v27
  %v29 = vld [vmem:[%s2] sm:$0x1]
  %v31 = vlaneseq
  %v32 = vshrl.u32 %v31, 7
  %v33 = vsub.s32 0, %v32
  %v34 = vrot.slane %v29, %v33
  %vm36 = vcmask 64512
  %v38 = vsel %vm36, %v25, 0
  %v41 = vsel %vm36, %v26, 0
  %vm43 = vcmask 1043456
  %v45 = vsel %vm43, %v28, 0
  %47 = vmatprep.subr.bf16.mxu0 0
  %48 = vmatpush1.bf16.msra.mxu0 0
  %49 = vmatprep.subr.bf16.mxu0 0
  %50 = vmatpush1.bf16.msra.mxu0 0
  %51 = vmatprep.subr.bf16.mxu0 0
  %52 = vmatpush1.bf16.msra.mxu0 0
  %53 = vmatprep.subr.bf16.mxu0 0
  %54 = vmatpush1.bf16.msra.mxu0 0
  %55 = vmatprep.subr.bf16.mxu0 0
  %56 = vmatpush1.bf16.msra.mxu0 0
  %57 = vmatprep.subr.bf16.mxu0 0
  %58 = vmatpush1.bf16.msra.mxu0 0
  %59 = vmatprep.subr.bf16.mxu0 0
  %60 = vmatpush1.bf16.msra.mxu0 0
  %61 = vmatprep.subr.bf16.mxu0 0
  %62 = vmatpush1.bf16.msra.mxu0 %v45
  %63 = vmatprep.subr.bf16.mxu0 0
  %64 = vmatpush2.bf16.msra.mxu0 0
  %65 = vmatprep.subr.bf16.mxu0 0
  %66 = vmatpush2.bf16.msra.mxu0 0
  %67 = vmatprep.subr.bf16.mxu0 0
  %68 = vmatpush2.bf16.msra.mxu0 0
  %69 = vmatprep.subr.bf16.mxu0 0
  %70 = vmatpush2.bf16.msra.mxu0 0
  %71 = vmatprep.subr.bf16.mxu0 0
  %72 = vmatpush2.bf16.msra.mxu0 0
  %73 = vmatprep.subr.bf16.mxu0 0
  %74 = vmatpush2.bf16.msra.mxu0 0
  %75 = vmatprep.subr.bf16.mxu0 0
  %76 = vmatpush2.bf16.msra.mxu0 0
  %77 = vmatprep.subr.bf16.mxu0 0
  %78 = vmatpush2.bf16.msra.mxu0 0
  %79 = vmatprep.mubr.bf16.mxu0 0
  %80 = vmatmul.mubr.bf16.gmra.mxu0 %v38
  %v81 = vpop.f32.mrf.mxu0
  %v82 = vadd.f32 %v34, %v81
  %v83 = vpop.f32.mrf.mxu0
  %v84 = vpop.f32.mrf.mxu0
  %v85 = vadd.f32 %v34, %v84
  %v86 = vpop.f32.mrf.mxu0
  %87 = vmatprep.mubr.bf16.mxu0 0
  %88 = vmatmul.mubr.bf16.gmra.mxu0 %v41
  %v89 = vpop.f32.mrf.mxu0
  %v90 = vadd.f32 %v34, %v89
  %v91 = vpop.f32.mrf.mxu0
  %v92 = vpop.f32.mrf.mxu0
  %v93 = vadd.f32 %v34, %v92
  %v94 = vpop.f32.mrf.mxu0
  %95 = vdwg.mxu0
  %vm96 = vcmp.ge.f32.partialorder %v82, 0.0
  %vm97 = vcmp.ge.f32.partialorder %v85, 0.0
  %vm98 = vcmp.ge.f32.partialorder %v90, 0.0
  %vm99 = vcmp.ge.f32.partialorder %v93, 0.0
  %v100 = vmul.f32 %v82, 0.01
  %v101 = vmul.f32 %v85, 0.01
  %v102 = vmul.f32 %v90, 0.01
  %v103 = vmul.f32 %v93, 0.01
  %v104 = vsel %vm96, %v82, %v100
  %v105 = vsel %vm97, %v85, %v101
  %v106 = vsel %vm98, %v90, %v102
  %v107 = vsel %vm99, %v93, %v103
  %vm108 = vcmask 523264
  %v109 = vsel %vm108, %v104, 0.0
  %110 = vadd.xlane.f32.xlu0 %v109
  %v111 = vpop.xlane.xlu0 %110
  %v112 = vsel %vm108, %v105, 0.0
  %113 = vadd.xlane.f32.xlu0 %v112
  %v114 = vpop.xlane.xlu0 %113
  %v115 = vsel %vm108, %v106, 0.0
  %116 = vadd.xlane.f32.xlu0 %v115
  %v117 = vpop.xlane.xlu0 %116
  %v118 = vsel %vm108, %v107, 0.0
  %119 = vadd.xlane.f32.xlu0 %v118
  %v120 = vpop.xlane.xlu0 %119
  %v121 = vrcp.pop 64.0
  %v122 = vmul.f32 %v111, %v121
  %v123 = vmul.f32 %v114, %v121
  %v124 = vmul.f32 %v117, %v121
  %v125 = vmul.f32 %v120, %v121
  %v126 = vsub.f32 %v104, %v122
  %v127 = vsub.f32 %v105, %v123
  %v128 = vsub.f32 %v106, %v124
  %v129 = vsub.f32 %v107, %v125
  %v130 = vmul.f32 %v126, %v126
  %v131 = vmul.f32 %v127, %v127
  %v132 = vmul.f32 %v128, %v128
  %v133 = vmul.f32 %v129, %v129
  %v134 = vsel %vm108, %v130, 0.0
  %135 = vadd.xlane.f32.xlu0 %v134
  %v136 = vpop.xlane.xlu0 %135
  %v137 = vsel %vm108, %v131, 0.0
  %138 = vadd.xlane.f32.xlu0 %v137
  %v139 = vpop.xlane.xlu0 %138
  %v140 = vsel %vm108, %v132, 0.0
  %141 = vadd.xlane.f32.xlu0 %v140
  %v142 = vpop.xlane.xlu0 %141
  %v143 = vsel %vm108, %v133, 0.0
  %144 = vadd.xlane.f32.xlu0 %v143
  %v145 = vpop.xlane.xlu0 %144
  %v146 = vmul.f32 %v136, %v121
  %v147 = vmul.f32 %v139, %v121
  %v148 = vmul.f32 %v142, %v121
  %v149 = vmul.f32 %v145, %v121
  %v150 = vadd.f32 %v146, 1e-05
  %v151 = vadd.f32 %v147, 1e-05
  %v152 = vadd.f32 %v148, 1e-05
  %v153 = vadd.f32 %v149, 1e-05
  %v154 = vrsqrt.pop %v150
  %v155 = vrsqrt.pop %v151
  %v156 = vrsqrt.pop %v152
  %v157 = vrsqrt.pop %v153
  %v158 = vmul.f32 %v126, %v154
  %v159 = vmul.f32 %v127, %v155
  %v160 = vmul.f32 %v128, %v156
  %v161 = vmul.f32 %v129, %v157
  %v162 = vld [vmem:[%s3] sm:$0x1]
  %v164 = vlaneseq
  %v165 = vshrl.u32 %v164, 7
  %v166 = vsub.s32 0, %v165
  %v167 = vrot.slane %v162, %v166
  %v169 = vmul.f32 %v158, %v167
  %v170 = vmul.f32 %v159, %v167
  %v171 = vmul.f32 %v160, %v167
  %v172 = vmul.f32 %v161, %v167
  %v173 = vld [vmem:[%s4] sm:$0x1]
  %v175 = vlaneseq
  %v176 = vshrl.u32 %v175, 7
  %v177 = vsub.s32 0, %v176
  %v178 = vrot.slane %v173, %v177
  %v180 = vadd.f32 %v169, %v178
  %v181 = vadd.f32 %v170, %v178
  %v182 = vadd.f32 %v171, %v178
  %v183 = vadd.f32 %v172, %v178
  %184 = vst.msk [vmem:[%s5] sm:$0xff] %vm108, %v180
  %185 = vst.msk [vmem:[%s5 + $0x8] sm:$0xff] %vm108, %v181
  %186 = vst.msk [vmem:[%s5 + $0x10] sm:$0xff] %vm108, %v182
  %187 = vst.msk [vmem:[%s5 + $0x18] sm:$0xff] %vm108, %v183
  // Predicated region
  $region22: #{completion_transformer_forward.39} parent=0 // pred_check
    _
  $region23: #{completion_transformer_forward.39} parent=0 // pred_check_branch
    %189 = sbr.rel (0) target = $region25
  $region24: #{completion_transformer_forward.39} parent=0 // pred_region
    _
  $region25: #{completion_transformer_forward.39} parent=0 // pred_fallthru
    _
  // Predicated region
  $region26: #{completion_transformer_forward.39} parent=0 // pred_check
    _
  $region27: #{completion_transformer_forward.39} parent=0 // pred_check_branch
    %191 = sbr.rel (0) target = $region29
  $region28: #{completion_transformer_forward.39} parent=0 // pred_region
    _
  $region29: #{completion_transformer_forward.39} parent=0 // pred_fallthru
    _

// kernel: completion_transformer_forward.40
$region0: #{completion_transformer_forward.40}
  #allocation0 [shape = 'u32[]', space=smem, size = 0x4, offset = 0x4, fixed_abs, tag = 'smem constant byte address 0x4 - core index']
  #allocation1 [shape = 'u32[144,128]{1,0:T(1,128)}', space=vmem, size = 0x12000, scoped, tag = 'internal scratch']
  %s0 = inlined_call_operand.vmem [shape: f32[32,64], index: 0, kind: input, shape index: {}]
  %s1 = inlined_call_operand.vmem [shape: f32[64,64], index: 1, kind: input, shape index: {}]
  %s2 = inlined_call_operand.vmem [shape: f32[1,64], index: 2, kind: input, shape index: {}]
  %s3 = inlined_call_operand.vmem [shape: f32[1,64], index: 3, kind: input, shape index: {}]
  %s4 = inlined_call_operand.vmem [shape: f32[1,64], index: 4, kind: input, shape index: {}]
  %s5 = inlined_call_operand.vmem [shape: f32[32,64], index: 5, kind: output, shape index: {}]
  %s6 = sld [smem:[#allocation0]]
  $region30: #{completion_transformer_forward.40} parent=0
    _
  %s8 = ssub.s32 1, %s6
  %s9 = scalar_select 0, %s8, %s6
  // Predicated region
  $region2: #{completion_transformer_forward.40} parent=0 // pred_check
    _
  $region3: #{completion_transformer_forward.40} parent=0 // pred_check_branch
    %11 = sbr.rel (0) target = $region5
  $region4: #{completion_transformer_forward.40} parent=0 // pred_region
    _
  $region5: #{completion_transformer_forward.40} parent=0 // pred_fallthru
    _
  // Predicated region
  $region6: #{completion_transformer_forward.40} parent=0 // pred_check
    _
  $region7: #{completion_transformer_forward.40} parent=0 // pred_check_branch
    %13 = sbr.rel (0) target = $region9
  $region8: #{completion_transformer_forward.40} parent=0 // pred_region
    _
  $region9: #{completion_transformer_forward.40} parent=0 // pred_fallthru
    _
  // Predicated region
  $region10: #{completion_transformer_forward.40} parent=0 // pred_check
    _
  $region11: #{completion_transformer_forward.40} parent=0 // pred_check_branch
    %15 = sbr.rel (0) target = $region13
  $region12: #{completion_transformer_forward.40} parent=0 // pred_region
    _
  $region13: #{completion_transformer_forward.40} parent=0 // pred_fallthru
    _
  // Predicated region
  $region14: #{completion_transformer_forward.40} parent=0 // pred_check
    _
  $region15: #{completion_transformer_forward.40} parent=0 // pred_check_branch
    %17 = sbr.rel (0) target = $region17
  $region16: #{completion_transformer_forward.40} parent=0 // pred_region
    _
  $region17: #{completion_transformer_forward.40} parent=0 // pred_fallthru
    _
  // Predicated region
  $region18: #{completion_transformer_forward.40} parent=0 // pred_check
    _
  $region19: #{completion_transformer_forward.40} parent=0 // pred_check_branch
    %19 = sbr.rel (0) target = $region21
  $region20: #{completion_transformer_forward.40} parent=0 // pred_region
    _
  $region21: #{completion_transformer_forward.40} parent=0 // pred_fallthru
    _
  %v21 = vld [vmem:[%s0] sm:$0xff]
  %v22 = vld [vmem:[%s0 + $0x8] sm:$0xff]
  %v23 = vld [vmem:[%s0 + $0x10] sm:$0xff]
  %v24 = vld [vmem:[%s0 + $0x18] sm:$0xff]
  %v25 = vpack.c.bf16 %v22, %v21
  %v26 = vpack.c.bf16 %v24, %v23
  %v27 = vld [vmem:[%s1] sm:$0xff]
  %v28 = vld [vmem:[%s1 + $0x8] sm:$0xff]
  %v29 = vld [vmem:[%s1 + $0x10] sm:$0xff]
  %v30 = vld [vmem:[%s1 + $0x18] sm:$0xff]
  %v31 = vld [vmem:[%s1 + $0x20] sm:$0xff]
  %v32 = vld [vmem:[%s1 + $0x28] sm:$0xff]
  %v33 = vld [vmem:[%s1 + $0x30] sm:$0xff]
  %v34 = vld [vmem:[%s1 + $0x38] sm:$0xff]
  %v35 = vpack.c.bf16 %v28, %v27
  %v36 = vpack.c.bf16 %v30, %v29
  %v37 = vpack.c.bf16 %v32, %v31
  %v38 = vpack.c.bf16 %v34, %v33
  %v39 = vld [vmem:[%s2] sm:$0x1]
  %v41 = vlaneseq
  %v42 = vshrl.u32 %v41, 7
  %v43 = vsub.s32 0, %v42
  %v44 = vrot.slane %v39, %v43
  %vm46 = vcmask 523264
  %v48 = vsel %vm46, %v25, 0
  %v51 = vsel %vm46, %v26, 0
  %53 = vmatprep.subr.bf16.mxu0 0
  %54 = vmatpush1.bf16.msra.mxu0 0
  %55 = vmatprep.subr.bf16.mxu0 0
  %56 = vmatpush1.bf16.msra.mxu0 0
  %57 = vmatprep.subr.bf16.mxu0 0
  %58 = vmatpush1.bf16.msra.mxu0 0
  %59 = vmatprep.subr.bf16.mxu0 0
  %60 = vmatpush1.bf16.msra.mxu0 0
  %61 = vmatprep.subr.bf16.mxu0 0
  %62 = vmatpush1.bf16.msra.mxu0 %v38
  %63 = vmatprep.subr.bf16.mxu0 0
  %64 = vmatpush1.bf16.msra.mxu0 %v37
  %65 = vmatprep.subr.bf16.mxu0 0
  %66 = vmatpush1.bf16.msra.mxu0 %v36
  %67 = vmatprep.subr.bf16.mxu0 0
  %68 = vmatpush1.bf16.msra.mxu0 %v35
  %69 = vmatprep.subr.bf16.mxu0 0
  %70 = vmatpush2.bf16.msra.mxu0 0
  %71 = vmatprep.subr.bf16.mxu0 0
  %72 = vmatpush2.bf16.msra.mxu0 0
  %73 = vmatprep.subr.bf16.mxu0 0
  %74 = vmatpush2.bf16.msra.mxu0 0
  %75 = vmatprep.subr.bf16.mxu0 0
  %76 = vmatpush2.bf16.msra.mxu0 0
  %77 = vmatprep.subr.bf16.mxu0 0
  %78 = vmatpush2.bf16.msra.mxu0 0
  %79 = vmatprep.subr.bf16.mxu0 0
  %80 = vmatpush2.bf16.msra.mxu0 0
  %81 = vmatprep.subr.bf16.mxu0 0
  %82 = vmatpush2.bf16.msra.mxu0 0
  %83 = vmatprep.subr.bf16.mxu0 0
  %84 = vmatpush2.bf16.msra.mxu0 0
  %85 = vmatprep.mubr.bf16.mxu0 0
  %86 = vmatmul.mubr.bf16.gmra.mxu0 %v48
  %v87 = vpop.f32.mrf.mxu0
  %v88 = vadd.f32 %v44, %v87
  %v89 = vpop.f32.mrf.mxu0
  %v90 = vpop.f32.mrf.mxu0
  %v91 = vadd.f32 %v44, %v90
  %v92 = vpop.f32.mrf.mxu0
  %93 = vmatprep.mubr.bf16.mxu0 0
  %94 = vmatmul.mubr.bf16.gmra.mxu0 %v51
  %v95 = vpop.f32.mrf.mxu0
  %v96 = vadd.f32 %v44, %v95
  %v97 = vpop.f32.mrf.mxu0
  %v98 = vpop.f32.mrf.mxu0
  %v99 = vadd.f32 %v44, %v98
  %v100 = vpop.f32.mrf.mxu0
  %101 = vdwg.mxu0
  %vm102 = vcmp.ge.f32.partialorder %v88, 0.0
  %vm103 = vcmp.ge.f32.partialorder %v91, 0.0
  %vm104 = vcmp.ge.f32.partialorder %v96, 0.0
  %vm105 = vcmp.ge.f32.partialorder %v99, 0.0
  %v106 = vmul.f32 %v88, 0.01
  %v107 = vmul.f32 %v91, 0.01
  %v108 = vmul.f32 %v96, 0.01
  %v109 = vmul.f32 %v99, 0.01
  %v110 = vsel %vm102, %v88, %v106
  %v111 = vsel %vm103, %v91, %v107
  %v112 = vsel %vm104, %v96, %v108
  %v113 = vsel %vm105, %v99, %v109
  %v114 = vsel %vm46, %v110, 0.0
  %115 = vadd.xlane.f32.xlu0 %v114
  %v116 = vpop.xlane.xlu0 %115
  %v117 = vsel %vm46, %v111, 0.0
  %118 = vadd.xlane.f32.xlu0 %v117
  %v119 = vpop.xlane.xlu0 %118
  %v120 = vsel %vm46, %v112, 0.0
  %121 = vadd.xlane.f32.xlu0 %v120
  %v122 = vpop.xlane.xlu0 %121
  %v123 = vsel %vm46, %v113, 0.0
  %124 = vadd.xlane.f32.xlu0 %v123
  %v125 = vpop.xlane.xlu0 %124
  %v126 = vrcp.pop 64.0
  %v127 = vmul.f32 %v116, %v126
  %v128 = vmul.f32 %v119, %v126
  %v129 = vmul.f32 %v122, %v126
  %v130 = vmul.f32 %v125, %v126
  %v131 = vsub.f32 %v110, %v127
  %v132 = vsub.f32 %v111, %v128
  %v133 = vsub.f32 %v112, %v129
  %v134 = vsub.f32 %v113, %v130
  %v135 = vmul.f32 %v131, %v131
  %v136 = vmul.f32 %v132, %v132
  %v137 = vmul.f32 %v133, %v133
  %v138 = vmul.f32 %v134, %v134
  %v139 = vsel %vm46, %v135, 0.0
  %140 = vadd.xlane.f32.xlu0 %v139
  %v141 = vpop.xlane.xlu0 %140
  %v142 = vsel %vm46, %v136, 0.0
  %143 = vadd.xlane.f32.xlu0 %v142
  %v144 = vpop.xlane.xlu0 %143
  %v145 = vsel %vm46, %v137, 0.0
  %146 = vadd.xlane.f32.xlu0 %v145
  %v147 = vpop.xlane.xlu0 %146
  %v148 = vsel %vm46, %v138, 0.0
  %149 = vadd.xlane.f32.xlu0 %v148
  %v150 = vpop.xlane.xlu0 %149
  %v151 = vmul.f32 %v141, %v126
  %v152 = vmul.f32 %v144, %v126
  %v153 = vmul.f32 %v147, %v126
  %v154 = vmul.f32 %v150, %v126
  %v155 = vadd.f32 %v151, 1e-05
  %v156 = vadd.f32 %v152, 1e-05
  %v157 = vadd.f32 %v153, 1e-05
  %v158 = vadd.f32 %v154, 1e-05
  %v159 = vrsqrt.pop %v155
  %v160 = vrsqrt.pop %v156
  %v161 = vrsqrt.pop %v157
  %v162 = vrsqrt.pop %v158
  %v163 = vmul.f32 %v131, %v159
  %v164 = vmul.f32 %v132, %v160
  %v165 = vmul.f32 %v133, %v161
  %v166 = vmul.f32 %v134, %v162
  %v167 = vld [vmem:[%s3] sm:$0x1]
  %v169 = vlaneseq
  %v170 = vshrl.u32 %v169, 7
  %v171 = vsub.s32 0, %v170
  %v172 = vrot.slane %v167, %v171
  %v174 = vmul.f32 %v163, %v172
  %v175 = vmul.f32 %v164, %v172
  %v176 = vmul.f32 %v165, %v172
  %v177 = vmul.f32 %v166, %v172
  %v178 = vld [vmem:[%s4] sm:$0x1]
  %v180 = vlaneseq
  %v181 = vshrl.u32 %v180, 7
  %v182 = vsub.s32 0, %v181
  %v183 = vrot.slane %v178, %v182
  %v185 = vadd.f32 %v174, %v183
  %v186 = vadd.f32 %v175, %v183
  %v187 = vadd.f32 %v176, %v183
  %v188 = vadd.f32 %v177, %v183
  %189 = vst.msk [vmem:[%s5] sm:$0xff] %vm46, %v185
  %190 = vst.msk [vmem:[%s5 + $0x8] sm:$0xff] %vm46, %v186
  %191 = vst.msk [vmem:[%s5 + $0x10] sm:$0xff] %vm46, %v187
  %192 = vst.msk [vmem:[%s5 + $0x18] sm:$0xff] %vm46, %v188
  // Predicated region
  $region22: #{completion_transformer_forward.40} parent=0 // pred_check
    _
  $region23: #{completion_transformer_forward.40} parent=0 // pred_check_branch
    %194 = sbr.rel (0) target = $region25
  $region24: #{completion_transformer_forward.40} parent=0 // pred_region
    _
  $region25: #{completion_transformer_forward.40} parent=0 // pred_fallthru
    _
  // Predicated region
  $region26: #{completion_transformer_forward.40} parent=0 // pred_check
    _
  $region27: #{completion_transformer_forward.40} parent=0 // pred_check_branch
    %196 = sbr.rel (0) target = $region29
  $region28: #{completion_transformer_forward.40} parent=0 // pred_region
    _
  $region29: #{completion_transformer_forward.40} parent=0 // pred_fallthru
    _

// kernel: completion_transformer_forward.45
$region0: #{completion_transformer_forward.45}
  #allocation0 [shape = 'u32[]', space=smem, size = 0x4, offset = 0x4, fixed_abs, tag = 'smem constant byte address 0x4 - core index']
  #allocation1 [shape = 'u32[144,128]{1,0:T(1,128)}', space=vmem, size = 0x12000, scoped, tag = 'internal scratch']
  %s0 = inlined_call_operand.vmem [shape: f32[32,64], index: 0, kind: input, shape index: {}]
  %s1 = inlined_call_operand.vmem [shape: f32[32,64], index: 1, kind: input, shape index: {}]
  %s2 = inlined_call_operand.vmem [shape: f32[1,64], index: 2, kind: input, shape index: {}]
  %s3 = inlined_call_operand.vmem [shape: f32[1,64], index: 3, kind: input, shape index: {}]
  %s4 = inlined_call_operand.vmem [shape: f32[32,64], index: 4, kind: output, shape index: {}]
  %s5 = sld [smem:[#allocation0]]
  $region26: #{completion_transformer_forward.45} parent=0
    _
  %s7 = ssub.s32 1, %s5
  %s8 = scalar_select 0, %s7, %s5
  // Predicated region
  $region2: #{completion_transformer_forward.45} parent=0 // pred_check
    _
  $region3: #{completion_transformer_forward.45} parent=0 // pred_check_branch
    %10 = sbr.rel (0) target = $region5
  $region4: #{completion_transformer_forward.45} parent=0 // pred_region
    _
  $region5: #{completion_transformer_forward.45} parent=0 // pred_fallthru
    _
  // Predicated region
  $region6: #{completion_transformer_forward.45} parent=0 // pred_check
    _
  $region7: #{completion_transformer_forward.45} parent=0 // pred_check_branch
    %12 = sbr.rel (0) target = $region9
  $region8: #{completion_transformer_forward.45} parent=0 // pred_region
    _
  $region9: #{completion_transformer_forward.45} parent=0 // pred_fallthru
    _
  // Predicated region
  $region10: #{completion_transformer_forward.45} parent=0 // pred_check
    _
  $region11: #{completion_transformer_forward.45} parent=0 // pred_check_branch
    %14 = sbr.rel (0) target = $region13
  $region12: #{completion_transformer_forward.45} parent=0 // pred_region
    _
  $region13: #{completion_transformer_forward.45} parent=0 // pred_fallthru
    _
  // Predicated region
  $region14: #{completion_transformer_forward.45} parent=0 // pred_check
    _
  $region15: #{completion_transformer_forward.45} parent=0 // pred_check_branch
    %16 = sbr.rel (0) target = $region17
  $region16: #{completion_transformer_forward.45} parent=0 // pred_region
    _
  $region17: #{completion_transformer_forward.45} parent=0 // pred_fallthru
    _
  %v17 = vld [vmem:[%s0] sm:$0xff]
  %v18 = vld [vmem:[%s0 + $0x8] sm:$0xff]
  %v19 = vld [vmem:[%s0 + $0x10] sm:$0xff]
  %v20 = vld [vmem:[%s0 + $0x18] sm:$0xff]
  %v21 = vld [vmem:[%s1] sm:$0xff]
  %v22 = vld [vmem:[%s1 + $0x8] sm:$0xff]
  %v23 = vld [vmem:[%s1 + $0x10] sm:$0xff]
  %v24 = vld [vmem:[%s1 + $0x18] sm:$0xff]
  %v25 = vadd.f32 %v17, %v21
  %v26 = vadd.f32 %v18, %v22
  %v27 = vadd.f32 %v19, %v23
  %v28 = vadd.f32 %v20, %v24
  %vm29 = vcmask 523264
  %v30 = vsel %vm29, %v25, 0.0
  %31 = vadd.xlane.f32.xlu0 %v30
  %v32 = vpop.xlane.xlu0 %31
  %v33 = vsel %vm29, %v26, 0.0
  %34 = vadd.xlane.f32.xlu0 %v33
  %v35 = vpop.xlane.xlu0 %34
  %v36 = vsel %vm29, %v27, 0.0
  %37 = vadd.xlane.f32.xlu0 %v36
  %v38 = vpop.xlane.xlu0 %37
  %v39 = vsel %vm29, %v28, 0.0
  %40 = vadd.xlane.f32.xlu0 %v39
  %v41 = vpop.xlane.xlu0 %40
  %v42 = vrcp.pop 64.0
  %v43 = vmul.f32 %v32, %v42
  %v44 = vmul.f32 %v35, %v42
  %v45 = vmul.f32 %v38, %v42
  %v46 = vmul.f32 %v41, %v42
  %v47 = vsub.f32 %v25, %v43
  %v48 = vsub.f32 %v26, %v44
  %v49 = vsub.f32 %v27, %v45
  %v50 = vsub.f32 %v28, %v46
  %v51 = vmul.f32 %v47, %v47
  %v52 = vmul.f32 %v48, %v48
  %v53 = vmul.f32 %v49, %v49
  %v54 = vmul.f32 %v50, %v50
  %v55 = vsel %vm29, %v51, 0.0
  %56 = vadd.xlane.f32.xlu0 %v55
  %v57 = vpop.xlane.xlu0 %56
  %v58 = vsel %vm29, %v52, 0.0
  %59 = vadd.xlane.f32.xlu0 %v58
  %v60 = vpop.xlane.xlu0 %59
  %v61 = vsel %vm29, %v53, 0.0
  %62 = vadd.xlane.f32.xlu0 %v61
  %v63 = vpop.xlane.xlu0 %62
  %v64 = vsel %vm29, %v54, 0.0
  %65 = vadd.xlane.f32.xlu0 %v64
  %v66 = vpop.xlane.xlu0 %65
  %v67 = vmul.f32 %v57, %v42
  %v68 = vmul.f32 %v60, %v42
  %v69 = vmul.f32 %v63, %v42
  %v70 = vmul.f32 %v66, %v42
  %v71 = vadd.f32 %v67, 1e-05
  %v72 = vadd.f32 %v68, 1e-05
  %v73 = vadd.f32 %v69, 1e-05
  %v74 = vadd.f32 %v70, 1e-05
  %v75 = vrsqrt.pop %v71
  %v76 = vrsqrt.pop %v72
  %v77 = vrsqrt.pop %v73
  %v78 = vrsqrt.pop %v74
  %v79 = vmul.f32 %v47, %v75
  %v80 = vmul.f32 %v48, %v76
  %v81 = vmul.f32 %v49, %v77
  %v82 = vmul.f32 %v50, %v78
  %v83 = vld [vmem:[%s2] sm:$0x1]
  %v85 = vlaneseq
  %v86 = vshrl.u32 %v85, 7
  %v87 = vsub.s32 0, %v86
  %v88 = vrot.slane %v83, %v87
  %v90 = vmul.f32 %v79, %v88
  %v91 = vmul.f32 %v80, %v88
  %v92 = vmul.f32 %v81, %v88
  %v93 = vmul.f32 %v82, %v88
  %v94 = vld [vmem:[%s3] sm:$0x1]
  %v96 = vlaneseq
  %v97 = vshrl.u32 %v96, 7
  %v98 = vsub.s32 0, %v97
  %v99 = vrot.slane %v94, %v98
  %v101 = vadd.f32 %v90, %v99
  %v102 = vadd.f32 %v91, %v99
  %v103 = vadd.f32 %v92, %v99
  %v104 = vadd.f32 %v93, %v99
  %105 = vst.msk [vmem:[%s4] sm:$0xff] %vm29, %v101
  %106 = vst.msk [vmem:[%s4 + $0x8] sm:$0xff] %vm29, %v102
  %107 = vst.msk [vmem:[%s4 + $0x10] sm:$0xff] %vm29, %v103
  %108 = vst.msk [vmem:[%s4 + $0x18] sm:$0xff] %vm29, %v104
  // Predicated region
  $region18: #{completion_transformer_forward.45} parent=0 // pred_check
    _
  $region19: #{completion_transformer_forward.45} parent=0 // pred_check_branch
    %110 = sbr.rel (0) target = $region21
  $region20: #{completion_transformer_forward.45} parent=0 // pred_region
    _
  $region21: #{completion_transformer_forward.45} parent=0 // pred_fallthru
    _
  // Predicated region
  $region22: #{completion_transformer_forward.45} parent=0 // pred_check
    _
  $region23: #{completion_transformer_forward.45} parent=0 // pred_check_branch
    %112 = sbr.rel (0) target = $region25
  $region24: #{completion_transformer_forward.45} parent=0 // pred_region
    _
  $region25: #{completion_transformer_forward.45} parent=0 // pred_fallthru
    _

// kernel: completion_transformer_forward.52
$region0: #{completion_transformer_forward.52}
  #allocation0 [shape = 'u32[]', space=smem, size = 0x4, offset = 0x4, fixed_abs, tag = 'smem constant byte address 0x4 - core index']
  #allocation1 [shape = 'u32[144,128]{1,0:T(1,128)}', space=vmem, size = 0x12000, scoped, tag = 'internal scratch']
  %s0 = inlined_call_operand.vmem [shape: f32[2,16,64], index: 0, kind: input, shape index: {}]
  %s1 = inlined_call_operand.vmem [shape: f32[2,64], index: 1, kind: output, shape index: {}]
  %s2 = sld [smem:[#allocation0]]
  $region22: #{completion_transformer_forward.52} parent=0
    _
  %s4 = ssub.s32 1, %s2
  %s5 = scalar_select 0, %s4, %s2
  // Predicated region
  $region2: #{completion_transformer_forward.52} parent=0 // pred_check
    _
  $region3: #{completion_transformer_forward.52} parent=0 // pred_check_branch
    %7 = sbr.rel (0) target = $region5
  $region4: #{completion_transformer_forward.52} parent=0 // pred_region
    _
  $region5: #{completion_transformer_forward.52} parent=0 // pred_fallthru
    _
  %v8 = vld [vmem:[%s0] sm:$0xff]
  %v9 = vld [vmem:[%s0 + $0x8] sm:$0xff]
  %v10 = vld [vmem:[%s0 + $0x10] sm:$0xff]
  %v11 = vld [vmem:[%s0 + $0x18] sm:$0xff]
  %vm12 = vcmask 523264
  %v13 = vsel %vm12, %v8, -inf
  %v14 = vsel %vm12, %v9, -inf
  %v15 = vmax.f32 %v13, %v14
  %v16 = vrot.slane %v15, 4
  %v17 = vmax.f32 %v15, %v16
  %v18 = vrot.slane %v17, 2
  %v19 = vmax.f32 %v17, %v18
  %v20 = vrot.slane %v19, 1
  %v21 = vmax.f32 %v19, %v20
  %v22 = vsel %vm12, %v10, -inf
  %v23 = vsel %vm12, %v11, -inf
  %v24 = vmax.f32 %v22, %v23
  %v25 = vrot.slane %v24, 4
  %v26 = vmax.f32 %v24, %v25
  %v27 = vrot.slane %v26, 2
  %v28 = vmax.f32 %v26, %v27
  %v29 = vrot.slane %v28, 1
  %v30 = vmax.f32 %v28, %v29
  %p31 = scmp.eq.s32.totalorder 0, 0
  // Predicated region
  $region6: #{completion_transformer_forward.52} parent=0 // pred_check
    %p32 = pneg %p31
  $region7: #{completion_transformer_forward.52} parent=0 // pred_check_branch
    %34 = sbr.rel (%p32) target = $region9
  $region8: #{completion_transformer_forward.52} parent=0 // pred_region
    %vm37 = vcmask 1041409
    %v38 = vsel %vm37, %v30, %v21
    %vm40 = vcmask 517120
    %41 = vst.msk [vmem:[%s1] sm:$0x3] %vm40, %v38
  $region9: #{completion_transformer_forward.52} parent=0 // pred_fallthru
    _
  %p42 = scmp.gt.s32.totalorder 0, 0
  // Predicated region
  $region10: #{completion_transformer_forward.52} parent=0 // pred_check
    %p43 = pneg %p42
  $region11: #{completion_transformer_forward.52} parent=0 // pred_check_branch
    %45 = sbr.rel (%p43) target = $region13
  $region12: #{completion_transformer_forward.52} parent=0 // pred_region
    %v46 = vld [vmem:[%s1] sm:$0x3]
    %vm49 = vcmask 1041409
    %v50 = vsel %vm49, %v30, %v21
    %v52 = vmax.f32 %v46, %v50
    %vm53 = vcmask 517120
    %54 = vst.msk [vmem:[%s1] sm:$0x3] %vm53, %v52
  $region13: #{completion_transformer_forward.52} parent=0 // pred_fallthru
    _
  // Predicated region
  $region14: #{completion_transformer_forward.52} parent=0 // pred_check
    _
  $region15: #{completion_transformer_forward.52} parent=0 // pred_check_branch
    %56 = sbr.rel (0) target = $region17
  $region16: #{completion_transformer_forward.52} parent=0 // pred_region
    _
  $region17: #{completion_transformer_forward.52} parent=0 // pred_fallthru
    _
  // Predicated region
  $region18: #{completion_transformer_forward.52} parent=0 // pred_check
    _
  $region19: #{completion_transformer_forward.52} parent=0 // pred_check_branch
    %58 = sbr.rel (0) target = $region21
  $region20: #{completion_transformer_forward.52} parent=0 // pred_region
    _
  $region21: #{completion_transformer_forward.52} parent=0 // pred_fallthru
    _

// kernel: completion_transformer_forward.46
$region0: #{completion_transformer_forward.46}
  #allocation0 [shape = 'u32[]', space=smem, size = 0x4, offset = 0x4, fixed_abs, tag = 'smem constant byte address 0x4 - core index']
  #allocation1 [shape = 'u32[144,128]{1,0:T(1,128)}', space=vmem, size = 0x12000, scoped, tag = 'internal scratch']
  %s0 = inlined_call_operand.vmem [shape: f32[32,64], index: 0, kind: input, shape index: {}]
  %s1 = inlined_call_operand.vmem [shape: f32[64,256], index: 1, kind: input, shape index: {}]
  %s2 = inlined_call_operand.vmem [shape: f32[1,256], index: 2, kind: input, shape index: {}]
  %s3 = inlined_call_operand.vmem [shape: f32[256,64], index: 3, kind: input, shape index: {}]
  %s4 = inlined_call_operand.vmem [shape: f32[1,64], index: 4, kind: input, shape index: {}]
  %s5 = inlined_call_operand.vmem [shape: f32[1,64], index: 5, kind: input, shape index: {}]
  %s6 = inlined_call_operand.vmem [shape: f32[1,64], index: 6, kind: input, shape index: {}]
  %s7 = inlined_call_operand.vmem [shape: f32[32,64], index: 7, kind: output, shape index: {}]
  %s8 = sld [smem:[#allocation0]]
  $region38: #{completion_transformer_forward.46} parent=0
    _
  %s10 = ssub.s32 1, %s8
  %s11 = scalar_select 0, %s10, %s8
  // Predicated region
  $region2: #{completion_transformer_forward.46} parent=0 // pred_check
    _
  $region3: #{completion_transformer_forward.46} parent=0 // pred_check_branch
    %13 = sbr.rel (0) target = $region5
  $region4: #{completion_transformer_forward.46} parent=0 // pred_region
    _
  $region5: #{completion_transformer_forward.46} parent=0 // pred_fallthru
    _
  // Predicated region
  $region6: #{completion_transformer_forward.46} parent=0 // pred_check
    _
  $region7: #{completion_transformer_forward.46} parent=0 // pred_check_branch
    %15 = sbr.rel (0) target = $region9
  $region8: #{completion_transformer_forward.46} parent=0 // pred_region
    _
  $region9: #{completion_transformer_forward.46} parent=0 // pred_fallthru
    _
  // Predicated region
  $region10: #{completion_transformer_forward.46} parent=0 // pred_check
    _
  $region11: #{completion_transformer_forward.46} parent=0 // pred_check_branch
    %17 = sbr.rel (0) target = $region13
  $region12: #{completion_transformer_forward.46} parent=0 // pred_region
    _
  $region13: #{completion_transformer_forward.46} parent=0 // pred_fallthru
    _
  // Predicated region
  $region14: #{completion_transformer_forward.46} parent=0 // pred_check
    _
  $region15: #{completion_transformer_forward.46} parent=0 // pred_check_branch
    %19 = sbr.rel (0) target = $region17
  $region16: #{completion_transformer_forward.46} parent=0 // pred_region
    _
  $region17: #{completion_transformer_forward.46} parent=0 // pred_fallthru
    _
  // Predicated region
  $region18: #{completion_transformer_forward.46} parent=0 // pred_check
    _
  $region19: #{completion_transformer_forward.46} parent=0 // pred_check_branch
    %21 = sbr.rel (0) target = $region21
  $region20: #{completion_transformer_forward.46} parent=0 // pred_region
    _
  $region21: #{completion_transformer_forward.46} parent=0 // pred_fallthru
    _
  // Predicated region
  $region22: #{completion_transformer_forward.46} parent=0 // pred_check
    _
  $region23: #{completion_transformer_forward.46} parent=0 // pred_check_branch
    %23 = sbr.rel (0) target = $region25
  $region24: #{completion_transformer_forward.46} parent=0 // pred_region
    _
  $region25: #{completion_transformer_forward.46} parent=0 // pred_fallthru
    _
  // Predicated region
  $region26: #{completion_transformer_forward.46} parent=0 // pred_check
    _
  $region27: #{completion_transformer_forward.46} parent=0 // pred_check_branch
    %25 = sbr.rel (0) target = $region29
  $region28: #{completion_transformer_forward.46} parent=0 // pred_region
    _
  $region29: #{completion_transformer_forward.46} parent=0 // pred_fallthru
    _
  %v27 = vld [vmem:[%s0] sm:$0xff]
  %v28 = vld [vmem:[%s0 + $0x8] sm:$0xff]
  %v29 = vld [vmem:[%s0 + $0x10] sm:$0xff]
  %v30 = vld [vmem:[%s0 + $0x18] sm:$0xff]
  %v31 = vpack.c.bf16 %v28, %v27
  %v32 = vpack.c.bf16 %v30, %v29
  %v33 = vld [vmem:[%s1] sm:$0xff]
  %v34 = vld [vmem:[%s1 + $0x8] sm:$0xff]
  %v35 = vld [vmem:[%s1 + $0x10] sm:$0xff]
  %v36 = vld [vmem:[%s1 + $0x18] sm:$0xff]
  %v37 = vld [vmem:[%s1 + $0x20] sm:$0xff]
  %v38 = vld [vmem:[%s1 + $0x28] sm:$0xff]
  %v39 = vld [vmem:[%s1 + $0x30] sm:$0xff]
  %v40 = vld [vmem:[%s1 + $0x38] sm:$0xff]
  %v41 = vld [vmem:[%s1 + $0x40] sm:$0xff]
  %v42 = vld [vmem:[%s1 + $0x48] sm:$0xff]
  %v43 = vld [vmem:[%s1 + $0x50] sm:$0xff]
  %v44 = vld [vmem:[%s1 + $0x58] sm:$0xff]
  %v45 = vld [vmem:[%s1 + $0x60] sm:$0xff]
  %v46 = vld [vmem:[%s1 + $0x68] sm:$0xff]
  %v47 = vld [vmem:[%s1 + $0x70] sm:$0xff]
  %v48 = vld [vmem:[%s1 + $0x78] sm:$0xff]
  %v49 = vpack.c.bf16 %v35, %v33
  %v50 = vpack.c.bf16 %v36, %v34
  %v51 = vpack.c.bf16 %v39, %v37
  %v52 = vpack.c.bf16 %v40, %v38
  %v53 = vpack.c.bf16 %v43, %v41
  %v54 = vpack.c.bf16 %v44, %v42
  %v55 = vpack.c.bf16 %v47, %v45
  %v56 = vpack.c.bf16 %v48, %v46
  %v57 = vld [vmem:[%s2] sm:$0x3]
  %v59 = vlaneseq
  %v60 = vshrl.u32 %v59, 7
  %v61 = vsub.s32 0, %v60
  %v62 = vrot.slane %v57, %v61
  %v63 = vlaneseq
  %v64 = vshrl.u32 %v63, 7
  %v65 = vsub.s32 1, %v64
  %v66 = vrot.slane %v57, %v65
  %vm69 = vcmask 523264
  %v71 = vsel %vm69, %v31, 0
  %v74 = vsel %vm69, %v32, 0
  %76 = vmatprep.subr.bf16.mxu0 0
  %77 = vmatpush1.bf16.msra.mxu0 0
  %78 = vmatprep.subr.bf16.mxu0 0
  %79 = vmatpush1.bf16.msra.mxu0 0
  %80 = vmatprep.subr.bf16.mxu0 0
  %81 = vmatpush1.bf16.msra.mxu0 0
  %82 = vmatprep.subr.bf16.mxu0 0
  %83 = vmatpush1.bf16.msra.mxu0 0
  %84 = vmatprep.subr.bf16.mxu0 %v56
  %85 = vmatpush1.bf16.msra.mxu0 %v55
  %86 = vmatprep.subr.bf16.mxu0 %v54
  %87 = vmatpush1.bf16.msra.mxu0 %v53
  %88 = vmatprep.subr.bf16.mxu0 %v52
  %89 = vmatpush1.bf16.msra.mxu0 %v51
  %90 = vmatprep.subr.bf16.mxu0 %v50
  %91 = vmatpush1.bf16.msra.mxu0 %v49
  %92 = vmatprep.subr.bf16.mxu0 0
  %93 = vmatpush2.bf16.msra.mxu0 0
  %94 = vmatprep.subr.bf16.mxu0 0
  %95 = vmatpush2.bf16.msra.mxu0 0
  %96 = vmatprep.subr.bf16.mxu0 0
  %97 = vmatpush2.bf16.msra.mxu0 0
  %98 = vmatprep.subr.bf16.mxu0 0
  %99 = vmatpush2.bf16.msra.mxu0 0
  %100 = vmatprep.subr.bf16.mxu0 0
  %101 = vmatpush2.bf16.msra.mxu0 0
  %102 = vmatprep.subr.bf16.mxu0 0
  %103 = vmatpush2.bf16.msra.mxu0 0
  %104 = vmatprep.subr.bf16.mxu0 0
  %105 = vmatpush2.bf16.msra.mxu0 0
  %106 = vmatprep.subr.bf16.mxu0 0
  %107 = vmatpush2.bf16.msra.mxu0 0
  %108 = vmatprep.mubr.bf16.mxu0 0
  %109 = vmatmul.mubr.bf16.gmra.mxu0 %v71
  %v110 = vpop.f32.mrf.mxu0
  %v111 = vadd.f32 %v62, %v110
  %v112 = vpop.f32.mrf.mxu0
  %v113 = vadd.f32 %v66, %v112
  %v114 = vpop.f32.mrf.mxu0
  %v115 = vadd.f32 %v62, %v114
  %v116 = vpop.f32.mrf.mxu0
  %v117 = vadd.f32 %v66, %v116
  %118 = vmatprep.mubr.bf16.mxu0 0
  %119 = vmatmul.mubr.bf16.gmra.mxu0 %v74
  %v120 = vpop.f32.mrf.mxu0
  %v121 = vadd.f32 %v62, %v120
  %v122 = vpop.f32.mrf.mxu0
  %v123 = vadd.f32 %v66, %v122
  %v124 = vpop.f32.mrf.mxu0
  %v125 = vadd.f32 %v62, %v124
  %v126 = vpop.f32.mrf.mxu0
  %v127 = vadd.f32 %v66, %v126
  %128 = vdwg.mxu0
  %vm129 = vcmp.ge.f32.partialorder %v111, 0.0
  %vm130 = vcmp.ge.f32.partialorder %v113, 0.0
  %vm131 = vcmp.ge.f32.partialorder %v115, 0.0
  %vm132 = vcmp.ge.f32.partialorder %v117, 0.0
  %vm133 = vcmp.ge.f32.partialorder %v121, 0.0
  %vm134 = vcmp.ge.f32.partialorder %v123, 0.0
  %vm135 = vcmp.ge.f32.partialorder %v125, 0.0
  %vm136 = vcmp.ge.f32.partialorder %v127, 0.0
  %v137 = vmul.f32 %v111, 0.01
  %v138 = vmul.f32 %v113, 0.01
  %v139 = vmul.f32 %v115, 0.01
  %v140 = vmul.f32 %v117, 0.01
  %v141 = vmul.f32 %v121, 0.01
  %v142 = vmul.f32 %v123, 0.01
  %v143 = vmul.f32 %v125, 0.01
  %v144 = vmul.f32 %v127, 0.01
  %v145 = vsel %vm129, %v111, %v137
  %v146 = vsel %vm130, %v113, %v138
  %v147 = vsel %vm131, %v115, %v139
  %v148 = vsel %vm132, %v117, %v140
  %v149 = vsel %vm133, %v121, %v141
  %v150 = vsel %vm134, %v123, %v142
  %v151 = vsel %vm135, %v125, %v143
  %v152 = vsel %vm136, %v127, %v144
  %v153 = vpack.c.bf16 %v147, %v145
  %v154 = vpack.c.bf16 %v148, %v146
  %v155 = vpack.c.bf16 %v151, %v149
  %v156 = vpack.c.bf16 %v152, %v150
  %v157 = vld [vmem:[%s3] sm:$0xff]
  %v158 = vld [vmem:[%s3 + $0x8] sm:$0xff]
  %v159 = vld [vmem:[%s3 + $0x10] sm:$0xff]
  %v160 = vld [vmem:[%s3 + $0x18] sm:$0xff]
  %v161 = vld [vmem:[%s3 + $0x20] sm:$0xff]
  %v162 = vld [vmem:[%s3 + $0x28] sm:$0xff]
  %v163 = vld [vmem:[%s3 + $0x30] sm:$0xff]
  %v164 = vld [vmem:[%s3 + $0x38] sm:$0xff]
  %v165 = vld [vmem:[%s3 + $0x40] sm:$0xff]
  %v166 = vld [vmem:[%s3 + $0x48] sm:$0xff]
  %v167 = vld [vmem:[%s3 + $0x50] sm:$0xff]
  %v168 = vld [vmem:[%s3 + $0x58] sm:$0xff]
  %v169 = vld [vmem:[%s3 + $0x60] sm:$0xff]
  %v170 = vld [vmem:[%s3 + $0x68] sm:$0xff]
  %v171 = vld [vmem:[%s3 + $0x70] sm:$0xff]
  %v172 = vld [vmem:[%s3 + $0x78] sm:$0xff]
  %v173 = vld [vmem:[%s3 + $0x80] sm:$0xff]
  %v174 = vld [vmem:[%s3 + $0x88] sm:$0xff]
  %v175 = vld [vmem:[%s3 + $0x90] sm:$0xff]
  %v176 = vld [vmem:[%s3 + $0x98] sm:$0xff]
  %v177 = vld [vmem:[%s3 + $0xa0] sm:$0xff]
  %v178 = vld [vmem:[%s3 + $0xa8] sm:$0xff]
  %v179 = vld [vmem:[%s3 + $0xb0] sm:$0xff]
  %v180 = vld [vmem:[%s3 + $0xb8] sm:$0xff]
  %v181 = vld [vmem:[%s3 + $0xc0] sm:$0xff]
  %v182 = vld [vmem:[%s3 + $0xc8] sm:$0xff]
  %v183 = vld [vmem:[%s3 + $0xd0] sm:$0xff]
  %v184 = vld [vmem:[%s3 + $0xd8] sm:$0xff]
  %v185 = vld [vmem:[%s3 + $0xe0] sm:$0xff]
  %v186 = vld [vmem:[%s3 + $0xe8] sm:$0xff]
  %v187 = vld [vmem:[%s3 + $0xf0] sm:$0xff]
  %v188 = vld [vmem:[%s3 + $0xf8] sm:$0xff]
  %v189 = vpack.c.bf16 %v158, %v157
  %v190 = vpack.c.bf16 %v160, %v159
  %v191 = vpack.c.bf16 %v162, %v161
  %v192 = vpack.c.bf16 %v164, %v163
  %v193 = vpack.c.bf16 %v166, %v165
  %v194 = vpack.c.bf16 %v168, %v167
  %v195 = vpack.c.bf16 %v170, %v169
  %v196 = vpack.c.bf16 %v172, %v171
  %v197 = vpack.c.bf16 %v174, %v173
  %v198 = vpack.c.bf16 %v176, %v175
  %v199 = vpack.c.bf16 %v178, %v177
  %v200 = vpack.c.bf16 %v180, %v179
  %v201 = vpack.c.bf16 %v182, %v181
  %v202 = vpack.c.bf16 %v184, %v183
  %v203 = vpack.c.bf16 %v186, %v185
  %v204 = vpack.c.bf16 %v188, %v187
  %v205 = vld [vmem:[%s4] sm:$0x1]
  %v207 = vlaneseq
  %v208 = vshrl.u32 %v207, 7
  %v209 = vsub.s32 0, %v208
  %v210 = vrot.slane %v205, %v209
  %212 = vmatprep.subr.bf16.mxu0 0
  %213 = vmatpush1.bf16.msra.mxu0 %v196
  %214 = vmatprep.subr.bf16.mxu0 0
  %215 = vmatpush1.bf16.msra.mxu0 %v195
  %216 = vmatprep.subr.bf16.mxu0 0
  %217 = vmatpush1.bf16.msra.mxu0 %v194
  %218 = vmatprep.subr.bf16.mxu0 0
  %219 = vmatpush1.bf16.msra.mxu0 %v193
  %220 = vmatprep.subr.bf16.mxu0 0
  %221 = vmatpush1.bf16.msra.mxu0 %v192
  %222 = vmatprep.subr.bf16.mxu0 0
  %223 = vmatpush1.bf16.msra.mxu0 %v191
  %224 = vmatprep.subr.bf16.mxu0 0
  %225 = vmatpush1.bf16.msra.mxu0 %v190
  %226 = vmatprep.subr.bf16.mxu0 0
  %227 = vmatpush1.bf16.msra.mxu0 %v189
  %228 = vmatprep.subr.bf16.mxu0 0
  %229 = vmatpush2.bf16.msra.mxu0 %v204
  %230 = vmatprep.subr.bf16.mxu0 0
  %231 = vmatpush2.bf16.msra.mxu0 %v203
  %232 = vmatprep.subr.bf16.mxu0 0
  %233 = vmatpush2.bf16.msra.mxu0 %v202
  %234 = vmatprep.subr.bf16.mxu0 0
  %235 = vmatpush2.bf16.msra.mxu0 %v201
  %236 = vmatprep.subr.bf16.mxu0 0
  %237 = vmatpush2.bf16.msra.mxu0 %v200
  %238 = vmatprep.subr.bf16.mxu0 0
  %239 = vmatpush2.bf16.msra.mxu0 %v199
  %240 = vmatprep.subr.bf16.mxu0 0
  %241 = vmatpush2.bf16.msra.mxu0 %v198
  %242 = vmatprep.subr.bf16.mxu0 0
  %243 = vmatpush2.bf16.msra.mxu0 %v197
  %244 = vmatprep.mubr.bf16.mxu0 %v154
  %245 = vmatmul.mubr.bf16.gmra.mxu0 %v153
  %v246 = vpop.f32.mrf.mxu0
  %v247 = vadd.f32 %v210, %v246
  %v248 = vpop.f32.mrf.mxu0
  %v249 = vpop.f32.mrf.mxu0
  %v250 = vadd.f32 %v210, %v249
  %v251 = vpop.f32.mrf.mxu0
  %252 = vmatprep.mubr.bf16.mxu0 %v156
  %253 = vmatmul.mubr.bf16.gmra.mxu0 %v155
  %v254 = vpop.f32.mrf.mxu0
  %v255 = vadd.f32 %v210, %v254
  %v256 = vpop.f32.mrf.mxu0
  %v257 = vpop.f32.mrf.mxu0
  %v258 = vadd.f32 %v210, %v257
  %v259 = vpop.f32.mrf.mxu0
  %260 = vdwg.mxu0
  %v261 = vadd.f32 %v27, %v247
  %v262 = vadd.f32 %v28, %v250
  %v263 = vadd.f32 %v29, %v255
  %v264 = vadd.f32 %v30, %v258
  %v265 = vsel %vm69, %v261, 0.0
  %266 = vadd.xlane.f32.xlu0 %v265
  %v267 = vpop.xlane.xlu0 %266
  %v268 = vsel %vm69, %v262, 0.0
  %269 = vadd.xlane.f32.xlu0 %v268
  %v270 = vpop.xlane.xlu0 %269
  %v271 = vsel %vm69, %v263, 0.0
  %272 = vadd.xlane.f32.xlu0 %v271
  %v273 = vpop.xlane.xlu0 %272
  %v274 = vsel %vm69, %v264, 0.0
  %275 = vadd.xlane.f32.xlu0 %v274
  %v276 = vpop.xlane.xlu0 %275
  %v277 = vrcp.pop 64.0
  %v278 = vmul.f32 %v267, %v277
  %v279 = vmul.f32 %v270, %v277
  %v280 = vmul.f32 %v273, %v277
  %v281 = vmul.f32 %v276, %v277
  %v282 = vsub.f32 %v261, %v278
  %v283 = vsub.f32 %v262, %v279
  %v284 = vsub.f32 %v263, %v280
  %v285 = vsub.f32 %v264, %v281
  %v286 = vmul.f32 %v282, %v282
  %v287 = vmul.f32 %v283, %v283
  %v288 = vmul.f32 %v284, %v284
  %v289 = vmul.f32 %v285, %v285
  %v290 = vsel %vm69, %v286, 0.0
  %291 = vadd.xlane.f32.xlu0 %v290
  %v292 = vpop.xlane.xlu0 %291
  %v293 = vsel %vm69, %v287, 0.0
  %294 = vadd.xlane.f32.xlu0 %v293
  %v295 = vpop.xlane.xlu0 %294
  %v296 = vsel %vm69, %v288, 0.0
  %297 = vadd.xlane.f32.xlu0 %v296
  %v298 = vpop.xlane.xlu0 %297
  %v299 = vsel %vm69, %v289, 0.0
  %300 = vadd.xlane.f32.xlu0 %v299
  %v301 = vpop.xlane.xlu0 %300
  %v302 = vmul.f32 %v292, %v277
  %v303 = vmul.f32 %v295, %v277
  %v304 = vmul.f32 %v298, %v277
  %v305 = vmul.f32 %v301, %v277
  %v306 = vadd.f32 %v302, 1e-05
  %v307 = vadd.f32 %v303, 1e-05
  %v308 = vadd.f32 %v304, 1e-05
  %v309 = vadd.f32 %v305, 1e-05
  %v310 = vrsqrt.pop %v306
  %v311 = vrsqrt.pop %v307
  %v312 = vrsqrt.pop %v308
  %v313 = vrsqrt.pop %v309
  %v314 = vmul.f32 %v282, %v310
  %v315 = vmul.f32 %v283, %v311
  %v316 = vmul.f32 %v284, %v312
  %v317 = vmul.f32 %v285, %v313
  %v318 = vld [vmem:[%s5] sm:$0x1]
  %v320 = vlaneseq
  %v321 = vshrl.u32 %v320, 7
  %v322 = vsub.s32 0, %v321
  %v323 = vrot.slane %v318, %v322
  %v325 = vmul.f32 %v314, %v323
  %v326 = vmul.f32 %v315, %v323
  %v327 = vmul.f32 %v316, %v323
  %v328 = vmul.f32 %v317, %v323
  %v329 = vld [vmem:[%s6] sm:$0x1]
  %v331 = vlaneseq
  %v332 = vshrl.u32 %v331, 7
  %v333 = vsub.s32 0, %v332
  %v334 = vrot.slane %v329, %v333
  %v336 = vadd.f32 %v325, %v334
  %v337 = vadd.f32 %v326, %v334
  %v338 = vadd.f32 %v327, %v334
  %v339 = vadd.f32 %v328, %v334
  %340 = vst.msk [vmem:[%s7] sm:$0xff] %vm69, %v336
  %341 = vst.msk [vmem:[%s7 + $0x8] sm:$0xff] %vm69, %v337
  %342 = vst.msk [vmem:[%s7 + $0x10] sm:$0xff] %vm69, %v338
  %343 = vst.msk [vmem:[%s7 + $0x18] sm:$0xff] %vm69, %v339
  // Predicated region
  $region30: #{completion_transformer_forward.46} parent=0 // pred_check
    _
  $region31: #{completion_transformer_forward.46} parent=0 // pred_check_branch
    %345 = sbr.rel (0) target = $region33
  $region32: #{completion_transformer_forward.46} parent=0 // pred_region
    _
  $region33: #{completion_transformer_forward.46} parent=0 // pred_fallthru
    _
  // Predicated region
  $region34: #{completion_transformer_forward.46} parent=0 // pred_check
    _
  $region35: #{completion_transformer_forward.46} parent=0 // pred_check_branch
    %347 = sbr.rel (0) target = $region37
  $region36: #{completion_transformer_forward.46} parent=0 // pred_region
    _
  $region37: #{completion_transformer_forward.46} parent=0 // pred_fallthru
    _

// kernel: completion_transformer_forward.43
$region0: #{completion_transformer_forward.43}
  #allocation0 [shape = 'u32[]', space=smem, size = 0x4, offset = 0x4, fixed_abs, tag = 'smem constant byte address 0x4 - core index']
  #allocation1 [shape = 'u32[144,128]{1,0:T(1,128)}', space=vmem, size = 0x12000, scoped, tag = 'internal scratch']
  %s0 = inlined_call_operand.vmem [shape: f32[2,16,192], index: 0, kind: input, shape index: {}, may-alias: {0,1}]
  %s1 = inlined_call_operand.vmem [shape: f32[2,16,192], index: 1, kind: input, shape index: {}, may-alias: {0,1}]
  %s2 = inlined_call_operand.vmem [shape: f32[2,16,64], index: 2, kind: output, shape index: {}]
  %s3 = sld [smem:[#allocation0]]
  $region41: #{completion_transformer_forward.43} parent=0
    _
  %s5 = ssub.s32 1, %s3
  %s6 = scalar_select 0, %s5, %s3
  loop: start=0, step=1, limit=4
  $region2: #{completion_transformer_forward.43} parent=0 // loop_pre_header
    _
  $region3: #{completion_transformer_forward.43} parent=0 // loop_header
    %s8 = sphi 0, %s12
    %p9 = scmp.ge.s32.totalorder %s8, 4
    %s15 = sphi 0, %s27
    %s16 = sphi 0, %s23
    %s17 = sphi 0, %s15
    %s18 = sphi 0, %s16
    %s19 = sphi 0, %s17
    %s20 = sphi 0, %s18
    %s32 = sphi 0, %s34
    %s35 = sphi 0, %s32
    %s36 = sphi 0, %s35
    %s52 = sphi 0, %s36
    %s58 = sphi 0, %s60
    %s61 = sphi 0, %s58
    %s62 = sphi 0, %s61
    %s78 = sphi 0, %s62
    %s86 = sphi 0, %s88
    %s89 = sphi 0, %s86
    %s90 = sphi 0, %s89
    %s106 = sphi 0, %s90
  $region4: #{completion_transformer_forward.43} parent=0 // loop_header_branch
    %11 = sbr.rel (%p9) target = $region8
  $region5: #{completion_transformer_forward.43} parent=0 // loop_body
    %s13 = ssub.s32 %s8, 1
    %s14 = ssub.s32 %s8, 2
    %s21 = sadd.s32 1, %s16
    %p22 = scmp.ge.s32.totalorder %s21, 1
    %s23 = scalar_select %p22, 0, %s21
    %s24 = sadd.s32 1, %s15
    %s25 = scalar_select %p22, %s24, %s15
    %p26 = scmp.ge.s32.totalorder %s25, 2
    %s27 = scalar_select %p26, 0, %s25
    %s28 = ssub.s32 %s15, %s27
    %s29 = ssub.s32 %s16, %s23
    %s30 = sor.u32 %s28, %s29
    %p31 = scmp.eq.s32.totalorder %s30, 0
    %s33 = sadd.s32 %s32, 1
    %s34 = scalar_select %p31, %s32, %s33
    %p37 = pneg %p31
    %p38 = scmp.eq.s32.totalorder %s8, 1
    %p39 = por %p37, %p38
    %p40 = scmp.ne.s32.totalorder %s32, %s35
    %p41 = scmp.eq.s32.totalorder %s8, 0
    %p42 = por %p40, %p41
    %p43 = scmp.ne.s32.totalorder %s32, %s35
    %p44 = scmp.eq.s32.totalorder %s13, 1
    %p45 = por %p43, %p44
    %p46 = scmp.ne.s32.totalorder %s35, %s36
    %p47 = scmp.eq.s32.totalorder %s13, 0
    %p48 = por %p46, %p47
    %p49 = scmp.ne.s32.totalorder %s35, %s36
    %p50 = scmp.eq.s32.totalorder %s14, 1
    %p51 = por %p49, %p50
    %p53 = scmp.ne.s32.totalorder %s36, %s52
    %p54 = scmp.eq.s32.totalorder %s14, 0
    %p55 = por %p53, %p54
    %s56 = ssub.s32 %s15, %s27
    %p57 = scmp.eq.s32.totalorder %s56, 0
    %s59 = sadd.s32 %s58, 1
    %s60 = scalar_select %p57, %s58, %s59
    %p63 = pneg %p57
    %p64 = scmp.eq.s32.totalorder %s8, 1
    %p65 = por %p63, %p64
    %p66 = scmp.ne.s32.totalorder %s58, %s61
    %p67 = scmp.eq.s32.totalorder %s8, 0
    %p68 = por %p66, %p67
    %p69 = scmp.ne.s32.totalorder %s58, %s61
    %p70 = scmp.eq.s32.totalorder %s13, 1
    %p71 = por %p69, %p70
    %p72 = scmp.ne.s32.totalorder %s61, %s62
    %p73 = scmp.eq.s32.totalorder %s13, 0
    %p74 = por %p72, %p73
    %p75 = scmp.ne.s32.totalorder %s61, %s62
    %p76 = scmp.eq.s32.totalorder %s14, 1
    %p77 = por %p75, %p76
    %p79 = scmp.ne.s32.totalorder %s62, %s78
    %p80 = scmp.eq.s32.totalorder %s14, 0
    %p81 = por %p79, %p80
    %s82 = ssub.s32 %s15, %s27
    %s83 = ssub.s32 %s16, %s23
    %s84 = sor.u32 %s82, %s83
    %p85 = scmp.eq.s32.totalorder %s84, 0
    %s87 = sadd.s32 %s86, 1
    %s88 = scalar_select %p85, %s86, %s87
    %p91 = pneg %p85
    %p92 = scmp.eq.s32.totalorder %s8, 1
    %p93 = por %p91, %p92
    %p94 = scmp.ne.s32.totalorder %s86, %s89
    %p95 = scmp.eq.s32.totalorder %s8, 0
    %p96 = por %p94, %p95
    %p97 = scmp.ne.s32.totalorder %s86, %s89
    %p98 = scmp.eq.s32.totalorder %s13, 1
    %p99 = por %p97, %p98
    %p100 = scmp.ne.s32.totalorder %s89, %s90
    %p101 = scmp.eq.s32.totalorder %s13, 0
    %p102 = por %p100, %p101
    %p103 = scmp.ne.s32.totalorder %s89, %s90
    %p104 = scmp.eq.s32.totalorder %s14, 1
    %p105 = por %p103, %p104
    %p107 = scmp.ne.s32.totalorder %s90, %s106
    %p108 = scmp.eq.s32.totalorder %s14, 0
    %p109 = por %p107, %p108
    %p110 = scmp.le.s32.totalorder 1, %s8
    %p111 = scmp.lt.s32.totalorder %s8, 3
    %p112 = pnand %p110, %p111
    %p113 = pneg %p112
    // Predicated region
    $region9: #{completion_transformer_forward.43} parent=5 // pred_check
      _
    $region10: #{completion_transformer_forward.43} parent=5 // pred_check_branch
      %115 = sbr.rel (%p112) target = $region12
    $region11: #{completion_transformer_forward.43} parent=5 // pred_region
      %s116 = ssub.s32 %s8, 1
    $region12: #{completion_transformer_forward.43} parent=5 // pred_fallthru
      _
    %p117 = scmp.lt.s32.totalorder %s8, 2
    // Predicated region
    $region13: #{completion_transformer_forward.43} parent=5 // pred_check
      %p118 = pneg %p117
    $region14: #{completion_transformer_forward.43} parent=5 // pred_check_branch
      %120 = sbr.rel (%p118) target = $region16
    $region15: #{completion_transformer_forward.43} parent=5 // pred_region
      // Predicated region
      $region17: #{completion_transformer_forward.43} parent=15 // pred_check
        %p121 = pneg %p42
      $region18: #{completion_transformer_forward.43} parent=15 // pred_check_branch
        %123 = sbr.rel (%p121) target = $region20
      $region19: #{completion_transformer_forward.43} parent=15 // pred_region
        %s124 = smul.u32 2, %s16
        %p125 = scmp.lt.s32.totalorder %s15, 1
        %s126 = scalar_select %p125, %s15, 1
        %p127 = scmp.lt.s32.totalorder %s124, 1
        %s128 = scalar_select %p127, %s124, 1
        %s129 = smul.addr %s128, 2
        %s130 = smul.addr %s126, 4
        %s131 = sadd.s32 %s129, %s130
        %s132 = smul.addr %s131, 8
        %s133 = scalar_lea.vmem %s0, %s132
        %s134 = smul.u32 2, %s16
      $region20: #{completion_transformer_forward.43} parent=15 // pred_fallthru
        _
      // Predicated region
      $region21: #{completion_transformer_forward.43} parent=15 // pred_check
        %p135 = pneg %p68
      $region22: #{completion_transformer_forward.43} parent=15 // pred_check_branch
        %137 = sbr.rel (%p135) target = $region24
      $region23: #{completion_transformer_forward.43} parent=15 // pred_region
        %p138 = scmp.lt.s32.totalorder %s15, 1
        %s139 = scalar_select %p138, %s15, 1
        %s140 = smul.addr %s139, 4
        %s141 = smul.addr %s140, 8
        %s142 = scalar_lea.vmem %s1, %s141
      $region24: #{completion_transformer_forward.43} parent=15 // pred_fallthru
        _
    $region16: #{completion_transformer_forward.43} parent=5 // pred_fallthru
      _
    %p143 = scmp.le.s32.totalorder 1, %s8
    %p144 = scmp.lt.s32.totalorder %s8, 3
    %p145 = pnand %p143, %p144
    %p146 = pneg %p145
    // Predicated region
    $region25: #{completion_transformer_forward.43} parent=5 // pred_check
      _
    $region26: #{completion_transformer_forward.43} parent=5 // pred_check_branch
      %148 = sbr.rel (%p145) target = $region28
    $region27: #{completion_transformer_forward.43} parent=5 // pred_region
      %s149 = ssub.s32 %s8, 1
      %s150 = smul.u32 2, %s18
      %p151 = scmp.lt.s32.totalorder %s17, 1
      %s152 = scalar_select %p151, %s17, 1
      %p153 = scmp.lt.s32.totalorder %s150, 1
      %s154 = scalar_select %p153, %s150, 1
      %s155 = smul.addr %s154, 2
      %s156 = smul.addr %s152, 4
      %s157 = sadd.s32 %s155, %s156
      %s158 = smul.addr %s157, 8
      %s159 = scalar_lea.vmem %s0, %s158
      %p160 = pneg %p48
      %p161 = pneg %p45
      %p162 = scmp.lt.s32.totalorder %s17, 1
      %s163 = scalar_select %p162, %s17, 1
      %s164 = smul.addr %s163, 4
      %s165 = smul.addr %s164, 8
      %s166 = scalar_lea.vmem %s1, %s165
      %p167 = pneg %p74
      %p168 = pneg %p71
      %p169 = pneg %p102
      %p170 = pneg %p99
      %s171 = smul.u32 2, %s18
      %p172 = scmp.lt.s32.totalorder %s17, 1
      %s173 = scalar_select %p172, %s17, 1
      %p174 = scmp.lt.s32.totalorder %s171, 1
      %s175 = scalar_select %p174, %s171, 1
      %s176 = smul.addr %s173, 2
      %s177 = sadd.s32 %s175, %s176
      %s178 = smul.addr %s177, 8
      %s179 = scalar_lea.vmem %s2, %s178
      %s180 = smul.u32 2, %s18
      %p181 = scmp.lt.s32.totalorder %s17, 1
      %s182 = scalar_select %p181, %s17, 1
      %p183 = scmp.lt.s32.totalorder %s180, 1
      %s184 = scalar_select %p183, %s180, 1
      %s185 = smul.addr %s184, 2
      %s186 = smul.addr %s182, 4
      %s187 = sadd.s32 %s185, %s186
      %s188 = smul.addr %s187, 8
      %s189 = scalar_lea.vmem %s0, %s188
      %s190 = smul.u32 2, %s18
      %p191 = scmp.lt.s32.totalorder %s17, 1
      %s192 = scalar_select %p191, %s17, 1
      %s193 = smul.addr %s192, 4
      %s194 = smul.addr %s193, 8
      %s195 = scalar_lea.vmem %s1, %s194
      %s196 = smul.u32 2, %s18
      %p197 = scmp.lt.s32.totalorder %s17, 1
      %s198 = scalar_select %p197, %s17, 1
      %p199 = scmp.lt.s32.totalorder %s196, 1
      %s200 = scalar_select %p199, %s196, 1
      %s201 = smul.addr %s198, 2
      %s202 = sadd.s32 %s200, %s201
      %s203 = smul.addr %s202, 8
      %s204 = scalar_lea.vmem %s2, %s203
      %s205 = smul.u32 2, %s18
      %v207 = vld [vmem:[%s189] sm:$0xff]
      %v208 = vld [vmem:[%s189 + $0x10] sm:$0xff]
      %v209 = vld [vmem:[%s195] sm:$0xff]
      %v210 = vld [vmem:[%s195 + $0x8] sm:$0xff]
      %v211 = vld [vmem:[%s195 + $0x10] sm:$0xff]
      %v212 = vld [vmem:[%s195 + $0x18] sm:$0xff]
      %v213 = vpack.c.bf16 %v208, %v207
      %v214 = vpack.c.bf16 %v211, %v209
      %v215 = vpack.c.bf16 %v212, %v210
      %217 = vrot.lane.b32.xlu0 %v214, 64
      %v218 = vpop.permute.xlu0 %217
      %vm219 = vcmask 64512
      %v221 = vsel %vm219, %v213, 0
      %v224 = vsel %vm219, %v218, 0
      %226 = vmatprep.subr.bf16.mxu0 0
      %227 = vmatpush1.bf16.xpose.msra.mxu0 0
      %228 = vmatprep.subr.bf16.mxu0 0
      %229 = vmatpush1.bf16.xpose.msra.mxu0 0
      %230 = vmatprep.subr.bf16.mxu0 0
      %231 = vmatpush1.bf16.xpose.msra.mxu0 0
      %232 = vmatprep.subr.bf16.mxu0 0
      %233 = vmatpush1.bf16.xpose.msra.mxu0 0
      %234 = vmatprep.subr.bf16.mxu0 0
      %235 = vmatpush1.bf16.xpose.msra.mxu0 0
      %236 = vmatprep.subr.bf16.mxu0 0
      %237 = vmatpush1.bf16.xpose.msra.mxu0 0
      %238 = vmatprep.subr.bf16.mxu0 0
      %239 = vmatpush1.bf16.xpose.msra.mxu0 0
      %240 = vmatprep.subr.bf16.mxu0 0
      %241 = vmatpush1.bf16.xpose.msra.mxu0 %v224
      %242 = vmatprep.subr.bf16.mxu0 0
      %243 = vmatpush2.bf16.xpose.msra.mxu0 0
      %244 = vmatprep.subr.bf16.mxu0 0
      %245 = vmatpush2.bf16.xpose.msra.mxu0 0
      %246 = vmatprep.subr.bf16.mxu0 0
      %247 = vmatpush2.bf16.xpose.msra.mxu0 0
      %248 = vmatprep.subr.bf16.mxu0 0
      %249 = vmatpush2.bf16.xpose.msra.mxu0 0
      %250 = vmatprep.subr.bf16.mxu0 0
      %251 = vmatpush2.bf16.xpose.msra.mxu0 0
      %252 = vmatprep.subr.bf16.mxu0 0
      %253 = vmatpush2.bf16.xpose.msra.mxu0 0
      %254 = vmatprep.subr.bf16.mxu0 0
      %255 = vmatpush2.bf16.xpose.msra.mxu0 0
      %256 = vmatprep.subr.bf16.mxu0 0
      %257 = vmatpush2.bf16.xpose.msra.mxu0 0
      %258 = vmatprep.mubr.bf16.mxu0 0
      %259 = vmatmul.mubr.bf16.gmra.mxu0 %v221
      %v260 = vpop.f32.mrf.mxu0
      %v261 = vadd.f32 0.0, %v260
      %v262 = vpop.f32.mrf.mxu0
      %v263 = vpop.f32.mrf.mxu0
      %v264 = vadd.f32 0.0, %v263
      %v265 = vpop.f32.mrf.mxu0
      %266 = vdwg.mxu0
      %v267 = vmul.f32 %v261, 0.35355338
      %v268 = vmul.f32 %v264, 0.35355338
      %vm269 = vcmask 130048
      %v270 = vsel %vm269, %v267, -inf
      %271 = vmax.xlane.f32.xlu0 %v270
      %v272 = vpop.xlane.xlu0 %271
      %v273 = vsel %vm269, %v268, -inf
      %274 = vmax.xlane.f32.xlu0 %v273
      %v275 = vpop.xlane.xlu0 %274
      %v276 = vsub.f32 %v267, %v272
      %v277 = vsub.f32 %v268, %v275
      %v278 = vmul.f32 %v276, 1.442695
      %v279 = vpow.pop %v278
      %v280 = vmul.f32 %v277, 1.442695
      %v281 = vpow.pop %v280
      %v282 = vsel %vm269, %v279, 0.0
      %283 = vadd.xlane.f32.xlu0 %v282
      %v284 = vpop.xlane.xlu0 %283
      %v285 = vsel %vm269, %v281, 0.0
      %286 = vadd.xlane.f32.xlu0 %v285
      %v287 = vpop.xlane.xlu0 %286
      %v288 = vrcp.pop %v284
      %v289 = vrcp.pop %v287
      %v290 = vmul.f32 %v279, %v288
      %v291 = vmul.f32 %v281, %v289
      %v292 = vpack.c.bf16 %v291, %v290
      %v294 = vsel %vm269, %v292, 0
      %296 = vmatprep.subr.bf16.mxu0 0
      %297 = vmatpush1.bf16.msra.mxu0 0
      %298 = vmatprep.subr.bf16.mxu0 0
      %299 = vmatpush1.bf16.msra.mxu0 0
      %300 = vmatprep.subr.bf16.mxu0 0
      %301 = vmatpush1.bf16.msra.mxu0 0
      %302 = vmatprep.subr.bf16.mxu0 0
      %303 = vmatpush1.bf16.msra.mxu0 0
      %304 = vmatprep.subr.bf16.mxu0 0
      %305 = vmatpush1.bf16.msra.mxu0 0
      %306 = vmatprep.subr.bf16.mxu0 0
      %307 = vmatpush1.bf16.msra.mxu0 0
      %308 = vmatprep.subr.bf16.mxu0 0
      %309 = vmatpush1.bf16.msra.mxu0 0
      %310 = vmatprep.subr.bf16.mxu0 0
      %311 = vmatpush1.bf16.msra.mxu0 %v215
      %312 = vmatprep.subr.bf16.mxu0 0
      %313 = vmatpush2.bf16.msra.mxu0 0
      %314 = vmatprep.subr.bf16.mxu0 0
      %315 = vmatpush2.bf16.msra.mxu0 0
      %316 = vmatprep.subr.bf16.mxu0 0
      %317 = vmatpush2.bf16.msra.mxu0 0
      %318 = vmatprep.subr.bf16.mxu0 0
      %319 = vmatpush2.bf16.msra.mxu0 0
      %320 = vmatprep.subr.bf16.mxu0 0
      %321 = vmatpush2.bf16.msra.mxu0 0
      %322 = vmatprep.subr.bf16.mxu0 0
      %323 = vmatpush2.bf16.msra.mxu0 0
      %324 = vmatprep.subr.bf16.mxu0 0
      %325 = vmatpush2.bf16.msra.mxu0 0
      %326 = vmatprep.subr.bf16.mxu0 0
      %327 = vmatpush2.bf16.msra.mxu0 0
      %328 = vmatprep.mubr.bf16.mxu0 0
      %329 = vmatmul.mubr.bf16.gmra.mxu0 %v294
      %v330 = vpop.f32.mrf.mxu0
      %v331 = vadd.f32 0.0, %v330
      %v332 = vpop.f32.mrf.mxu0
      %v333 = vpop.f32.mrf.mxu0
      %v334 = vadd.f32 0.0, %v333
      %v335 = vpop.f32.mrf.mxu0
      %336 = vdwg.mxu0
      %338 = vrot.lane.b32.xlu0 %v213, 120
      %v339 = vpop.permute.xlu0 %338
      %340 = vrot.lane.b32.xlu0 %v214, 56
      %v341 = vpop.permute.xlu0 %340
      %v343 = vsel %vm219, %v339, 0
      %v346 = vsel %vm219, %v341, 0
      %348 = vmatprep.subr.bf16.mxu0 0
      %349 = vmatpush1.bf16.xpose.msra.mxu0 0
      %350 = vmatprep.subr.bf16.mxu0 0
      %351 = vmatpush1.bf16.xpose.msra.mxu0 0
      %352 = vmatprep.subr.bf16.mxu0 0
      %353 = vmatpush1.bf16.xpose.msra.mxu0 0
      %354 = vmatprep.subr.bf16.mxu0 0
      %355 = vmatpush1.bf16.xpose.msra.mxu0 0
      %356 = vmatprep.subr.bf16.mxu0 0
      %357 = vmatpush1.bf16.xpose.msra.mxu0 0
      %358 = vmatprep.subr.bf16.mxu0 0
      %359 = vmatpush1.bf16.xpose.msra.mxu0 0
      %360 = vmatprep.subr.bf16.mxu0 0
      %361 = vmatpush1.bf16.xpose.msra.mxu0 0
      %362 = vmatprep.subr.bf16.mxu0 0
      %363 = vmatpush1.bf16.xpose.msra.mxu0 %v346
      %364 = vmatprep.subr.bf16.mxu0 0
      %365 = vmatpush2.bf16.xpose.msra.mxu0 0
      %366 = vmatprep.subr.bf16.mxu0 0
      %367 = vmatpush2.bf16.xpose.msra.mxu0 0
      %368 = vmatprep.subr.bf16.mxu0 0
      %369 = vmatpush2.bf16.xpose.msra.mxu0 0
      %370 = vmatprep.subr.bf16.mxu0 0
      %371 = vmatpush2.bf16.xpose.msra.mxu0 0
      %372 = vmatprep.subr.bf16.mxu0 0
      %373 = vmatpush2.bf16.xpose.msra.mxu0 0
      %374 = vmatprep.subr.bf16.mxu0 0
      %375 = vmatpush2.bf16.xpose.msra.mxu0 0
      %376 = vmatprep.subr.bf16.mxu0 0
      %377 = vmatpush2.bf16.xpose.msra.mxu0 0
      %378 = vmatprep.subr.bf16.mxu0 0
      %379 = vmatpush2.bf16.xpose.msra.mxu0 0
      %380 = vmatprep.mubr.bf16.mxu0 0
      %381 = vmatmul.mubr.bf16.gmra.mxu0 %v343
      %v382 = vpop.f32.mrf.mxu0
      %v383 = vadd.f32 0.0, %v382
      %v384 = vpop.f32.mrf.mxu0
      %v385 = vpop.f32.mrf.mxu0
      %v386 = vadd.f32 0.0, %v385
      %v387 = vpop.f32.mrf.mxu0
      %388 = vdwg.mxu0
      %v389 = vmul.f32 %v383, 0.35355338
      %v390 = vmul.f32 %v386, 0.35355338
      %v391 = vsel %vm269, %v389, -inf
      %392 = vmax.xlane.f32.xlu0 %v391
      %v393 = vpop.xlane.xlu0 %392
      %v394 = vsel %vm269, %v390, -inf
      %395 = vmax.xlane.f32.xlu0 %v394
      %v396 = vpop.xlane.xlu0 %395
      %v397 = vsub.f32 %v389, %v393
      %v398 = vsub.f32 %v390, %v396
      %v399 = vmul.f32 %v397, 1.442695
      %v400 = vpow.pop %v399
      %v401 = vmul.f32 %v398, 1.442695
      %v402 = vpow.pop %v401
      %v403 = vsel %vm269, %v400, 0.0
      %404 = vadd.xlane.f32.xlu0 %v403
      %v405 = vpop.xlane.xlu0 %404
      %v406 = vsel %vm269, %v402, 0.0
      %407 = vadd.xlane.f32.xlu0 %v406
      %v408 = vpop.xlane.xlu0 %407
      %v409 = vrcp.pop %v405
      %v410 = vrcp.pop %v408
      %v411 = vmul.f32 %v400, %v409
      %v412 = vmul.f32 %v402, %v410
      %v413 = vpack.c.bf16 %v412, %v411
      %415 = vrot.lane.b32.xlu0 %v215, 120
      %v416 = vpop.permute.xlu0 %415
      %v419 = vsel %vm269, %v413, 0
      %421 = vmatprep.subr.bf16.mxu0 0
      %422 = vmatpush1.bf16.msra.mxu0 0
      %423 = vmatprep.subr.bf16.mxu0 0
      %424 = vmatpush1.bf16.msra.mxu0 0
      %425 = vmatprep.subr.bf16.mxu0 0
      %426 = vmatpush1.bf16.msra.mxu0 0
      %427 = vmatprep.subr.bf16.mxu0 0
      %428 = vmatpush1.bf16.msra.mxu0 0
      %429 = vmatprep.subr.bf16.mxu0 0
      %430 = vmatpush1.bf16.msra.mxu0 0
      %431 = vmatprep.subr.bf16.mxu0 0
      %432 = vmatpush1.bf16.msra.mxu0 0
      %433 = vmatprep.subr.bf16.mxu0 0
      %434 = vmatpush1.bf16.msra.mxu0 0
      %435 = vmatprep.subr.bf16.mxu0 0
      %436 = vmatpush1.bf16.msra.mxu0 %v416
      %437 = vmatprep.subr.bf16.mxu0 0
      %438 = vmatpush2.bf16.msra.mxu0 0
      %439 = vmatprep.subr.bf16.mxu0 0
      %440 = vmatpush2.bf16.msra.mxu0 0
      %441 = vmatprep.subr.bf16.mxu0 0
      %442 = vmatpush2.bf16.msra.mxu0 0
      %443 = vmatprep.subr.bf16.mxu0 0
      %444 = vmatpush2.bf16.msra.mxu0 0
      %445 = vmatprep.subr.bf16.mxu0 0
      %446 = vmatpush2.bf16.msra.mxu0 0
      %447 = vmatprep.subr.bf16.mxu0 0
      %448 = vmatpush2.bf16.msra.mxu0 0
      %449 = vmatprep.subr.bf16.mxu0 0
      %450 = vmatpush2.bf16.msra.mxu0 0
      %451 = vmatprep.subr.bf16.mxu0 0
      %452 = vmatpush2.bf16.msra.mxu0 0
      %453 = vmatprep.mubr.bf16.mxu0 0
      %454 = vmatmul.mubr.bf16.gmra.mxu0 %v419
      %v455 = vpop.f32.mrf.mxu0
      %v456 = vadd.f32 0.0, %v455
      %v457 = vpop.f32.mrf.mxu0
      %v458 = vpop.f32.mrf.mxu0
      %v459 = vadd.f32 0.0, %v458
      %v460 = vpop.f32.mrf.mxu0
      %461 = vdwg.mxu0
      %462 = vrot.lane.b32.xlu0 %v213, 112
      %v463 = vpop.permute.xlu0 %462
      %464 = vrot.lane.b32.xlu0 %v214, 48
      %v465 = vpop.permute.xlu0 %464
      %v467 = vsel %vm219, %v463, 0
      %v470 = vsel %vm219, %v465, 0
      %472 = vmatprep.subr.bf16.mxu0 0
      %473 = vmatpush1.bf16.xpose.msra.mxu0 0
      %474 = vmatprep.subr.bf16.mxu0 0
      %475 = vmatpush1.bf16.xpose.msra.mxu0 0
      %476 = vmatprep.subr.bf16.mxu0 0
      %477 = vmatpush1.bf16.xpose.msra.mxu0 0
      %478 = vmatprep.subr.bf16.mxu0 0
      %479 = vmatpush1.bf16.xpose.msra.mxu0 0
      %480 = vmatprep.subr.bf16.mxu0 0
      %481 = vmatpush1.bf16.xpose.msra.mxu0 0
      %482 = vmatprep.subr.bf16.mxu0 0
      %483 = vmatpush1.bf16.xpose.msra.mxu0 0
      %484 = vmatprep.subr.bf16.mxu0 0
      %485 = vmatpush1.bf16.xpose.msra.mxu0 0
      %486 = vmatprep.subr.bf16.mxu0 0
      %487 = vmatpush1.bf16.xpose.msra.mxu0 %v470
      %488 = vmatprep.subr.bf16.mxu0 0
      %489 = vmatpush2.bf16.xpose.msra.mxu0 0
      %490 = vmatprep.subr.bf16.mxu0 0
      %491 = vmatpush2.bf16.xpose.msra.mxu0 0
      %492 = vmatprep.subr.bf16.mxu0 0
      %493 = vmatpush2.bf16.xpose.msra.mxu0 0
      %494 = vmatprep.subr.bf16.mxu0 0
      %495 = vmatpush2.bf16.xpose.msra.mxu0 0
      %496 = vmatprep.subr.bf16.mxu0 0
      %497 = vmatpush2.bf16.xpose.msra.mxu0 0
      %498 = vmatprep.subr.bf16.mxu0 0
      %499 = vmatpush2.bf16.xpose.msra.mxu0 0
      %500 = vmatprep.subr.bf16.mxu0 0
      %501 = vmatpush2.bf16.xpose.msra.mxu0 0
      %502 = vmatprep.subr.bf16.mxu0 0
      %503 = vmatpush2.bf16.xpose.msra.mxu0 0
      %504 = vmatprep.mubr.bf16.mxu0 0
      %505 = vmatmul.mubr.bf16.gmra.mxu0 %v467
      %v506 = vpop.f32.mrf.mxu0
      %v507 = vadd.f32 0.0, %v506
      %v508 = vpop.f32.mrf.mxu0
      %v509 = vpop.f32.mrf.mxu0
      %v510 = vadd.f32 0.0, %v509
      %v511 = vpop.f32.mrf.mxu0
      %512 = vdwg.mxu0
      %v513 = vmul.f32 %v507, 0.35355338
      %v514 = vmul.f32 %v510, 0.35355338
      %v515 = vsel %vm269, %v513, -inf
      %516 = vmax.xlane.f32.xlu0 %v515
      %v517 = vpop.xlane.xlu0 %516
      %v518 = vsel %vm269, %v514, -inf
      %519 = vmax.xlane.f32.xlu0 %v518
      %v520 = vpop.xlane.xlu0 %519
      %v521 = vsub.f32 %v513, %v517
      %v522 = vsub.f32 %v514, %v520
      %v523 = vmul.f32 %v521, 1.442695
      %v524 = vpow.pop %v523
      %v525 = vmul.f32 %v522, 1.442695
      %v526 = vpow.pop %v525
      %v527 = vsel %vm269, %v524, 0.0
      %528 = vadd.xlane.f32.xlu0 %v527
      %v529 = vpop.xlane.xlu0 %528
      %v530 = vsel %vm269, %v526, 0.0
      %531 = vadd.xlane.f32.xlu0 %v530
      %v532 = vpop.xlane.xlu0 %531
      %v533 = vrcp.pop %v529
      %v534 = vrcp.pop %v532
      %v535 = vmul.f32 %v524, %v533
      %v536 = vmul.f32 %v526, %v534
      %v537 = vpack.c.bf16 %v536, %v535
      %538 = vrot.lane.b32.xlu0 %v215, 112
      %v539 = vpop.permute.xlu0 %538
      %v542 = vsel %vm269, %v537, 0
      %544 = vmatprep.subr.bf16.mxu0 0
      %545 = vmatpush1.bf16.msra.mxu0 0
      %546 = vmatprep.subr.bf16.mxu0 0
      %547 = vmatpush1.bf16.msra.mxu0 0
      %548 = vmatprep.subr.bf16.mxu0 0
      %549 = vmatpush1.bf16.msra.mxu0 0
      %550 = vmatprep.subr.bf16.mxu0 0
      %551 = vmatpush1.bf16.msra.mxu0 0
      %552 = vmatprep.subr.bf16.mxu0 0
      %553 = vmatpush1.bf16.msra.mxu0 0
      %554 = vmatprep.subr.bf16.mxu0 0
      %555 = vmatpush1.bf16.msra.mxu0 0
      %556 = vmatprep.subr.bf16.mxu0 0
      %557 = vmatpush1.bf16.msra.mxu0 0
      %558 = vmatprep.subr.bf16.mxu0 0
      %559 = vmatpush1.bf16.msra.mxu0 %v539
      %560 = vmatprep.subr.bf16.mxu0 0
      %561 = vmatpush2.bf16.msra.mxu0 0
      %562 = vmatprep.subr.bf16.mxu0 0
      %563 = vmatpush2.bf16.msra.mxu0 0
      %564 = vmatprep.subr.bf16.mxu0 0
      %565 = vmatpush2.bf16.msra.mxu0 0
      %566 = vmatprep.subr.bf16.mxu0 0
      %567 = vmatpush2.bf16.msra.mxu0 0
      %568 = vmatprep.subr.bf16.mxu0 0
      %569 = vmatpush2.bf16.msra.mxu0 0
      %570 = vmatprep.subr.bf16.mxu0 0
      %571 = vmatpush2.bf16.msra.mxu0 0
      %572 = vmatprep.subr.bf16.mxu0 0
      %573 = vmatpush2.bf16.msra.mxu0 0
      %574 = vmatprep.subr.bf16.mxu0 0
      %575 = vmatpush2.bf16.msra.mxu0 0
      %576 = vmatprep.mubr.bf16.mxu0 0
      %577 = vmatmul.mubr.bf16.gmra.mxu0 %v542
      %v578 = vpop.f32.mrf.mxu0
      %v579 = vadd.f32 0.0, %v578
      %v580 = vpop.f32.mrf.mxu0
      %v581 = vpop.f32.mrf.mxu0
      %v582 = vadd.f32 0.0, %v581
      %v583 = vpop.f32.mrf.mxu0
      %584 = vdwg.mxu0
      %585 = vrot.lane.b32.xlu0 %v213, 104
      %v586 = vpop.permute.xlu0 %585
      %587 = vrot.lane.b32.xlu0 %v214, 40
      %v588 = vpop.permute.xlu0 %587
      %v590 = vsel %vm219, %v586, 0
      %v593 = vsel %vm219, %v588, 0
      %595 = vmatprep.subr.bf16.mxu0 0
      %596 = vmatpush1.bf16.xpose.msra.mxu0 0
      %597 = vmatprep.subr.bf16.mxu0 0
      %598 = vmatpush1.bf16.xpose.msra.mxu0 0
      %599 = vmatprep.subr.bf16.mxu0 0
      %600 = vmatpush1.bf16.xpose.msra.mxu0 0
      %601 = vmatprep.subr.bf16.mxu0 0
      %602 = vmatpush1.bf16.xpose.msra.mxu0 0
      %603 = vmatprep.subr.bf16.mxu0 0
      %604 = vmatpush1.bf16.xpose.msra.mxu0 0
      %605 = vmatprep.subr.bf16.mxu0 0
      %606 = vmatpush1.bf16.xpose.msra.mxu0 0
      %607 = vmatprep.subr.bf16.mxu0 0
      %608 = vmatpush1.bf16.xpose.msra.mxu0 0
      %609 = vmatprep.subr.bf16.mxu0 0
      %610 = vmatpush1.bf16.xpose.msra.mxu0 %v593
      %611 = vmatprep.subr.bf16.mxu0 0
      %612 = vmatpush2.bf16.xpose.msra.mxu0 0
      %613 = vmatprep.subr.bf16.mxu0 0
      %614 = vmatpush2.bf16.xpose.msra.mxu0 0
      %615 = vmatprep.subr.bf16.mxu0 0
      %616 = vmatpush2.bf16.xpose.msra.mxu0 0
      %617 = vmatprep.subr.bf16.mxu0 0
      %618 = vmatpush2.bf16.xpose.msra.mxu0 0
      %619 = vmatprep.subr.bf16.mxu0 0
      %620 = vmatpush2.bf16.xpose.msra.mxu0 0
      %621 = vmatprep.subr.bf16.mxu0 0
      %622 = vmatpush2.bf16.xpose.msra.mxu0 0
      %623 = vmatprep.subr.bf16.mxu0 0
      %624 = vmatpush2.bf16.xpose.msra.mxu0 0
      %625 = vmatprep.subr.bf16.mxu0 0
      %626 = vmatpush2.bf16.xpose.msra.mxu0 0
      %627 = vmatprep.mubr.bf16.mxu0 0
      %628 = vmatmul.mubr.bf16.gmra.mxu0 %v590
      %v629 = vpop.f32.mrf.mxu0
      %v630 = vadd.f32 0.0, %v629
      %v631 = vpop.f32.mrf.mxu0
      %v632 = vpop.f32.mrf.mxu0
      %v633 = vadd.f32 0.0, %v632
      %v634 = vpop.f32.mrf.mxu0
      %635 = vdwg.mxu0
      %v636 = vmul.f32 %v630, 0.35355338
      %v637 = vmul.f32 %v633, 0.35355338
      %v638 = vsel %vm269, %v636, -inf
      %639 = vmax.xlane.f32.xlu0 %v638
      %v640 = vpop.xlane.xlu0 %639
      %v641 = vsel %vm269, %v637, -inf
      %642 = vmax.xlane.f32.xlu0 %v641
      %v643 = vpop.xlane.xlu0 %642
      %v644 = vsub.f32 %v636, %v640
      %v645 = vsub.f32 %v637, %v643
      %v646 = vmul.f32 %v644, 1.442695
      %v647 = vpow.pop %v646
      %v648 = vmul.f32 %v645, 1.442695
      %v649 = vpow.pop %v648
      %v650 = vsel %vm269, %v647, 0.0
      %651 = vadd.xlane.f32.xlu0 %v650
      %v652 = vpop.xlane.xlu0 %651
      %v653 = vsel %vm269, %v649, 0.0
      %654 = vadd.xlane.f32.xlu0 %v653
      %v655 = vpop.xlane.xlu0 %654
      %v656 = vrcp.pop %v652
      %v657 = vrcp.pop %v655
      %v658 = vmul.f32 %v647, %v656
      %v659 = vmul.f32 %v649, %v657
      %v660 = vpack.c.bf16 %v659, %v658
      %661 = vrot.lane.b32.xlu0 %v215, 104
      %v662 = vpop.permute.xlu0 %661
      %v665 = vsel %vm269, %v660, 0
      %667 = vmatprep.subr.bf16.mxu0 0
      %668 = vmatpush1.bf16.msra.mxu0 0
      %669 = vmatprep.subr.bf16.mxu0 0
      %670 = vmatpush1.bf16.msra.mxu0 0
      %671 = vmatprep.subr.bf16.mxu0 0
      %672 = vmatpush1.bf16.msra.mxu0 0
      %673 = vmatprep.subr.bf16.mxu0 0
      %674 = vmatpush1.bf16.msra.mxu0 0
      %675 = vmatprep.subr.bf16.mxu0 0
      %676 = vmatpush1.bf16.msra.mxu0 0
      %677 = vmatprep.subr.bf16.mxu0 0
      %678 = vmatpush1.bf16.msra.mxu0 0
      %679 = vmatprep.subr.bf16.mxu0 0
      %680 = vmatpush1.bf16.msra.mxu0 0
      %681 = vmatprep.subr.bf16.mxu0 0
      %682 = vmatpush1.bf16.msra.mxu0 %v662
      %683 = vmatprep.subr.bf16.mxu0 0
      %684 = vmatpush2.bf16.msra.mxu0 0
      %685 = vmatprep.subr.bf16.mxu0 0
      %686 = vmatpush2.bf16.msra.mxu0 0
      %687 = vmatprep.subr.bf16.mxu0 0
      %688 = vmatpush2.bf16.msra.mxu0 0
      %689 = vmatprep.subr.bf16.mxu0 0
      %690 = vmatpush2.bf16.msra.mxu0 0
      %691 = vmatprep.subr.bf16.mxu0 0
      %692 = vmatpush2.bf16.msra.mxu0 0
      %693 = vmatprep.subr.bf16.mxu0 0
      %694 = vmatpush2.bf16.msra.mxu0 0
      %695 = vmatprep.subr.bf16.mxu0 0
      %696 = vmatpush2.bf16.msra.mxu0 0
      %697 = vmatprep.subr.bf16.mxu0 0
      %698 = vmatpush2.bf16.msra.mxu0 0
      %699 = vmatprep.mubr.bf16.mxu0 0
      %700 = vmatmul.mubr.bf16.gmra.mxu0 %v665
      %v701 = vpop.f32.mrf.mxu0
      %v702 = vadd.f32 0.0, %v701
      %v703 = vpop.f32.mrf.mxu0
      %v704 = vpop.f32.mrf.mxu0
      %v705 = vadd.f32 0.0, %v704
      %v706 = vpop.f32.mrf.mxu0
      %707 = vdwg.mxu0
      %708 = vrot.lane.b32.xlu0 %v213, 96
      %v709 = vpop.permute.xlu0 %708
      %710 = vrot.lane.b32.xlu0 %v214, 32
      %v711 = vpop.permute.xlu0 %710
      %v713 = vsel %vm219, %v709, 0
      %v716 = vsel %vm219, %v711, 0
      %718 = vmatprep.subr.bf16.mxu0 0
      %719 = vmatpush1.bf16.xpose.msra.mxu0 0
      %720 = vmatprep.subr.bf16.mxu0 0
      %721 = vmatpush1.bf16.xpose.msra.mxu0 0
      %722 = vmatprep.subr.bf16.mxu0 0
      %723 = vmatpush1.bf16.xpose.msra.mxu0 0
      %724 = vmatprep.subr.bf16.mxu0 0
      %725 = vmatpush1.bf16.xpose.msra.mxu0 0
      %726 = vmatprep.subr.bf16.mxu0 0
      %727 = vmatpush1.bf16.xpose.msra.mxu0 0
      %728 = vmatprep.subr.bf16.mxu0 0
      %729 = vmatpush1.bf16.xpose.msra.mxu0 0
      %730 = vmatprep.subr.bf16.mxu0 0
      %731 = vmatpush1.bf16.xpose.msra.mxu0 0
      %732 = vmatprep.subr.bf16.mxu0 0
      %733 = vmatpush1.bf16.xpose.msra.mxu0 %v716
      %734 = vmatprep.subr.bf16.mxu0 0
      %735 = vmatpush2.bf16.xpose.msra.mxu0 0
      %736 = vmatprep.subr.bf16.mxu0 0
      %737 = vmatpush2.bf16.xpose.msra.mxu0 0
      %738 = vmatprep.subr.bf16.mxu0 0
      %739 = vmatpush2.bf16.xpose.msra.mxu0 0
      %740 = vmatprep.subr.bf16.mxu0 0
      %741 = vmatpush2.bf16.xpose.msra.mxu0 0
      %742 = vmatprep.subr.bf16.mxu0 0
      %743 = vmatpush2.bf16.xpose.msra.mxu0 0
      %744 = vmatprep.subr.bf16.mxu0 0
      %745 = vmatpush2.bf16.xpose.msra.mxu0 0
      %746 = vmatprep.subr.bf16.mxu0 0
      %747 = vmatpush2.bf16.xpose.msra.mxu0 0
      %748 = vmatprep.subr.bf16.mxu0 0
      %749 = vmatpush2.bf16.xpose.msra.mxu0 0
      %750 = vmatprep.mubr.bf16.mxu0 0
      %751 = vmatmul.mubr.bf16.gmra.mxu0 %v713
      %v752 = vpop.f32.mrf.mxu0
      %v753 = vadd.f32 0.0, %v752
      %v754 = vpop.f32.mrf.mxu0
      %v755 = vpop.f32.mrf.mxu0
      %v756 = vadd.f32 0.0, %v755
      %v757 = vpop.f32.mrf.mxu0
      %758 = vdwg.mxu0
      %v759 = vmul.f32 %v753, 0.35355338
      %v760 = vmul.f32 %v756, 0.35355338
      %v761 = vsel %vm269, %v759, -inf
      %762 = vmax.xlane.f32.xlu0 %v761
      %v763 = vpop.xlane.xlu0 %762
      %v764 = vsel %vm269, %v760, -inf
      %765 = vmax.xlane.f32.xlu0 %v764
      %v766 = vpop.xlane.xlu0 %765
      %v767 = vsub.f32 %v759, %v763
      %v768 = vsub.f32 %v760, %v766
      %v769 = vmul.f32 %v767, 1.442695
      %v770 = vpow.pop %v769
      %v771 = vmul.f32 %v768, 1.442695
      %v772 = vpow.pop %v771
      %v773 = vsel %vm269, %v770, 0.0
      %774 = vadd.xlane.f32.xlu0 %v773
      %v775 = vpop.xlane.xlu0 %774
      %v776 = vsel %vm269, %v772, 0.0
      %777 = vadd.xlane.f32.xlu0 %v776
      %v778 = vpop.xlane.xlu0 %777
      %v779 = vrcp.pop %v775
      %v780 = vrcp.pop %v778
      %v781 = vmul.f32 %v770, %v779
      %v782 = vmul.f32 %v772, %v780
      %v783 = vpack.c.bf16 %v782, %v781
      %784 = vrot.lane.b32.xlu0 %v215, 96
      %v785 = vpop.permute.xlu0 %784
      %v788 = vsel %vm269, %v783, 0
      %790 = vmatprep.subr.bf16.mxu0 0
      %791 = vmatpush1.bf16.msra.mxu0 0
      %792 = vmatprep.subr.bf16.mxu0 0
      %793 = vmatpush1.bf16.msra.mxu0 0
      %794 = vmatprep.subr.bf16.mxu0 0
      %795 = vmatpush1.bf16.msra.mxu0 0
      %796 = vmatprep.subr.bf16.mxu0 0
      %797 = vmatpush1.bf16.msra.mxu0 0
      %798 = vmatprep.subr.bf16.mxu0 0
      %799 = vmatpush1.bf16.msra.mxu0 0
      %800 = vmatprep.subr.bf16.mxu0 0
      %801 = vmatpush1.bf16.msra.mxu0 0
      %802 = vmatprep.subr.bf16.mxu0 0
      %803 = vmatpush1.bf16.msra.mxu0 0
      %804 = vmatprep.subr.bf16.mxu0 0
      %805 = vmatpush1.bf16.msra.mxu0 %v785
      %806 = vmatprep.subr.bf16.mxu0 0
      %807 = vmatpush2.bf16.msra.mxu0 0
      %808 = vmatprep.subr.bf16.mxu0 0
      %809 = vmatpush2.bf16.msra.mxu0 0
      %810 = vmatprep.subr.bf16.mxu0 0
      %811 = vmatpush2.bf16.msra.mxu0 0
      %812 = vmatprep.subr.bf16.mxu0 0
      %813 = vmatpush2.bf16.msra.mxu0 0
      %814 = vmatprep.subr.bf16.mxu0 0
      %815 = vmatpush2.bf16.msra.mxu0 0
      %816 = vmatprep.subr.bf16.mxu0 0
      %817 = vmatpush2.bf16.msra.mxu0 0
      %818 = vmatprep.subr.bf16.mxu0 0
      %819 = vmatpush2.bf16.msra.mxu0 0
      %820 = vmatprep.subr.bf16.mxu0 0
      %821 = vmatpush2.bf16.msra.mxu0 0
      %822 = vmatprep.mubr.bf16.mxu0 0
      %823 = vmatmul.mubr.bf16.gmra.mxu0 %v788
      %v824 = vpop.f32.mrf.mxu0
      %v825 = vadd.f32 0.0, %v824
      %v826 = vpop.f32.mrf.mxu0
      %v827 = vpop.f32.mrf.mxu0
      %v828 = vadd.f32 0.0, %v827
      %v829 = vpop.f32.mrf.mxu0
      %830 = vdwg.mxu0
      %831 = vrot.lane.b32.xlu0 %v213, 88
      %v832 = vpop.permute.xlu0 %831
      %833 = vrot.lane.b32.xlu0 %v214, 24
      %v834 = vpop.permute.xlu0 %833
      %v836 = vsel %vm219, %v832, 0
      %v839 = vsel %vm219, %v834, 0
      %841 = vmatprep.subr.bf16.mxu0 0
      %842 = vmatpush1.bf16.xpose.msra.mxu0 0
      %843 = vmatprep.subr.bf16.mxu0 0
      %844 = vmatpush1.bf16.xpose.msra.mxu0 0
      %845 = vmatprep.subr.bf16.mxu0 0
      %846 = vmatpush1.bf16.xpose.msra.mxu0 0
      %847 = vmatprep.subr.bf16.mxu0 0
      %848 = vmatpush1.bf16.xpose.msra.mxu0 0
      %849 = vmatprep.subr.bf16.mxu0 0
      %850 = vmatpush1.bf16.xpose.msra.mxu0 0
      %851 = vmatprep.subr.bf16.mxu0 0
      %852 = vmatpush1.bf16.xpose.msra.mxu0 0
      %853 = vmatprep.subr.bf16.mxu0 0
      %854 = vmatpush1.bf16.xpose.msra.mxu0 0
      %855 = vmatprep.subr.bf16.mxu0 0
      %856 = vmatpush1.bf16.xpose.msra.mxu0 %v839
      %857 = vmatprep.subr.bf16.mxu0 0
      %858 = vmatpush2.bf16.xpose.msra.mxu0 0
      %859 = vmatprep.subr.bf16.mxu0 0
      %860 = vmatpush2.bf16.xpose.msra.mxu0 0
      %861 = vmatprep.subr.bf16.mxu0 0
      %862 = vmatpush2.bf16.xpose.msra.mxu0 0
      %863 = vmatprep.subr.bf16.mxu0 0
      %864 = vmatpush2.bf16.xpose.msra.mxu0 0
      %865 = vmatprep.subr.bf16.mxu0 0
      %866 = vmatpush2.bf16.xpose.msra.mxu0 0
      %867 = vmatprep.subr.bf16.mxu0 0
      %868 = vmatpush2.bf16.xpose.msra.mxu0 0
      %869 = vmatprep.subr.bf16.mxu0 0
      %870 = vmatpush2.bf16.xpose.msra.mxu0 0
      %871 = vmatprep.subr.bf16.mxu0 0
      %872 = vmatpush2.bf16.xpose.msra.mxu0 0
      %873 = vmatprep.mubr.bf16.mxu0 0
      %874 = vmatmul.mubr.bf16.gmra.mxu0 %v836
      %v875 = vpop.f32.mrf.mxu0
      %v876 = vadd.f32 0.0, %v875
      %v877 = vpop.f32.mrf.mxu0
      %v878 = vpop.f32.mrf.mxu0
      %v879 = vadd.f32 0.0, %v878
      %v880 = vpop.f32.mrf.mxu0
      %881 = vdwg.mxu0
      %v882 = vmul.f32 %v876, 0.35355338
      %v883 = vmul.f32 %v879, 0.35355338
      %v884 = vsel %vm269, %v882, -inf
      %885 = vmax.xlane.f32.xlu0 %v884
      %v886 = vpop.xlane.xlu0 %885
      %v887 = vsel %vm269, %v883, -inf
      %888 = vmax.xlane.f32.xlu0 %v887
      %v889 = vpop.xlane.xlu0 %888
      %v890 = vsub.f32 %v882, %v886
      %v891 = vsub.f32 %v883, %v889
      %v892 = vmul.f32 %v890, 1.442695
      %v893 = vpow.pop %v892
      %v894 = vmul.f32 %v891, 1.442695
      %v895 = vpow.pop %v894
      %v896 = vsel %vm269, %v893, 0.0
      %897 = vadd.xlane.f32.xlu0 %v896
      %v898 = vpop.xlane.xlu0 %897
      %v899 = vsel %vm269, %v895, 0.0
      %900 = vadd.xlane.f32.xlu0 %v899
      %v901 = vpop.xlane.xlu0 %900
      %v902 = vrcp.pop %v898
      %v903 = vrcp.pop %v901
      %v904 = vmul.f32 %v893, %v902
      %v905 = vmul.f32 %v895, %v903
      %v906 = vpack.c.bf16 %v905, %v904
      %907 = vrot.lane.b32.xlu0 %v215, 88
      %v908 = vpop.permute.xlu0 %907
      %v911 = vsel %vm269, %v906, 0
      %913 = vmatprep.subr.bf16.mxu0 0
      %914 = vmatpush1.bf16.msra.mxu0 0
      %915 = vmatprep.subr.bf16.mxu0 0
      %916 = vmatpush1.bf16.msra.mxu0 0
      %917 = vmatprep.subr.bf16.mxu0 0
      %918 = vmatpush1.bf16.msra.mxu0 0
      %919 = vmatprep.subr.bf16.mxu0 0
      %920 = vmatpush1.bf16.msra.mxu0 0
      %921 = vmatprep.subr.bf16.mxu0 0
      %922 = vmatpush1.bf16.msra.mxu0 0
      %923 = vmatprep.subr.bf16.mxu0 0
      %924 = vmatpush1.bf16.msra.mxu0 0
      %925 = vmatprep.subr.bf16.mxu0 0
      %926 = vmatpush1.bf16.msra.mxu0 0
      %927 = vmatprep.subr.bf16.mxu0 0
      %928 = vmatpush1.bf16.msra.mxu0 %v908
      %929 = vmatprep.subr.bf16.mxu0 0
      %930 = vmatpush2.bf16.msra.mxu0 0
      %931 = vmatprep.subr.bf16.mxu0 0
      %932 = vmatpush2.bf16.msra.mxu0 0
      %933 = vmatprep.subr.bf16.mxu0 0
      %934 = vmatpush2.bf16.msra.mxu0 0
      %935 = vmatprep.subr.bf16.mxu0 0
      %936 = vmatpush2.bf16.msra.mxu0 0
      %937 = vmatprep.subr.bf16.mxu0 0
      %938 = vmatpush2.bf16.msra.mxu0 0
      %939 = vmatprep.subr.bf16.mxu0 0
      %940 = vmatpush2.bf16.msra.mxu0 0
      %941 = vmatprep.subr.bf16.mxu0 0
      %942 = vmatpush2.bf16.msra.mxu0 0
      %943 = vmatprep.subr.bf16.mxu0 0
      %944 = vmatpush2.bf16.msra.mxu0 0
      %945 = vmatprep.mubr.bf16.mxu0 0
      %946 = vmatmul.mubr.bf16.gmra.mxu0 %v911
      %v947 = vpop.f32.mrf.mxu0
      %v948 = vadd.f32 0.0, %v947
      %v949 = vpop.f32.mrf.mxu0
      %v950 = vpop.f32.mrf.mxu0
      %v951 = vadd.f32 0.0, %v950
      %v952 = vpop.f32.mrf.mxu0
      %953 = vdwg.mxu0
      %954 = vrot.lane.b32.xlu0 %v213, 80
      %v955 = vpop.permute.xlu0 %954
      %956 = vrot.lane.b32.xlu0 %v214, 16
      %v957 = vpop.permute.xlu0 %956
      %v959 = vsel %vm219, %v955, 0
      %v962 = vsel %vm219, %v957, 0
      %964 = vmatprep.subr.bf16.mxu0 0
      %965 = vmatpush1.bf16.xpose.msra.mxu0 0
      %966 = vmatprep.subr.bf16.mxu0 0
      %967 = vmatpush1.bf16.xpose.msra.mxu0 0
      %968 = vmatprep.subr.bf16.mxu0 0
      %969 = vmatpush1.bf16.xpose.msra.mxu0 0
      %970 = vmatprep.subr.bf16.mxu0 0
      %971 = vmatpush1.bf16.xpose.msra.mxu0 0
      %972 = vmatprep.subr.bf16.mxu0 0
      %973 = vmatpush1.bf16.xpose.msra.mxu0 0
      %974 = vmatprep.subr.bf16.mxu0 0
      %975 = vmatpush1.bf16.xpose.msra.mxu0 0
      %976 = vmatprep.subr.bf16.mxu0 0
      %977 = vmatpush1.bf16.xpose.msra.mxu0 0
      %978 = vmatprep.subr.bf16.mxu0 0
      %979 = vmatpush1.bf16.xpose.msra.mxu0 %v962
      %980 = vmatprep.subr.bf16.mxu0 0
      %981 = vmatpush2.bf16.xpose.msra.mxu0 0
      %982 = vmatprep.subr.bf16.mxu0 0
      %983 = vmatpush2.bf16.xpose.msra.mxu0 0
      %984 = vmatprep.subr.bf16.mxu0 0
      %985 = vmatpush2.bf16.xpose.msra.mxu0 0
      %986 = vmatprep.subr.bf16.mxu0 0
      %987 = vmatpush2.bf16.xpose.msra.mxu0 0
      %988 = vmatprep.subr.bf16.mxu0 0
      %989 = vmatpush2.bf16.xpose.msra.mxu0 0
      %990 = vmatprep.subr.bf16.mxu0 0
      %991 = vmatpush2.bf16.xpose.msra.mxu0 0
      %992 = vmatprep.subr.bf16.mxu0 0
      %993 = vmatpush2.bf16.xpose.msra.mxu0 0
      %994 = vmatprep.subr.bf16.mxu0 0
      %995 = vmatpush2.bf16.xpose.msra.mxu0 0
      %996 = vmatprep.mubr.bf16.mxu0 0
      %997 = vmatmul.mubr.bf16.gmra.mxu0 %v959
      %v998 = vpop.f32.mrf.mxu0
      %v999 = vadd.f32 0.0, %v998
      %v1000 = vpop.f32.mrf.mxu0
      %v1001 = vpop.f32.mrf.mxu0
      %v1002 = vadd.f32 0.0, %v1001
      %v1003 = vpop.f32.mrf.mxu0
      %1004 = vdwg.mxu0
      %v1005 = vmul.f32 %v999, 0.35355338
      %v1006 = vmul.f32 %v1002, 0.35355338
      %v1007 = vsel %vm269, %v1005, -inf
      %1008 = vmax.xlane.f32.xlu0 %v1007
      %v1009 = vpop.xlane.xlu0 %1008
      %v1010 = vsel %vm269, %v1006, -inf
      %1011 = vmax.xlane.f32.xlu0 %v1010
      %v1012 = vpop.xlane.xlu0 %1011
      %v1013 = vsub.f32 %v1005, %v1009
      %v1014 = vsub.f32 %v1006, %v1012
      %v1015 = vmul.f32 %v1013, 1.442695
      %v1016 = vpow.pop %v1015
      %v1017 = vmul.f32 %v1014, 1.442695
      %v1018 = vpow.pop %v1017
      %v1019 = vsel %vm269, %v1016, 0.0
      %1020 = vadd.xlane.f32.xlu0 %v1019
      %v1021 = vpop.xlane.xlu0 %1020
      %v1022 = vsel %vm269, %v1018, 0.0
      %1023 = vadd.xlane.f32.xlu0 %v1022
      %v1024 = vpop.xlane.xlu0 %1023
      %v1025 = vrcp.pop %v1021
      %v1026 = vrcp.pop %v1024
      %v1027 = vmul.f32 %v1016, %v1025
      %v1028 = vmul.f32 %v1018, %v1026
      %v1029 = vpack.c.bf16 %v1028, %v1027
      %1030 = vrot.lane.b32.xlu0 %v215, 80
      %v1031 = vpop.permute.xlu0 %1030
      %v1034 = vsel %vm269, %v1029, 0
      %1036 = vmatprep.subr.bf16.mxu0 0
      %1037 = vmatpush1.bf16.msra.mxu0 0
      %1038 = vmatprep.subr.bf16.mxu0 0
      %1039 = vmatpush1.bf16.msra.mxu0 0
      %1040 = vmatprep.subr.bf16.mxu0 0
      %1041 = vmatpush1.bf16.msra.mxu0 0
      %1042 = vmatprep.subr.bf16.mxu0 0
      %1043 = vmatpush1.bf16.msra.mxu0 0
      %1044 = vmatprep.subr.bf16.mxu0 0
      %1045 = vmatpush1.bf16.msra.mxu0 0
      %1046 = vmatprep.subr.bf16.mxu0 0
      %1047 = vmatpush1.bf16.msra.mxu0 0
      %1048 = vmatprep.subr.bf16.mxu0 0
      %1049 = vmatpush1.bf16.msra.mxu0 0
      %1050 = vmatprep.subr.bf16.mxu0 0
      %1051 = vmatpush1.bf16.msra.mxu0 %v1031
      %1052 = vmatprep.subr.bf16.mxu0 0
      %1053 = vmatpush2.bf16.msra.mxu0 0
      %1054 = vmatprep.subr.bf16.mxu0 0
      %1055 = vmatpush2.bf16.msra.mxu0 0
      %1056 = vmatprep.subr.bf16.mxu0 0
      %1057 = vmatpush2.bf16.msra.mxu0 0
      %1058 = vmatprep.subr.bf16.mxu0 0
      %1059 = vmatpush2.bf16.msra.mxu0 0
      %1060 = vmatprep.subr.bf16.mxu0 0
      %1061 = vmatpush2.bf16.msra.mxu0 0
      %1062 = vmatprep.subr.bf16.mxu0 0
      %1063 = vmatpush2.bf16.msra.mxu0 0
      %1064 = vmatprep.subr.bf16.mxu0 0
      %1065 = vmatpush2.bf16.msra.mxu0 0
      %1066 = vmatprep.subr.bf16.mxu0 0
      %1067 = vmatpush2.bf16.msra.mxu0 0
      %1068 = vmatprep.mubr.bf16.mxu0 0
      %1069 = vmatmul.mubr.bf16.gmra.mxu0 %v1034
      %v1070 = vpop.f32.mrf.mxu0
      %v1071 = vadd.f32 0.0, %v1070
      %v1072 = vpop.f32.mrf.mxu0
      %v1073 = vpop.f32.mrf.mxu0
      %v1074 = vadd.f32 0.0, %v1073
      %v1075 = vpop.f32.mrf.mxu0
      %1076 = vdwg.mxu0
      %1077 = vrot.lane.b32.xlu0 %v213, 72
      %v1078 = vpop.permute.xlu0 %1077
      %1079 = vrot.lane.b32.xlu0 %v214, 8
      %v1080 = vpop.permute.xlu0 %1079
      %v1082 = vsel %vm219, %v1078, 0
      %v1085 = vsel %vm219, %v1080, 0
      %1087 = vmatprep.subr.bf16.mxu0 0
      %1088 = vmatpush1.bf16.xpose.msra.mxu0 0
      %1089 = vmatprep.subr.bf16.mxu0 0
      %1090 = vmatpush1.bf16.xpose.msra.mxu0 0
      %1091 = vmatprep.subr.bf16.mxu0 0
      %1092 = vmatpush1.bf16.xpose.msra.mxu0 0
      %1093 = vmatprep.subr.bf16.mxu0 0
      %1094 = vmatpush1.bf16.xpose.msra.mxu0 0
      %1095 = vmatprep.subr.bf16.mxu0 0
      %1096 = vmatpush1.bf16.xpose.msra.mxu0 0
      %1097 = vmatprep.subr.bf16.mxu0 0
      %1098 = vmatpush1.bf16.xpose.msra.mxu0 0
      %1099 = vmatprep.subr.bf16.mxu0 0
      %1100 = vmatpush1.bf16.xpose.msra.mxu0 0
      %1101 = vmatprep.subr.bf16.mxu0 0
      %1102 = vmatpush1.bf16.xpose.msra.mxu0 %v1085
      %1103 = vmatprep.subr.bf16.mxu0 0
      %1104 = vmatpush2.bf16.xpose.msra.mxu0 0
      %1105 = vmatprep.subr.bf16.mxu0 0
      %1106 = vmatpush2.bf16.xpose.msra.mxu0 0
      %1107 = vmatprep.subr.bf16.mxu0 0
      %1108 = vmatpush2.bf16.xpose.msra.mxu0 0
      %1109 = vmatprep.subr.bf16.mxu0 0
      %1110 = vmatpush2.bf16.xpose.msra.mxu0 0
      %1111 = vmatprep.subr.bf16.mxu0 0
      %1112 = vmatpush2.bf16.xpose.msra.mxu0 0
      %1113 = vmatprep.subr.bf16.mxu0 0
      %1114 = vmatpush2.bf16.xpose.msra.mxu0 0
      %1115 = vmatprep.subr.bf16.mxu0 0
      %1116 = vmatpush2.bf16.xpose.msra.mxu0 0
      %1117 = vmatprep.subr.bf16.mxu0 0
      %1118 = vmatpush2.bf16.xpose.msra.mxu0 0
      %1119 = vmatprep.mubr.bf16.mxu0 0
      %1120 = vmatmul.mubr.bf16.gmra.mxu0 %v1082
      %v1121 = vpop.f32.mrf.mxu0
      %v1122 = vadd.f32 0.0, %v1121
      %v1123 = vpop.f32.mrf.mxu0
      %v1124 = vpop.f32.mrf.mxu0
      %v1125 = vadd.f32 0.0, %v1124
      %v1126 = vpop.f32.mrf.mxu0
      %1127 = vdwg.mxu0
      %v1128 = vmul.f32 %v1122, 0.35355338
      %v1129 = vmul.f32 %v1125, 0.35355338
      %v1130 = vsel %vm269, %v1128, -inf
      %1131 = vmax.xlane.f32.xlu0 %v1130
      %v1132 = vpop.xlane.xlu0 %1131
      %v1133 = vsel %vm269, %v1129, -inf
      %1134 = vmax.xlane.f32.xlu0 %v1133
      %v1135 = vpop.xlane.xlu0 %1134
      %v1136 = vsub.f32 %v1128, %v1132
      %v1137 = vsub.f32 %v1129, %v1135
      %v1138 = vmul.f32 %v1136, 1.442695
      %v1139 = vpow.pop %v1138
      %v1140 = vmul.f32 %v1137, 1.442695
      %v1141 = vpow.pop %v1140
      %v1142 = vsel %vm269, %v1139, 0.0
      %1143 = vadd.xlane.f32.xlu0 %v1142
      %v1144 = vpop.xlane.xlu0 %1143
      %v1145 = vsel %vm269, %v1141, 0.0
      %1146 = vadd.xlane.f32.xlu0 %v1145
      %v1147 = vpop.xlane.xlu0 %1146
      %v1148 = vrcp.pop %v1144
      %v1149 = vrcp.pop %v1147
      %v1150 = vmul.f32 %v1139, %v1148
      %v1151 = vmul.f32 %v1141, %v1149
      %v1152 = vpack.c.bf16 %v1151, %v1150
      %1153 = vrot.lane.b32.xlu0 %v215, 72
      %v1154 = vpop.permute.xlu0 %1153
      %v1157 = vsel %vm269, %v1152, 0
      %1159 = vmatprep.subr.bf16.mxu0 0
      %1160 = vmatpush1.bf16.msra.mxu0 0
      %1161 = vmatprep.subr.bf16.mxu0 0
      %1162 = vmatpush1.bf16.msra.mxu0 0
      %1163 = vmatprep.subr.bf16.mxu0 0
      %1164 = vmatpush1.bf16.msra.mxu0 0
      %1165 = vmatprep.subr.bf16.mxu0 0
      %1166 = vmatpush1.bf16.msra.mxu0 0
      %1167 = vmatprep.subr.bf16.mxu0 0
      %1168 = vmatpush1.bf16.msra.mxu0 0
      %1169 = vmatprep.subr.bf16.mxu0 0
      %1170 = vmatpush1.bf16.msra.mxu0 0
      %1171 = vmatprep.subr.bf16.mxu0 0
      %1172 = vmatpush1.bf16.msra.mxu0 0
      %1173 = vmatprep.subr.bf16.mxu0 0
      %1174 = vmatpush1.bf16.msra.mxu0 %v1154
      %1175 = vmatprep.subr.bf16.mxu0 0
      %1176 = vmatpush2.bf16.msra.mxu0 0
      %1177 = vmatprep.subr.bf16.mxu0 0
      %1178 = vmatpush2.bf16.msra.mxu0 0
      %1179 = vmatprep.subr.bf16.mxu0 0
      %1180 = vmatpush2.bf16.msra.mxu0 0
      %1181 = vmatprep.subr.bf16.mxu0 0
      %1182 = vmatpush2.bf16.msra.mxu0 0
      %1183 = vmatprep.subr.bf16.mxu0 0
      %1184 = vmatpush2.bf16.msra.mxu0 0
      %1185 = vmatprep.subr.bf16.mxu0 0
      %1186 = vmatpush2.bf16.msra.mxu0 0
      %1187 = vmatprep.subr.bf16.mxu0 0
      %1188 = vmatpush2.bf16.msra.mxu0 0
      %1189 = vmatprep.subr.bf16.mxu0 0
      %1190 = vmatpush2.bf16.msra.mxu0 0
      %1191 = vmatprep.mubr.bf16.mxu0 0
      %1192 = vmatmul.mubr.bf16.gmra.mxu0 %v1157
      %v1193 = vpop.f32.mrf.mxu0
      %v1194 = vadd.f32 0.0, %v1193
      %v1195 = vpop.f32.mrf.mxu0
      %v1196 = vpop.f32.mrf.mxu0
      %v1197 = vadd.f32 0.0, %v1196
      %v1198 = vpop.f32.mrf.mxu0
      %1199 = vdwg.mxu0
      %1202 = vrot.lane.b32.xlu0 %v456, 8
      %v1203 = vpop.permute.xlu0 %1202
      %1204 = vrot.lane.b32.xlu0 %v459, 8
      %v1205 = vpop.permute.xlu0 %1204
      %1210 = vrot.lane.b32.xlu0 %v579, 16
      %v1211 = vpop.permute.xlu0 %1210
      %1212 = vrot.lane.b32.xlu0 %v582, 16
      %v1213 = vpop.permute.xlu0 %1212
      %1218 = vrot.lane.b32.xlu0 %v702, 24
      %v1219 = vpop.permute.xlu0 %1218
      %1220 = vrot.lane.b32.xlu0 %v705, 24
      %v1221 = vpop.permute.xlu0 %1220
      %1226 = vrot.lane.b32.xlu0 %v825, 32
      %v1227 = vpop.permute.xlu0 %1226
      %1228 = vrot.lane.b32.xlu0 %v828, 32
      %v1229 = vpop.permute.xlu0 %1228
      %1234 = vrot.lane.b32.xlu0 %v948, 40
      %v1235 = vpop.permute.xlu0 %1234
      %1236 = vrot.lane.b32.xlu0 %v951, 40
      %v1237 = vpop.permute.xlu0 %1236
      %1242 = vrot.lane.b32.xlu0 %v1071, 48
      %v1243 = vpop.permute.xlu0 %1242
      %1244 = vrot.lane.b32.xlu0 %v1074, 48
      %v1245 = vpop.permute.xlu0 %1244
      %1250 = vrot.lane.b32.xlu0 %v1194, 56
      %v1251 = vpop.permute.xlu0 %1250
      %1252 = vrot.lane.b32.xlu0 %v1197, 56
      %v1253 = vpop.permute.xlu0 %1252
      %v1256 = vsel %vm219, %v331, %v1203
      %v1257 = vsel %vm219, %v334, %v1205
      %v1258 = vsel %vm269, %v1256, %v1211
      %v1259 = vsel %vm269, %v1257, %v1213
      %vm1260 = vcmask 195584
      %v1261 = vsel %vm1260, %v1258, %v1219
      %v1262 = vsel %vm1260, %v1259, %v1221
      %vm1263 = vcmask 261120
      %v1264 = vsel %vm1263, %v1261, %v1227
      %v1265 = vsel %vm1263, %v1262, %v1229
      %vm1266 = vcmask 326656
      %v1267 = vsel %vm1266, %v1264, %v1235
      %v1268 = vsel %vm1266, %v1265, %v1237
      %vm1269 = vcmask 392192
      %v1270 = vsel %vm1269, %v1267, %v1243
      %v1271 = vsel %vm1269, %v1268, %v1245
      %vm1272 = vcmask 457728
      %v1273 = vsel %vm1272, %v1270, %v1251
      %v1274 = vsel %vm1272, %v1271, %v1253
      %vm1275 = vcmask 523264
      %1276 = vst.msk [vmem:[%s204] sm:$0xff] %vm1275, %v1273
      %1277 = vst.msk [vmem:[%s204 + $0x8] sm:$0xff] %vm1275, %v1274
      %s1278 = smul.u32 2, %s18
      %p1279 = scmp.lt.s32.totalorder %s17, 1
      %s1280 = scalar_select %p1279, %s17, 1
      %p1281 = scmp.lt.s32.totalorder %s1278, 1
      %s1282 = scalar_select %p1281, %s1278, 1
      %s1283 = smul.addr %s1280, 2
      %s1284 = sadd.s32 %s1282, %s1283
      %s1285 = smul.addr %s1284, 8
      %s1286 = scalar_lea.vmem %s2, %s1285
      // Predicated region
      $region29: #{completion_transformer_forward.43} parent=27 // pred_check
        %p1287 = pneg %p99
      $region30: #{completion_transformer_forward.43} parent=27 // pred_check_branch
        %1289 = sbr.rel (%p1287) target = $region32
      $region31: #{completion_transformer_forward.43} parent=27 // pred_region
        %s1290 = smul.u32 2, %s18
      $region32: #{completion_transformer_forward.43} parent=27 // pred_fallthru
        _
    $region28: #{completion_transformer_forward.43} parent=5 // pred_fallthru
      _
    %p1291 = scmp.le.s32.totalorder 2, %s8
    // Predicated region
    $region33: #{completion_transformer_forward.43} parent=5 // pred_check
      %p1292 = pneg %p1291
    $region34: #{completion_transformer_forward.43} parent=5 // pred_check_branch
      %1294 = sbr.rel (%p1292) target = $region36
    $region35: #{completion_transformer_forward.43} parent=5 // pred_region
      %s1295 = ssub.s32 %s8, 2
      // Predicated region
      $region37: #{completion_transformer_forward.43} parent=35 // pred_check
        %p1296 = pneg %p105
      $region38: #{completion_transformer_forward.43} parent=35 // pred_check_branch
        %1298 = sbr.rel (%p1296) target = $region40
      $region39: #{completion_transformer_forward.43} parent=35 // pred_region
        %s1299 = smul.u32 2, %s20
        %p1300 = scmp.lt.s32.totalorder %s19, 1
        %s1301 = scalar_select %p1300, %s19, 1
        %p1302 = scmp.lt.s32.totalorder %s1299, 1
        %s1303 = scalar_select %p1302, %s1299, 1
        %s1304 = smul.addr %s1301, 2
        %s1305 = sadd.s32 %s1303, %s1304
        %s1306 = smul.addr %s1305, 8
        %s1307 = scalar_lea.vmem %s2, %s1306
      $region40: #{completion_transformer_forward.43} parent=35 // pred_fallthru
        _
    $region36: #{completion_transformer_forward.43} parent=5 // pred_fallthru
      _
  $region6: #{completion_transformer_forward.43} parent=0 // loop_footer
    %s12 = sadd.s32 1, %s8
  $region7: #{completion_transformer_forward.43} parent=0 // loop_footer_branch
    %7 = sbr.rel target = $region3
  $region8: #{completion_transformer_forward.43} parent=0 // loop_exit
    _

// kernel: completion_transformer_forward.53
$region0: #{completion_transformer_forward.53}
  #allocation0 [shape = 'u32[]', space=smem, size = 0x4, offset = 0x4, fixed_abs, tag = 'smem constant byte address 0x4 - core index']
  #allocation1 [shape = 'u32[144,128]{1,0:T(1,128)}', space=vmem, size = 0x12000, scoped, tag = 'internal scratch']
  %s0 = inlined_call_operand.vmem [shape: f32[2,64], index: 0, kind: input, shape index: {}]
  %s1 = inlined_call_operand.vmem [shape: f32[64,64], index: 1, kind: input, shape index: {}]
  %s2 = inlined_call_operand.vmem [shape: f32[1,64], index: 2, kind: input, shape index: {}]
  %s3 = inlined_call_operand.vmem [shape: f32[2,64], index: 3, kind: output, shape index: {}]
  %s4 = sld [smem:[#allocation0]]
  $region22: #{completion_transformer_forward.53} parent=0
    _
  %s6 = ssub.s32 1, %s4
  %s7 = scalar_select 0, %s6, %s4
  // Predicated region
  $region2: #{completion_transformer_forward.53} parent=0 // pred_check
    _
  $region3: #{completion_transformer_forward.53} parent=0 // pred_check_branch
    %9 = sbr.rel (0) target = $region5
  $region4: #{completion_transformer_forward.53} parent=0 // pred_region
    _
  $region5: #{completion_transformer_forward.53} parent=0 // pred_fallthru
    _
  // Predicated region
  $region6: #{completion_transformer_forward.53} parent=0 // pred_check
    _
  $region7: #{completion_transformer_forward.53} parent=0 // pred_check_branch
    %11 = sbr.rel (0) target = $region9
  $region8: #{completion_transformer_forward.53} parent=0 // pred_region
    _
  $region9: #{completion_transformer_forward.53} parent=0 // pred_fallthru
    _
  // Predicated region
  $region10: #{completion_transformer_forward.53} parent=0 // pred_check
    _
  $region11: #{completion_transformer_forward.53} parent=0 // pred_check_branch
    %13 = sbr.rel (0) target = $region13
  $region12: #{completion_transformer_forward.53} parent=0 // pred_region
    _
  $region13: #{completion_transformer_forward.53} parent=0 // pred_fallthru
    _
  %v15 = vld [vmem:[%s0] sm:$0x3]
  %v16 = vpack.c.bf16 %v15, %v15
  %v17 = vld [vmem:[%s1] sm:$0xff]
  %v18 = vld [vmem:[%s1 + $0x8] sm:$0xff]
  %v19 = vld [vmem:[%s1 + $0x10] sm:$0xff]
  %v20 = vld [vmem:[%s1 + $0x18] sm:$0xff]
  %v21 = vld [vmem:[%s1 + $0x20] sm:$0xff]
  %v22 = vld [vmem:[%s1 + $0x28] sm:$0xff]
  %v23 = vld [vmem:[%s1 + $0x30] sm:$0xff]
  %v24 = vld [vmem:[%s1 + $0x38] sm:$0xff]
  %v25 = vpack.c.bf16 %v18, %v17
  %v26 = vpack.c.bf16 %v20, %v19
  %v27 = vpack.c.bf16 %v22, %v21
  %v28 = vpack.c.bf16 %v24, %v23
  %v29 = vld [vmem:[%s2] sm:$0x1]
  %v31 = vlaneseq
  %v32 = vshrl.u32 %v31, 7
  %v33 = vsub.s32 0, %v32
  %v34 = vrot.slane %v29, %v33
  %vm36 = vcmask 523264
  %v38 = vsel %vm36, %v16, 0
  %40 = vmatprep.subr.bf16.mxu0 0
  %41 = vmatpush1.bf16.msra.mxu0 0
  %42 = vmatprep.subr.bf16.mxu0 0
  %43 = vmatpush1.bf16.msra.mxu0 0
  %44 = vmatprep.subr.bf16.mxu0 0
  %45 = vmatpush1.bf16.msra.mxu0 0
  %46 = vmatprep.subr.bf16.mxu0 0
  %47 = vmatpush1.bf16.msra.mxu0 0
  %48 = vmatprep.subr.bf16.mxu0 0
  %49 = vmatpush1.bf16.msra.mxu0 %v28
  %50 = vmatprep.subr.bf16.mxu0 0
  %51 = vmatpush1.bf16.msra.mxu0 %v27
  %52 = vmatprep.subr.bf16.mxu0 0
  %53 = vmatpush1.bf16.msra.mxu0 %v26
  %54 = vmatprep.subr.bf16.mxu0 0
  %55 = vmatpush1.bf16.msra.mxu0 %v25
  %56 = vmatprep.subr.bf16.mxu0 0
  %57 = vmatpush2.bf16.msra.mxu0 0
  %58 = vmatprep.subr.bf16.mxu0 0
  %59 = vmatpush2.bf16.msra.mxu0 0
  %60 = vmatprep.subr.bf16.mxu0 0
  %61 = vmatpush2.bf16.msra.mxu0 0
  %62 = vmatprep.subr.bf16.mxu0 0
  %63 = vmatpush2.bf16.msra.mxu0 0
  %64 = vmatprep.subr.bf16.mxu0 0
  %65 = vmatpush2.bf16.msra.mxu0 0
  %66 = vmatprep.subr.bf16.mxu0 0
  %67 = vmatpush2.bf16.msra.mxu0 0
  %68 = vmatprep.subr.bf16.mxu0 0
  %69 = vmatpush2.bf16.msra.mxu0 0
  %70 = vmatprep.subr.bf16.mxu0 0
  %71 = vmatpush2.bf16.msra.mxu0 0
  %72 = vmatprep.mubr.bf16.mxu0 0
  %73 = vmatmul.mubr.bf16.gmra.mxu0 %v38
  %v74 = vpop.f32.mrf.mxu0
  %v75 = vadd.f32 %v34, %v74
  %v76 = vpop.f32.mrf.mxu0
  %v77 = vpop.f32.mrf.mxu0
  %v78 = vpop.f32.mrf.mxu0
  %79 = vdwg.mxu0
  %vm80 = vcmp.ge.f32.partialorder %v75, 0.0
  %v81 = vmul.f32 %v75, 0.01
  %v82 = vsel %vm80, %v75, %v81
  %vm83 = vcmask 517120
  %84 = vst.msk [vmem:[%s3] sm:$0x3] %vm83, %v82
  // Predicated region
  $region14: #{completion_transformer_forward.53} parent=0 // pred_check
    _
  $region15: #{completion_transformer_forward.53} parent=0 // pred_check_branch
    %86 = sbr.rel (0) target = $region17
  $region16: #{completion_transformer_forward.53} parent=0 // pred_region
    _
  $region17: #{completion_transformer_forward.53} parent=0 // pred_fallthru
    _
  // Predicated region
  $region18: #{completion_transformer_forward.53} parent=0 // pred_check
    _
  $region19: #{completion_transformer_forward.53} parent=0 // pred_check_branch
    %88 = sbr.rel (0) target = $region21
  $region20: #{completion_transformer_forward.53} parent=0 // pred_region
    _
  $region21: #{completion_transformer_forward.53} parent=0 // pred_fallthru
    _

// kernel: completion_transformer_forward.54
$region0: #{completion_transformer_forward.54}
  #allocation0 [shape = 'u32[]', space=smem, size = 0x4, offset = 0x4, fixed_abs, tag = 'smem constant byte address 0x4 - core index']
  #allocation1 [shape = 'u32[144,128]{1,0:T(1,128)}', space=vmem, size = 0x12000, scoped, tag = 'internal scratch']
  %s0 = inlined_call_operand.vmem [shape: f32[2,64], index: 0, kind: input, shape index: {}]
  %s1 = inlined_call_operand.vmem [shape: f32[64,1024], index: 1, kind: input, shape index: {}]
  %s2 = inlined_call_operand.vmem [shape: f32[1,1024], index: 2, kind: input, shape index: {}]
  %s3 = inlined_call_operand.vmem [shape: f32[2,1024], index: 3, kind: output, shape index: {}]
  %s4 = sld [smem:[#allocation0]]
  $region22: #{completion_transformer_forward.54} parent=0
    _
  %s6 = ssub.s32 1, %s4
  %s7 = scalar_select 0, %s6, %s4
  // Predicated region
  $region2: #{completion_transformer_forward.54} parent=0 // pred_check
    _
  $region3: #{completion_transformer_forward.54} parent=0 // pred_check_branch
    %9 = sbr.rel (0) target = $region5
  $region4: #{completion_transformer_forward.54} parent=0 // pred_region
    _
  $region5: #{completion_transformer_forward.54} parent=0 // pred_fallthru
    _
  // Predicated region
  $region6: #{completion_transformer_forward.54} parent=0 // pred_check
    _
  $region7: #{completion_transformer_forward.54} parent=0 // pred_check_branch
    %11 = sbr.rel (0) target = $region9
  $region8: #{completion_transformer_forward.54} parent=0 // pred_region
    _
  $region9: #{completion_transformer_forward.54} parent=0 // pred_fallthru
    _
  // Predicated region
  $region10: #{completion_transformer_forward.54} parent=0 // pred_check
    _
  $region11: #{completion_transformer_forward.54} parent=0 // pred_check_branch
    %13 = sbr.rel (0) target = $region13
  $region12: #{completion_transformer_forward.54} parent=0 // pred_region
    _
  $region13: #{completion_transformer_forward.54} parent=0 // pred_fallthru
    _
  %v15 = vld [vmem:[%s0] sm:$0x3]
  %v16 = vpack.c.bf16 %v15, %v15
  %v17 = vld [vmem:[%s1] sm:$0xff]
  %v18 = vld [vmem:[%s1 + $0x8] sm:$0xff]
  %v19 = vld [vmem:[%s1 + $0x10] sm:$0xff]
  %v20 = vld [vmem:[%s1 + $0x18] sm:$0xff]
  %v21 = vld [vmem:[%s1 + $0x20] sm:$0xff]
  %v22 = vld [vmem:[%s1 + $0x28] sm:$0xff]
  %v23 = vld [vmem:[%s1 + $0x30] sm:$0xff]
  %v24 = vld [vmem:[%s1 + $0x38] sm:$0xff]
  %v25 = vld [vmem:[%s1 + $0x40] sm:$0xff]
  %v26 = vld [vmem:[%s1 + $0x48] sm:$0xff]
  %v27 = vld [vmem:[%s1 + $0x50] sm:$0xff]
  %v28 = vld [vmem:[%s1 + $0x58] sm:$0xff]
  %v29 = vld [vmem:[%s1 + $0x60] sm:$0xff]
  %v30 = vld [vmem:[%s1 + $0x68] sm:$0xff]
  %v31 = vld [vmem:[%s1 + $0x70] sm:$0xff]
  %v32 = vld [vmem:[%s1 + $0x78] sm:$0xff]
  %v33 = vld [vmem:[%s1 + $0x80] sm:$0xff]
  %v34 = vld [vmem:[%s1 + $0x88] sm:$0xff]
  %v35 = vld [vmem:[%s1 + $0x90] sm:$0xff]
  %v36 = vld [vmem:[%s1 + $0x98] sm:$0xff]
  %v37 = vld [vmem:[%s1 + $0xa0] sm:$0xff]
  %v38 = vld [vmem:[%s1 + $0xa8] sm:$0xff]
  %v39 = vld [vmem:[%s1 + $0xb0] sm:$0xff]
  %v40 = vld [vmem:[%s1 + $0xb8] sm:$0xff]
  %v41 = vld [vmem:[%s1 + $0xc0] sm:$0xff]
  %v42 = vld [vmem:[%s1 + $0xc8] sm:$0xff]
  %v43 = vld [vmem:[%s1 + $0xd0] sm:$0xff]
  %v44 = vld [vmem:[%s1 + $0xd8] sm:$0xff]
  %v45 = vld [vmem:[%s1 + $0xe0] sm:$0xff]
  %v46 = vld [vmem:[%s1 + $0xe8] sm:$0xff]
  %v47 = vld [vmem:[%s1 + $0xf0] sm:$0xff]
  %v48 = vld [vmem:[%s1 + $0xf8] sm:$0xff]
  %v49 = vld [vmem:[%s1 + $0x100] sm:$0xff]
  %v50 = vld [vmem:[%s1 + $0x108] sm:$0xff]
  %v51 = vld [vmem:[%s1 + $0x110] sm:$0xff]
  %v52 = vld [vmem:[%s1 + $0x118] sm:$0xff]
  %v53 = vld [vmem:[%s1 + $0x120] sm:$0xff]
  %v54 = vld [vmem:[%s1 + $0x128] sm:$0xff]
  %v55 = vld [vmem:[%s1 + $0x130] sm:$0xff]
  %v56 = vld [vmem:[%s1 + $0x138] sm:$0xff]
  %v57 = vld [vmem:[%s1 + $0x140] sm:$0xff]
  %v58 = vld [vmem:[%s1 + $0x148] sm:$0xff]
  %v59 = vld [vmem:[%s1 + $0x150] sm:$0xff]
  %v60 = vld [vmem:[%s1 + $0x158] sm:$0xff]
  %v61 = vld [vmem:[%s1 + $0x160] sm:$0xff]
  %v62 = vld [vmem:[%s1 + $0x168] sm:$0xff]
  %v63 = vld [vmem:[%s1 + $0x170] sm:$0xff]
  %v64 = vld [vmem:[%s1 + $0x178] sm:$0xff]
  %v65 = vld [vmem:[%s1 + $0x180] sm:$0xff]
  %v66 = vld [vmem:[%s1 + $0x188] sm:$0xff]
  %v67 = vld [vmem:[%s1 + $0x190] sm:$0xff]
  %v68 = vld [vmem:[%s1 + $0x198] sm:$0xff]
  %v69 = vld [vmem:[%s1 + $0x1a0] sm:$0xff]
  %v70 = vld [vmem:[%s1 + $0x1a8] sm:$0xff]
  %v71 = vld [vmem:[%s1 + $0x1b0] sm:$0xff]
  %v72 = vld [vmem:[%s1 + $0x1b8] sm:$0xff]
  %v73 = vld [vmem:[%s1 + $0x1c0] sm:$0xff]
  %v74 = vld [vmem:[%s1 + $0x1c8] sm:$0xff]
  %v75 = vld [vmem:[%s1 + $0x1d0] sm:$0xff]
  %v76 = vld [vmem:[%s1 + $0x1d8] sm:$0xff]
  %v77 = vld [vmem:[%s1 + $0x1e0] sm:$0xff]
  %v78 = vld [vmem:[%s1 + $0x1e8] sm:$0xff]
  %v79 = vld [vmem:[%s1 + $0x1f0] sm:$0xff]
  %v80 = vld [vmem:[%s1 + $0x1f8] sm:$0xff]
  %v81 = vpack.c.bf16 %v25, %v17
  %v82 = vpack.c.bf16 %v26, %v18
  %v83 = vpack.c.bf16 %v27, %v19
  %v84 = vpack.c.bf16 %v28, %v20
  %v85 = vpack.c.bf16 %v29, %v21
  %v86 = vpack.c.bf16 %v30, %v22
  %v87 = vpack.c.bf16 %v31, %v23
  %v88 = vpack.c.bf16 %v32, %v24
  %v89 = vpack.c.bf16 %v41, %v33
  %v90 = vpack.c.bf16 %v42, %v34
  %v91 = vpack.c.bf16 %v43, %v35
  %v92 = vpack.c.bf16 %v44, %v36
  %v93 = vpack.c.bf16 %v45, %v37
  %v94 = vpack.c.bf16 %v46, %v38
  %v95 = vpack.c.bf16 %v47, %v39
  %v96 = vpack.c.bf16 %v48, %v40
  %v97 = vpack.c.bf16 %v57, %v49
  %v98 = vpack.c.bf16 %v58, %v50
  %v99 = vpack.c.bf16 %v59, %v51
  %v100 = vpack.c.bf16 %v60, %v52
  %v101 = vpack.c.bf16 %v61, %v53
  %v102 = vpack.c.bf16 %v62, %v54
  %v103 = vpack.c.bf16 %v63, %v55
  %v104 = vpack.c.bf16 %v64, %v56
  %v105 = vpack.c.bf16 %v73, %v65
  %v106 = vpack.c.bf16 %v74, %v66
  %v107 = vpack.c.bf16 %v75, %v67
  %v108 = vpack.c.bf16 %v76, %v68
  %v109 = vpack.c.bf16 %v77, %v69
  %v110 = vpack.c.bf16 %v78, %v70
  %v111 = vpack.c.bf16 %v79, %v71
  %v112 = vpack.c.bf16 %v80, %v72
  %v113 = vld [vmem:[%s2] sm:$0xff]
  %v115 = vlaneseq
  %v116 = vshrl.u32 %v115, 7
  %v117 = vsub.s32 0, %v116
  %v118 = vrot.slane %v113, %v117
  %v119 = vlaneseq
  %v120 = vshrl.u32 %v119, 7
  %v121 = vsub.s32 1, %v120
  %v122 = vrot.slane %v113, %v121
  %v123 = vlaneseq
  %v124 = vshrl.u32 %v123, 7
  %v125 = vsub.s32 2, %v124
  %v126 = vrot.slane %v113, %v125
  %v127 = vlaneseq
  %v128 = vshrl.u32 %v127, 7
  %v129 = vsub.s32 3, %v128
  %v130 = vrot.slane %v113, %v129
  %v131 = vlaneseq
  %v132 = vshrl.u32 %v131, 7
  %v133 = vsub.s32 4, %v132
  %v134 = vrot.slane %v113, %v133
  %v135 = vlaneseq
  %v136 = vshrl.u32 %v135, 7
  %v137 = vsub.s32 5, %v136
  %v138 = vrot.slane %v113, %v137
  %v139 = vlaneseq
  %v140 = vshrl.u32 %v139, 7
  %v141 = vsub.s32 6, %v140
  %v142 = vrot.slane %v113, %v141
  %v143 = vlaneseq
  %v144 = vshrl.u32 %v143, 7
  %v145 = vsub.s32 7, %v144
  %v146 = vrot.slane %v113, %v145
  %vm155 = vcmask 523264
  %v157 = vsel %vm155, %v16, 0
  %159 = vmatprep.subr.bf16.mxu0 0
  %160 = vmatpush1.bf16.msra.mxu0 0
  %161 = vmatprep.subr.bf16.mxu0 0
  %162 = vmatpush1.bf16.msra.mxu0 0
  %163 = vmatprep.subr.bf16.mxu0 0
  %164 = vmatpush1.bf16.msra.mxu0 0
  %165 = vmatprep.subr.bf16.mxu0 0
  %166 = vmatpush1.bf16.msra.mxu0 0
  %167 = vmatprep.subr.bf16.mxu0 %v106
  %168 = vmatpush1.bf16.msra.mxu0 %v105
  %169 = vmatprep.subr.bf16.mxu0 %v98
  %170 = vmatpush1.bf16.msra.mxu0 %v97
  %171 = vmatprep.subr.bf16.mxu0 %v90
  %172 = vmatpush1.bf16.msra.mxu0 %v89
  %173 = vmatprep.subr.bf16.mxu0 %v82
  %174 = vmatpush1.bf16.msra.mxu0 %v81
  %175 = vmatprep.subr.bf16.mxu0 0
  %176 = vmatpush2.bf16.msra.mxu0 0
  %177 = vmatprep.subr.bf16.mxu0 0
  %178 = vmatpush2.bf16.msra.mxu0 0
  %179 = vmatprep.subr.bf16.mxu0 0
  %180 = vmatpush2.bf16.msra.mxu0 0
  %181 = vmatprep.subr.bf16.mxu0 0
  %182 = vmatpush2.bf16.msra.mxu0 0
  %183 = vmatprep.subr.bf16.mxu0 0
  %184 = vmatpush2.bf16.msra.mxu0 0
  %185 = vmatprep.subr.bf16.mxu0 0
  %186 = vmatpush2.bf16.msra.mxu0 0
  %187 = vmatprep.subr.bf16.mxu0 0
  %188 = vmatpush2.bf16.msra.mxu0 0
  %189 = vmatprep.subr.bf16.mxu0 0
  %190 = vmatpush2.bf16.msra.mxu0 0
  %191 = vmatprep.mubr.bf16.mxu0 0
  %192 = vmatmul.mubr.bf16.gmra.mxu0 %v157
  %v193 = vpop.f32.mrf.mxu0
  %v194 = vadd.f32 %v118, %v193
  %v195 = vpop.f32.mrf.mxu0
  %v196 = vadd.f32 %v122, %v195
  %v197 = vpop.f32.mrf.mxu0
  %v198 = vpop.f32.mrf.mxu0
  %199 = vdwg.mxu0
  %200 = vmatprep.subr.bf16.mxu0 0
  %201 = vmatpush1.bf16.msra.mxu0 0
  %202 = vmatprep.subr.bf16.mxu0 0
  %203 = vmatpush1.bf16.msra.mxu0 0
  %204 = vmatprep.subr.bf16.mxu0 0
  %205 = vmatpush1.bf16.msra.mxu0 0
  %206 = vmatprep.subr.bf16.mxu0 0
  %207 = vmatpush1.bf16.msra.mxu0 0
  %208 = vmatprep.subr.bf16.mxu0 %v108
  %209 = vmatpush1.bf16.msra.mxu0 %v107
  %210 = vmatprep.subr.bf16.mxu0 %v100
  %211 = vmatpush1.bf16.msra.mxu0 %v99
  %212 = vmatprep.subr.bf16.mxu0 %v92
  %213 = vmatpush1.bf16.msra.mxu0 %v91
  %214 = vmatprep.subr.bf16.mxu0 %v84
  %215 = vmatpush1.bf16.msra.mxu0 %v83
  %216 = vmatprep.subr.bf16.mxu0 0
  %217 = vmatpush2.bf16.msra.mxu0 0
  %218 = vmatprep.subr.bf16.mxu0 0
  %219 = vmatpush2.bf16.msra.mxu0 0
  %220 = vmatprep.subr.bf16.mxu0 0
  %221 = vmatpush2.bf16.msra.mxu0 0
  %222 = vmatprep.subr.bf16.mxu0 0
  %223 = vmatpush2.bf16.msra.mxu0 0
  %224 = vmatprep.subr.bf16.mxu0 0
  %225 = vmatpush2.bf16.msra.mxu0 0
  %226 = vmatprep.subr.bf16.mxu0 0
  %227 = vmatpush2.bf16.msra.mxu0 0
  %228 = vmatprep.subr.bf16.mxu0 0
  %229 = vmatpush2.bf16.msra.mxu0 0
  %230 = vmatprep.subr.bf16.mxu0 0
  %231 = vmatpush2.bf16.msra.mxu0 0
  %232 = vmatprep.mubr.bf16.mxu0 0
  %233 = vmatmul.mubr.bf16.gmra.mxu0 %v157
  %v234 = vpop.f32.mrf.mxu0
  %v235 = vadd.f32 %v126, %v234
  %v236 = vpop.f32.mrf.mxu0
  %v237 = vadd.f32 %v130, %v236
  %v238 = vpop.f32.mrf.mxu0
  %v239 = vpop.f32.mrf.mxu0
  %240 = vdwg.mxu0
  %241 = vmatprep.subr.bf16.mxu0 0
  %242 = vmatpush1.bf16.msra.mxu0 0
  %243 = vmatprep.subr.bf16.mxu0 0
  %244 = vmatpush1.bf16.msra.mxu0 0
  %245 = vmatprep.subr.bf16.mxu0 0
  %246 = vmatpush1.bf16.msra.mxu0 0
  %247 = vmatprep.subr.bf16.mxu0 0
  %248 = vmatpush1.bf16.msra.mxu0 0
  %249 = vmatprep.subr.bf16.mxu0 %v110
  %250 = vmatpush1.bf16.msra.mxu0 %v109
  %251 = vmatprep.subr.bf16.mxu0 %v102
  %252 = vmatpush1.bf16.msra.mxu0 %v101
  %253 = vmatprep.subr.bf16.mxu0 %v94
  %254 = vmatpush1.bf16.msra.mxu0 %v93
  %255 = vmatprep.subr.bf16.mxu0 %v86
  %256 = vmatpush1.bf16.msra.mxu0 %v85
  %257 = vmatprep.subr.bf16.mxu0 0
  %258 = vmatpush2.bf16.msra.mxu0 0
  %259 = vmatprep.subr.bf16.mxu0 0
  %260 = vmatpush2.bf16.msra.mxu0 0
  %261 = vmatprep.subr.bf16.mxu0 0
  %262 = vmatpush2.bf16.msra.mxu0 0
  %263 = vmatprep.subr.bf16.mxu0 0
  %264 = vmatpush2.bf16.msra.mxu0 0
  %265 = vmatprep.subr.bf16.mxu0 0
  %266 = vmatpush2.bf16.msra.mxu0 0
  %267 = vmatprep.subr.bf16.mxu0 0
  %268 = vmatpush2.bf16.msra.mxu0 0
  %269 = vmatprep.subr.bf16.mxu0 0
  %270 = vmatpush2.bf16.msra.mxu0 0
  %271 = vmatprep.subr.bf16.mxu0 0
  %272 = vmatpush2.bf16.msra.mxu0 0
  %273 = vmatprep.mubr.bf16.mxu0 0
  %274 = vmatmul.mubr.bf16.gmra.mxu0 %v157
  %v275 = vpop.f32.mrf.mxu0
  %v276 = vadd.f32 %v134, %v275
  %v277 = vpop.f32.mrf.mxu0
  %v278 = vadd.f32 %v138, %v277
  %v279 = vpop.f32.mrf.mxu0
  %v280 = vpop.f32.mrf.mxu0
  %281 = vdwg.mxu0
  %282 = vmatprep.subr.bf16.mxu0 0
  %283 = vmatpush1.bf16.msra.mxu0 0
  %284 = vmatprep.subr.bf16.mxu0 0
  %285 = vmatpush1.bf16.msra.mxu0 0
  %286 = vmatprep.subr.bf16.mxu0 0
  %287 = vmatpush1.bf16.msra.mxu0 0
  %288 = vmatprep.subr.bf16.mxu0 0
  %289 = vmatpush1.bf16.msra.mxu0 0
  %290 = vmatprep.subr.bf16.mxu0 %v112
  %291 = vmatpush1.bf16.msra.mxu0 %v111
  %292 = vmatprep.subr.bf16.mxu0 %v104
  %293 = vmatpush1.bf16.msra.mxu0 %v103
  %294 = vmatprep.subr.bf16.mxu0 %v96
  %295 = vmatpush1.bf16.msra.mxu0 %v95
  %296 = vmatprep.subr.bf16.mxu0 %v88
  %297 = vmatpush1.bf16.msra.mxu0 %v87
  %298 = vmatprep.subr.bf16.mxu0 0
  %299 = vmatpush2.bf16.msra.mxu0 0
  %300 = vmatprep.subr.bf16.mxu0 0
  %301 = vmatpush2.bf16.msra.mxu0 0
  %302 = vmatprep.subr.bf16.mxu0 0
  %303 = vmatpush2.bf16.msra.mxu0 0
  %304 = vmatprep.subr.bf16.mxu0 0
  %305 = vmatpush2.bf16.msra.mxu0 0
  %306 = vmatprep.subr.bf16.mxu0 0
  %307 = vmatpush2.bf16.msra.mxu0 0
  %308 = vmatprep.subr.bf16.mxu0 0
  %309 = vmatpush2.bf16.msra.mxu0 0
  %310 = vmatprep.subr.bf16.mxu0 0
  %311 = vmatpush2.bf16.msra.mxu0 0
  %312 = vmatprep.subr.bf16.mxu0 0
  %313 = vmatpush2.bf16.msra.mxu0 0
  %314 = vmatprep.mubr.bf16.mxu0 0
  %315 = vmatmul.mubr.bf16.gmra.mxu0 %v157
  %v316 = vpop.f32.mrf.mxu0
  %v317 = vadd.f32 %v142, %v316
  %v318 = vpop.f32.mrf.mxu0
  %v319 = vadd.f32 %v146, %v318
  %v320 = vpop.f32.mrf.mxu0
  %v321 = vpop.f32.mrf.mxu0
  %322 = vdwg.mxu0
  %v331 = vcombine.low %v194, %v196
  %v332 = vcombine.low %v235, %v237
  %v334 = vunpack.c.l.s4 1983009808
  %v335 = vunpack.c.0.s8 %v334
  %v336 = vlaneseq
  %v337 = vshrl.u32 %v336, 7
  %v338 = vsub.s32 %v335, %v337
  %v339 = vrot.slane %v331, %v338
  %v341 = vunpack.c.l.s4 1983009808
  %v342 = vunpack.c.0.s8 %v341
  %v343 = vlaneseq
  %v344 = vshrl.u32 %v343, 7
  %v345 = vsub.s32 %v342, %v344
  %v346 = vrot.slane %v332, %v345
  %v347 = vcombine.low %v339, %v346
  %v348 = vcombine.low %v276, %v278
  %v349 = vcombine.low %v317, %v319
  %v351 = vunpack.c.l.s4 1983009808
  %v352 = vunpack.c.0.s8 %v351
  %v353 = vlaneseq
  %v354 = vshrl.u32 %v353, 7
  %v355 = vsub.s32 %v352, %v354
  %v356 = vrot.slane %v348, %v355
  %v358 = vunpack.c.l.s4 1983009808
  %v359 = vunpack.c.0.s8 %v358
  %v360 = vlaneseq
  %v361 = vshrl.u32 %v360, 7
  %v362 = vsub.s32 %v359, %v361
  %v363 = vrot.slane %v349, %v362
  %v364 = vcombine.low %v356, %v363
  %367 = vst [vmem:[%s3] sm:$0xff] %v347
  %368 = vst [vmem:[%s3 + $0x8] sm:$0xff] %v364
  // Predicated region
  $region14: #{completion_transformer_forward.54} parent=0 // pred_check
    _
  $region15: #{completion_transformer_forward.54} parent=0 // pred_check_branch
    %370 = sbr.rel (0) target = $region17
  $region16: #{completion_transformer_forward.54} parent=0 // pred_region
    _
  $region17: #{completion_transformer_forward.54} parent=0 // pred_fallthru
    _
  // Predicated region
  $region18: #{completion_transformer_forward.54} parent=0 // pred_check
    _
  $region19: #{completion_transformer_forward.54} parent=0 // pred_check_branch
    %372 = sbr.rel (0) target = $region21
  $region20: #{completion_transformer_forward.54} parent=0 // pred_region
    _
  $region21: #{completion_transformer_forward.54} parent=0 // pred_fallthru
    _

// kernel: completion_transformer_forward.60
$region0: #{completion_transformer_forward.60}
  #allocation0 [shape = 'u32[]', space=smem, size = 0x4, offset = 0x4, fixed_abs, tag = 'smem constant byte address 0x4 - core index']
  #allocation1 [shape = 'u32[144,128]{1,0:T(1,128)}', space=vmem, size = 0x12000, scoped, tag = 'internal scratch']
  %s0 = inlined_call_operand.vmem [shape: f32[32,64], index: 0, kind: input, shape index: {}]
  %s1 = inlined_call_operand.vmem [shape: f32[64,128], index: 1, kind: input, shape index: {}]
  %s2 = inlined_call_operand.vmem [shape: f32[1,128], index: 2, kind: input, shape index: {}]
  %s3 = inlined_call_operand.vmem [shape: f32[32,128], index: 3, kind: output, shape index: {}]
  %s4 = sld [smem:[#allocation0]]
  $region22: #{completion_transformer_forward.60} parent=0
    _
  %s6 = ssub.s32 1, %s4
  %s7 = scalar_select 0, %s6, %s4
  // Predicated region
  $region2: #{completion_transformer_forward.60} parent=0 // pred_check
    _
  $region3: #{completion_transformer_forward.60} parent=0 // pred_check_branch
    %9 = sbr.rel (0) target = $region5
  $region4: #{completion_transformer_forward.60} parent=0 // pred_region
    _
  $region5: #{completion_transformer_forward.60} parent=0 // pred_fallthru
    _
  // Predicated region
  $region6: #{completion_transformer_forward.60} parent=0 // pred_check
    _
  $region7: #{completion_transformer_forward.60} parent=0 // pred_check_branch
    %11 = sbr.rel (0) target = $region9
  $region8: #{completion_transformer_forward.60} parent=0 // pred_region
    _
  $region9: #{completion_transformer_forward.60} parent=0 // pred_fallthru
    _
  // Predicated region
  $region10: #{completion_transformer_forward.60} parent=0 // pred_check
    _
  $region11: #{completion_transformer_forward.60} parent=0 // pred_check_branch
    %13 = sbr.rel (0) target = $region13
  $region12: #{completion_transformer_forward.60} parent=0 // pred_region
    _
  $region13: #{completion_transformer_forward.60} parent=0 // pred_fallthru
    _
  %v15 = vld [vmem:[%s0] sm:$0xff]
  %v16 = vld [vmem:[%s0 + $0x8] sm:$0xff]
  %v17 = vld [vmem:[%s0 + $0x10] sm:$0xff]
  %v18 = vld [vmem:[%s0 + $0x18] sm:$0xff]
  %v19 = vpack.c.bf16 %v16, %v15
  %v20 = vpack.c.bf16 %v18, %v17
  %v21 = vld [vmem:[%s1] sm:$0xff]
  %v22 = vld [vmem:[%s1 + $0x8] sm:$0xff]
  %v23 = vld [vmem:[%s1 + $0x10] sm:$0xff]
  %v24 = vld [vmem:[%s1 + $0x18] sm:$0xff]
  %v25 = vld [vmem:[%s1 + $0x20] sm:$0xff]
  %v26 = vld [vmem:[%s1 + $0x28] sm:$0xff]
  %v27 = vld [vmem:[%s1 + $0x30] sm:$0xff]
  %v28 = vld [vmem:[%s1 + $0x38] sm:$0xff]
  %v29 = vpack.c.bf16 %v22, %v21
  %v30 = vpack.c.bf16 %v24, %v23
  %v31 = vpack.c.bf16 %v26, %v25
  %v32 = vpack.c.bf16 %v28, %v27
  %v33 = vld [vmem:[%s2] sm:$0x1]
  %v35 = vlaneseq
  %v36 = vshrl.u32 %v35, 7
  %v37 = vsub.s32 0, %v36
  %v38 = vrot.slane %v33, %v37
  %vm40 = vcmask 523264
  %v42 = vsel %vm40, %v19, 0
  %v45 = vsel %vm40, %v20, 0
  %47 = vmatprep.subr.bf16.mxu0 0
  %48 = vmatpush1.bf16.msra.mxu0 0
  %49 = vmatprep.subr.bf16.mxu0 0
  %50 = vmatpush1.bf16.msra.mxu0 0
  %51 = vmatprep.subr.bf16.mxu0 0
  %52 = vmatpush1.bf16.msra.mxu0 0
  %53 = vmatprep.subr.bf16.mxu0 0
  %54 = vmatpush1.bf16.msra.mxu0 0
  %55 = vmatprep.subr.bf16.mxu0 0
  %56 = vmatpush1.bf16.msra.mxu0 %v32
  %57 = vmatprep.subr.bf16.mxu0 0
  %58 = vmatpush1.bf16.msra.mxu0 %v31
  %59 = vmatprep.subr.bf16.mxu0 0
  %60 = vmatpush1.bf16.msra.mxu0 %v30
  %61 = vmatprep.subr.bf16.mxu0 0
  %62 = vmatpush1.bf16.msra.mxu0 %v29
  %63 = vmatprep.subr.bf16.mxu0 0
  %64 = vmatpush2.bf16.msra.mxu0 0
  %65 = vmatprep.subr.bf16.mxu0 0
  %66 = vmatpush2.bf16.msra.mxu0 0
  %67 = vmatprep.subr.bf16.mxu0 0
  %68 = vmatpush2.bf16.msra.mxu0 0
  %69 = vmatprep.subr.bf16.mxu0 0
  %70 = vmatpush2.bf16.msra.mxu0 0
  %71 = vmatprep.subr.bf16.mxu0 0
  %72 = vmatpush2.bf16.msra.mxu0 0
  %73 = vmatprep.subr.bf16.mxu0 0
  %74 = vmatpush2.bf16.msra.mxu0 0
  %75 = vmatprep.subr.bf16.mxu0 0
  %76 = vmatpush2.bf16.msra.mxu0 0
  %77 = vmatprep.subr.bf16.mxu0 0
  %78 = vmatpush2.bf16.msra.mxu0 0
  %79 = vmatprep.mubr.bf16.mxu0 0
  %80 = vmatmul.mubr.bf16.gmra.mxu0 %v42
  %v81 = vpop.f32.mrf.mxu0
  %v82 = vadd.f32 %v38, %v81
  %v83 = vpop.f32.mrf.mxu0
  %v84 = vpop.f32.mrf.mxu0
  %v85 = vadd.f32 %v38, %v84
  %v86 = vpop.f32.mrf.mxu0
  %87 = vmatprep.mubr.bf16.mxu0 0
  %88 = vmatmul.mubr.bf16.gmra.mxu0 %v45
  %v89 = vpop.f32.mrf.mxu0
  %v90 = vadd.f32 %v38, %v89
  %v91 = vpop.f32.mrf.mxu0
  %v92 = vpop.f32.mrf.mxu0
  %v93 = vadd.f32 %v38, %v92
  %v94 = vpop.f32.mrf.mxu0
  %95 = vdwg.mxu0
  %96 = vst [vmem:[%s3] sm:$0xff] %v82
  %97 = vst [vmem:[%s3 + $0x8] sm:$0xff] %v85
  %98 = vst [vmem:[%s3 + $0x10] sm:$0xff] %v90
  %99 = vst [vmem:[%s3 + $0x18] sm:$0xff] %v93
  // Predicated region
  $region14: #{completion_transformer_forward.60} parent=0 // pred_check
    _
  $region15: #{completion_transformer_forward.60} parent=0 // pred_check_branch
    %101 = sbr.rel (0) target = $region17
  $region16: #{completion_transformer_forward.60} parent=0 // pred_region
    _
  $region17: #{completion_transformer_forward.60} parent=0 // pred_fallthru
    _
  // Predicated region
  $region18: #{completion_transformer_forward.60} parent=0 // pred_check
    _
  $region19: #{completion_transformer_forward.60} parent=0 // pred_check_branch
    %103 = sbr.rel (0) target = $region21
  $region20: #{completion_transformer_forward.60} parent=0 // pred_region
    _
  $region21: #{completion_transformer_forward.60} parent=0 // pred_fallthru
    _

// kernel: completion_transformer_forward.61
$region0: #{completion_transformer_forward.61}
  #allocation0 [shape = 'u32[]', space=smem, size = 0x4, offset = 0x4, fixed_abs, tag = 'smem constant byte address 0x4 - core index']
  #allocation1 [shape = 'u32[144,128]{1,0:T(1,128)}', space=vmem, size = 0x12000, scoped, tag = 'internal scratch']
  %s0 = inlined_call_operand.vmem [shape: f32[2,16,64], index: 0, kind: input, shape index: {}]
  %s1 = inlined_call_operand.vmem [shape: f32[2,16,128], index: 1, kind: input, shape index: {}]
  %s2 = inlined_call_operand.vmem [shape: f32[2,16,64], index: 2, kind: output, shape index: {}]
  %s3 = sld [smem:[#allocation0]]
  $region41: #{completion_transformer_forward.61} parent=0
    _
  %s5 = ssub.s32 1, %s3
  %s6 = scalar_select 0, %s5, %s3
  loop: start=0, step=1, limit=4
  $region2: #{completion_transformer_forward.61} parent=0 // loop_pre_header
    _
  $region3: #{completion_transformer_forward.61} parent=0 // loop_header
    %s8 = sphi 0, %s12
    %p9 = scmp.ge.s32.totalorder %s8, 4
    %s15 = sphi 0, %s27
    %s16 = sphi 0, %s23
    %s17 = sphi 0, %s15
    %s18 = sphi 0, %s16
    %s19 = sphi 0, %s17
    %s20 = sphi 0, %s18
    %s32 = sphi 0, %s34
    %s35 = sphi 0, %s32
    %s36 = sphi 0, %s35
    %s52 = sphi 0, %s36
    %s58 = sphi 0, %s60
    %s61 = sphi 0, %s58
    %s62 = sphi 0, %s61
    %s78 = sphi 0, %s62
    %s86 = sphi 0, %s88
    %s89 = sphi 0, %s86
    %s90 = sphi 0, %s89
    %s106 = sphi 0, %s90
  $region4: #{completion_transformer_forward.61} parent=0 // loop_header_branch
    %11 = sbr.rel (%p9) target = $region8
  $region5: #{completion_transformer_forward.61} parent=0 // loop_body
    %s13 = ssub.s32 %s8, 1
    %s14 = ssub.s32 %s8, 2
    %s21 = sadd.s32 1, %s16
    %p22 = scmp.ge.s32.totalorder %s21, 1
    %s23 = scalar_select %p22, 0, %s21
    %s24 = sadd.s32 1, %s15
    %s25 = scalar_select %p22, %s24, %s15
    %p26 = scmp.ge.s32.totalorder %s25, 2
    %s27 = scalar_select %p26, 0, %s25
    %s28 = ssub.s32 %s15, %s27
    %s29 = ssub.s32 %s16, %s23
    %s30 = sor.u32 %s28, %s29
    %p31 = scmp.eq.s32.totalorder %s30, 0
    %s33 = sadd.s32 %s32, 1
    %s34 = scalar_select %p31, %s32, %s33
    %p37 = pneg %p31
    %p38 = scmp.eq.s32.totalorder %s8, 1
    %p39 = por %p37, %p38
    %p40 = scmp.ne.s32.totalorder %s32, %s35
    %p41 = scmp.eq.s32.totalorder %s8, 0
    %p42 = por %p40, %p41
    %p43 = scmp.ne.s32.totalorder %s32, %s35
    %p44 = scmp.eq.s32.totalorder %s13, 1
    %p45 = por %p43, %p44
    %p46 = scmp.ne.s32.totalorder %s35, %s36
    %p47 = scmp.eq.s32.totalorder %s13, 0
    %p48 = por %p46, %p47
    %p49 = scmp.ne.s32.totalorder %s35, %s36
    %p50 = scmp.eq.s32.totalorder %s14, 1
    %p51 = por %p49, %p50
    %p53 = scmp.ne.s32.totalorder %s36, %s52
    %p54 = scmp.eq.s32.totalorder %s14, 0
    %p55 = por %p53, %p54
    %s56 = ssub.s32 %s15, %s27
    %p57 = scmp.eq.s32.totalorder %s56, 0
    %s59 = sadd.s32 %s58, 1
    %s60 = scalar_select %p57, %s58, %s59
    %p63 = pneg %p57
    %p64 = scmp.eq.s32.totalorder %s8, 1
    %p65 = por %p63, %p64
    %p66 = scmp.ne.s32.totalorder %s58, %s61
    %p67 = scmp.eq.s32.totalorder %s8, 0
    %p68 = por %p66, %p67
    %p69 = scmp.ne.s32.totalorder %s58, %s61
    %p70 = scmp.eq.s32.totalorder %s13, 1
    %p71 = por %p69, %p70
    %p72 = scmp.ne.s32.totalorder %s61, %s62
    %p73 = scmp.eq.s32.totalorder %s13, 0
    %p74 = por %p72, %p73
    %p75 = scmp.ne.s32.totalorder %s61, %s62
    %p76 = scmp.eq.s32.totalorder %s14, 1
    %p77 = por %p75, %p76
    %p79 = scmp.ne.s32.totalorder %s62, %s78
    %p80 = scmp.eq.s32.totalorder %s14, 0
    %p81 = por %p79, %p80
    %s82 = ssub.s32 %s15, %s27
    %s83 = ssub.s32 %s16, %s23
    %s84 = sor.u32 %s82, %s83
    %p85 = scmp.eq.s32.totalorder %s84, 0
    %s87 = sadd.s32 %s86, 1
    %s88 = scalar_select %p85, %s86, %s87
    %p91 = pneg %p85
    %p92 = scmp.eq.s32.totalorder %s8, 1
    %p93 = por %p91, %p92
    %p94 = scmp.ne.s32.totalorder %s86, %s89
    %p95 = scmp.eq.s32.totalorder %s8, 0
    %p96 = por %p94, %p95
    %p97 = scmp.ne.s32.totalorder %s86, %s89
    %p98 = scmp.eq.s32.totalorder %s13, 1
    %p99 = por %p97, %p98
    %p100 = scmp.ne.s32.totalorder %s89, %s90
    %p101 = scmp.eq.s32.totalorder %s13, 0
    %p102 = por %p100, %p101
    %p103 = scmp.ne.s32.totalorder %s89, %s90
    %p104 = scmp.eq.s32.totalorder %s14, 1
    %p105 = por %p103, %p104
    %p107 = scmp.ne.s32.totalorder %s90, %s106
    %p108 = scmp.eq.s32.totalorder %s14, 0
    %p109 = por %p107, %p108
    %p110 = scmp.le.s32.totalorder 1, %s8
    %p111 = scmp.lt.s32.totalorder %s8, 3
    %p112 = pnand %p110, %p111
    %p113 = pneg %p112
    // Predicated region
    $region9: #{completion_transformer_forward.61} parent=5 // pred_check
      _
    $region10: #{completion_transformer_forward.61} parent=5 // pred_check_branch
      %115 = sbr.rel (%p112) target = $region12
    $region11: #{completion_transformer_forward.61} parent=5 // pred_region
      %s116 = ssub.s32 %s8, 1
    $region12: #{completion_transformer_forward.61} parent=5 // pred_fallthru
      _
    %p117 = scmp.lt.s32.totalorder %s8, 2
    // Predicated region
    $region13: #{completion_transformer_forward.61} parent=5 // pred_check
      %p118 = pneg %p117
    $region14: #{completion_transformer_forward.61} parent=5 // pred_check_branch
      %120 = sbr.rel (%p118) target = $region16
    $region15: #{completion_transformer_forward.61} parent=5 // pred_region
      // Predicated region
      $region17: #{completion_transformer_forward.61} parent=15 // pred_check
        %p121 = pneg %p42
      $region18: #{completion_transformer_forward.61} parent=15 // pred_check_branch
        %123 = sbr.rel (%p121) target = $region20
      $region19: #{completion_transformer_forward.61} parent=15 // pred_region
        %s124 = smul.u32 2, %s16
        %p125 = scmp.lt.s32.totalorder %s15, 1
        %s126 = scalar_select %p125, %s15, 1
        %p127 = scmp.lt.s32.totalorder %s124, 1
        %s128 = scalar_select %p127, %s124, 1
        %s129 = smul.addr %s126, 2
        %s130 = sadd.s32 %s128, %s129
        %s131 = smul.addr %s130, 8
        %s132 = scalar_lea.vmem %s0, %s131
        %s133 = smul.u32 2, %s16
      $region20: #{completion_transformer_forward.61} parent=15 // pred_fallthru
        _
      // Predicated region
      $region21: #{completion_transformer_forward.61} parent=15 // pred_check
        %p134 = pneg %p68
      $region22: #{completion_transformer_forward.61} parent=15 // pred_check_branch
        %136 = sbr.rel (%p134) target = $region24
      $region23: #{completion_transformer_forward.61} parent=15 // pred_region
        %p137 = scmp.lt.s32.totalorder %s15, 1
        %s138 = scalar_select %p137, %s15, 1
        %s139 = smul.addr %s138, 2
        %s140 = smul.addr %s139, 8
        %s141 = scalar_lea.vmem %s1, %s140
      $region24: #{completion_transformer_forward.61} parent=15 // pred_fallthru
        _
    $region16: #{completion_transformer_forward.61} parent=5 // pred_fallthru
      _
    %p142 = scmp.le.s32.totalorder 1, %s8
    %p143 = scmp.lt.s32.totalorder %s8, 3
    %p144 = pnand %p142, %p143
    %p145 = pneg %p144
    // Predicated region
    $region25: #{completion_transformer_forward.61} parent=5 // pred_check
      _
    $region26: #{completion_transformer_forward.61} parent=5 // pred_check_branch
      %147 = sbr.rel (%p144) target = $region28
    $region27: #{completion_transformer_forward.61} parent=5 // pred_region
      %s148 = ssub.s32 %s8, 1
      %s149 = smul.u32 2, %s18
      %p150 = scmp.lt.s32.totalorder %s17, 1
      %s151 = scalar_select %p150, %s17, 1
      %p152 = scmp.lt.s32.totalorder %s149, 1
      %s153 = scalar_select %p152, %s149, 1
      %s154 = smul.addr %s151, 2
      %s155 = sadd.s32 %s153, %s154
      %s156 = smul.addr %s155, 8
      %s157 = scalar_lea.vmem %s0, %s156
      %p158 = pneg %p48
      %p159 = pneg %p45
      %p160 = scmp.lt.s32.totalorder %s17, 1
      %s161 = scalar_select %p160, %s17, 1
      %s162 = smul.addr %s161, 2
      %s163 = smul.addr %s162, 8
      %s164 = scalar_lea.vmem %s1, %s163
      %p165 = pneg %p74
      %p166 = pneg %p71
      %p167 = pneg %p102
      %p168 = pneg %p99
      %s169 = smul.u32 2, %s18
      %p170 = scmp.lt.s32.totalorder %s17, 1
      %s171 = scalar_select %p170, %s17, 1
      %p172 = scmp.lt.s32.totalorder %s169, 1
      %s173 = scalar_select %p172, %s169, 1
      %s174 = smul.addr %s171, 2
      %s175 = sadd.s32 %s173, %s174
      %s176 = smul.addr %s175, 8
      %s177 = scalar_lea.vmem %s2, %s176
      %s178 = smul.u32 2, %s18
      %p179 = scmp.lt.s32.totalorder %s17, 1
      %s180 = scalar_select %p179, %s17, 1
      %p181 = scmp.lt.s32.totalorder %s178, 1
      %s182 = scalar_select %p181, %s178, 1
      %s183 = smul.addr %s180, 2
      %s184 = sadd.s32 %s182, %s183
      %s185 = smul.addr %s184, 8
      %s186 = scalar_lea.vmem %s0, %s185
      %s187 = smul.u32 2, %s18
      %p188 = scmp.lt.s32.totalorder %s17, 1
      %s189 = scalar_select %p188, %s17, 1
      %s190 = smul.addr %s189, 2
      %s191 = smul.addr %s190, 8
      %s192 = scalar_lea.vmem %s1, %s191
      %s193 = smul.u32 2, %s18
      %p194 = scmp.lt.s32.totalorder %s17, 1
      %s195 = scalar_select %p194, %s17, 1
      %p196 = scmp.lt.s32.totalorder %s193, 1
      %s197 = scalar_select %p196, %s193, 1
      %s198 = smul.addr %s195, 2
      %s199 = sadd.s32 %s197, %s198
      %s200 = smul.addr %s199, 8
      %s201 = scalar_lea.vmem %s2, %s200
      %s202 = smul.u32 2, %s18
      %v204 = vld [vmem:[%s186] sm:$0xff]
      %v205 = vld [vmem:[%s186 + $0x8] sm:$0xff]
      %v206 = vld [vmem:[%s192] sm:$0xff]
      %v207 = vld [vmem:[%s192 + $0x8] sm:$0xff]
      %v208 = vpack.c.bf16 %v205, %v204
      %v209 = vpack.c.bf16 %v207, %v206
      %vm210 = vcmask 64512
      %v212 = vsel %vm210, %v208, 0
      %v215 = vsel %vm210, %v209, 0
      %217 = vmatprep.subr.bf16.mxu0 0
      %218 = vmatpush1.bf16.xpose.msra.mxu0 0
      %219 = vmatprep.subr.bf16.mxu0 0
      %220 = vmatpush1.bf16.xpose.msra.mxu0 0
      %221 = vmatprep.subr.bf16.mxu0 0
      %222 = vmatpush1.bf16.xpose.msra.mxu0 0
      %223 = vmatprep.subr.bf16.mxu0 0
      %224 = vmatpush1.bf16.xpose.msra.mxu0 0
      %225 = vmatprep.subr.bf16.mxu0 0
      %226 = vmatpush1.bf16.xpose.msra.mxu0 0
      %227 = vmatprep.subr.bf16.mxu0 0
      %228 = vmatpush1.bf16.xpose.msra.mxu0 0
      %229 = vmatprep.subr.bf16.mxu0 0
      %230 = vmatpush1.bf16.xpose.msra.mxu0 0
      %231 = vmatprep.subr.bf16.mxu0 0
      %232 = vmatpush1.bf16.xpose.msra.mxu0 %v215
      %233 = vmatprep.subr.bf16.mxu0 0
      %234 = vmatpush2.bf16.xpose.msra.mxu0 0
      %235 = vmatprep.subr.bf16.mxu0 0
      %236 = vmatpush2.bf16.xpose.msra.mxu0 0
      %237 = vmatprep.subr.bf16.mxu0 0
      %238 = vmatpush2.bf16.xpose.msra.mxu0 0
      %239 = vmatprep.subr.bf16.mxu0 0
      %240 = vmatpush2.bf16.xpose.msra.mxu0 0
      %241 = vmatprep.subr.bf16.mxu0 0
      %242 = vmatpush2.bf16.xpose.msra.mxu0 0
      %243 = vmatprep.subr.bf16.mxu0 0
      %244 = vmatpush2.bf16.xpose.msra.mxu0 0
      %245 = vmatprep.subr.bf16.mxu0 0
      %246 = vmatpush2.bf16.xpose.msra.mxu0 0
      %247 = vmatprep.subr.bf16.mxu0 0
      %248 = vmatpush2.bf16.xpose.msra.mxu0 0
      %249 = vmatprep.mubr.bf16.mxu0 0
      %250 = vmatmul.mubr.bf16.gmra.mxu0 %v212
      %v251 = vpop.f32.mrf.mxu0
      %v252 = vadd.f32 0.0, %v251
      %v253 = vpop.f32.mrf.mxu0
      %v254 = vpop.f32.mrf.mxu0
      %v255 = vadd.f32 0.0, %v254
      %v256 = vpop.f32.mrf.mxu0
      %257 = vdwg.mxu0
      %v258 = vmul.f32 %v252, 0.35355338
      %v259 = vmul.f32 %v255, 0.35355338
      %vm260 = vcmask 130048
      %v261 = vsel %vm260, %v258, -inf
      %262 = vmax.xlane.f32.xlu0 %v261
      %v263 = vpop.xlane.xlu0 %262
      %v264 = vsel %vm260, %v259, -inf
      %265 = vmax.xlane.f32.xlu0 %v264
      %v266 = vpop.xlane.xlu0 %265
      %v267 = vsub.f32 %v258, %v263
      %v268 = vsub.f32 %v259, %v266
      %v269 = vmul.f32 %v267, 1.442695
      %v270 = vpow.pop %v269
      %v271 = vmul.f32 %v268, 1.442695
      %v272 = vpow.pop %v271
      %v273 = vsel %vm260, %v270, 0.0
      %274 = vadd.xlane.f32.xlu0 %v273
      %v275 = vpop.xlane.xlu0 %274
      %v276 = vsel %vm260, %v272, 0.0
      %277 = vadd.xlane.f32.xlu0 %v276
      %v278 = vpop.xlane.xlu0 %277
      %v279 = vrcp.pop %v275
      %v280 = vrcp.pop %v278
      %v281 = vmul.f32 %v270, %v279
      %v282 = vmul.f32 %v272, %v280
      %v283 = vpack.c.bf16 %v282, %v281
      %285 = vrot.lane.b32.xlu0 %v209, 64
      %v286 = vpop.permute.xlu0 %285
      %v289 = vsel %vm260, %v283, 0
      %291 = vmatprep.subr.bf16.mxu0 0
      %292 = vmatpush1.bf16.msra.mxu0 0
      %293 = vmatprep.subr.bf16.mxu0 0
      %294 = vmatpush1.bf16.msra.mxu0 0
      %295 = vmatprep.subr.bf16.mxu0 0
      %296 = vmatpush1.bf16.msra.mxu0 0
      %297 = vmatprep.subr.bf16.mxu0 0
      %298 = vmatpush1.bf16.msra.mxu0 0
      %299 = vmatprep.subr.bf16.mxu0 0
      %300 = vmatpush1.bf16.msra.mxu0 0
      %301 = vmatprep.subr.bf16.mxu0 0
      %302 = vmatpush1.bf16.msra.mxu0 0
      %303 = vmatprep.subr.bf16.mxu0 0
      %304 = vmatpush1.bf16.msra.mxu0 0
      %305 = vmatprep.subr.bf16.mxu0 0
      %306 = vmatpush1.bf16.msra.mxu0 %v286
      %307 = vmatprep.subr.bf16.mxu0 0
      %308 = vmatpush2.bf16.msra.mxu0 0
      %309 = vmatprep.subr.bf16.mxu0 0
      %310 = vmatpush2.bf16.msra.mxu0 0
      %311 = vmatprep.subr.bf16.mxu0 0
      %312 = vmatpush2.bf16.msra.mxu0 0
      %313 = vmatprep.subr.bf16.mxu0 0
      %314 = vmatpush2.bf16.msra.mxu0 0
      %315 = vmatprep.subr.bf16.mxu0 0
      %316 = vmatpush2.bf16.msra.mxu0 0
      %317 = vmatprep.subr.bf16.mxu0 0
      %318 = vmatpush2.bf16.msra.mxu0 0
      %319 = vmatprep.subr.bf16.mxu0 0
      %320 = vmatpush2.bf16.msra.mxu0 0
      %321 = vmatprep.subr.bf16.mxu0 0
      %322 = vmatpush2.bf16.msra.mxu0 0
      %323 = vmatprep.mubr.bf16.mxu0 0
      %324 = vmatmul.mubr.bf16.gmra.mxu0 %v289
      %v325 = vpop.f32.mrf.mxu0
      %v326 = vadd.f32 0.0, %v325
      %v327 = vpop.f32.mrf.mxu0
      %v328 = vpop.f32.mrf.mxu0
      %v329 = vadd.f32 0.0, %v328
      %v330 = vpop.f32.mrf.mxu0
      %331 = vdwg.mxu0
      %333 = vrot.lane.b32.xlu0 %v208, 120
      %v334 = vpop.permute.xlu0 %333
      %335 = vrot.lane.b32.xlu0 %v209, 120
      %v336 = vpop.permute.xlu0 %335
      %v338 = vsel %vm210, %v334, 0
      %v341 = vsel %vm210, %v336, 0
      %343 = vmatprep.subr.bf16.mxu0 0
      %344 = vmatpush1.bf16.xpose.msra.mxu0 0
      %345 = vmatprep.subr.bf16.mxu0 0
      %346 = vmatpush1.bf16.xpose.msra.mxu0 0
      %347 = vmatprep.subr.bf16.mxu0 0
      %348 = vmatpush1.bf16.xpose.msra.mxu0 0
      %349 = vmatprep.subr.bf16.mxu0 0
      %350 = vmatpush1.bf16.xpose.msra.mxu0 0
      %351 = vmatprep.subr.bf16.mxu0 0
      %352 = vmatpush1.bf16.xpose.msra.mxu0 0
      %353 = vmatprep.subr.bf16.mxu0 0
      %354 = vmatpush1.bf16.xpose.msra.mxu0 0
      %355 = vmatprep.subr.bf16.mxu0 0
      %356 = vmatpush1.bf16.xpose.msra.mxu0 0
      %357 = vmatprep.subr.bf16.mxu0 0
      %358 = vmatpush1.bf16.xpose.msra.mxu0 %v341
      %359 = vmatprep.subr.bf16.mxu0 0
      %360 = vmatpush2.bf16.xpose.msra.mxu0 0
      %361 = vmatprep.subr.bf16.mxu0 0
      %362 = vmatpush2.bf16.xpose.msra.mxu0 0
      %363 = vmatprep.subr.bf16.mxu0 0
      %364 = vmatpush2.bf16.xpose.msra.mxu0 0
      %365 = vmatprep.subr.bf16.mxu0 0
      %366 = vmatpush2.bf16.xpose.msra.mxu0 0
      %367 = vmatprep.subr.bf16.mxu0 0
      %368 = vmatpush2.bf16.xpose.msra.mxu0 0
      %369 = vmatprep.subr.bf16.mxu0 0
      %370 = vmatpush2.bf16.xpose.msra.mxu0 0
      %371 = vmatprep.subr.bf16.mxu0 0
      %372 = vmatpush2.bf16.xpose.msra.mxu0 0
      %373 = vmatprep.subr.bf16.mxu0 0
      %374 = vmatpush2.bf16.xpose.msra.mxu0 0
      %375 = vmatprep.mubr.bf16.mxu0 0
      %376 = vmatmul.mubr.bf16.gmra.mxu0 %v338
      %v377 = vpop.f32.mrf.mxu0
      %v378 = vadd.f32 0.0, %v377
      %v379 = vpop.f32.mrf.mxu0
      %v380 = vpop.f32.mrf.mxu0
      %v381 = vadd.f32 0.0, %v380
      %v382 = vpop.f32.mrf.mxu0
      %383 = vdwg.mxu0
      %v384 = vmul.f32 %v378, 0.35355338
      %v385 = vmul.f32 %v381, 0.35355338
      %v386 = vsel %vm260, %v384, -inf
      %387 = vmax.xlane.f32.xlu0 %v386
      %v388 = vpop.xlane.xlu0 %387
      %v389 = vsel %vm260, %v385, -inf
      %390 = vmax.xlane.f32.xlu0 %v389
      %v391 = vpop.xlane.xlu0 %390
      %v392 = vsub.f32 %v384, %v388
      %v393 = vsub.f32 %v385, %v391
      %v394 = vmul.f32 %v392, 1.442695
      %v395 = vpow.pop %v394
      %v396 = vmul.f32 %v393, 1.442695
      %v397 = vpow.pop %v396
      %v398 = vsel %vm260, %v395, 0.0
      %399 = vadd.xlane.f32.xlu0 %v398
      %v400 = vpop.xlane.xlu0 %399
      %v401 = vsel %vm260, %v397, 0.0
      %402 = vadd.xlane.f32.xlu0 %v401
      %v403 = vpop.xlane.xlu0 %402
      %v404 = vrcp.pop %v400
      %v405 = vrcp.pop %v403
      %v406 = vmul.f32 %v395, %v404
      %v407 = vmul.f32 %v397, %v405
      %v408 = vpack.c.bf16 %v407, %v406
      %409 = vrot.lane.b32.xlu0 %v209, 56
      %v410 = vpop.permute.xlu0 %409
      %v413 = vsel %vm260, %v408, 0
      %415 = vmatprep.subr.bf16.mxu0 0
      %416 = vmatpush1.bf16.msra.mxu0 0
      %417 = vmatprep.subr.bf16.mxu0 0
      %418 = vmatpush1.bf16.msra.mxu0 0
      %419 = vmatprep.subr.bf16.mxu0 0
      %420 = vmatpush1.bf16.msra.mxu0 0
      %421 = vmatprep.subr.bf16.mxu0 0
      %422 = vmatpush1.bf16.msra.mxu0 0
      %423 = vmatprep.subr.bf16.mxu0 0
      %424 = vmatpush1.bf16.msra.mxu0 0
      %425 = vmatprep.subr.bf16.mxu0 0
      %426 = vmatpush1.bf16.msra.mxu0 0
      %427 = vmatprep.subr.bf16.mxu0 0
      %428 = vmatpush1.bf16.msra.mxu0 0
      %429 = vmatprep.subr.bf16.mxu0 0
      %430 = vmatpush1.bf16.msra.mxu0 %v410
      %431 = vmatprep.subr.bf16.mxu0 0
      %432 = vmatpush2.bf16.msra.mxu0 0
      %433 = vmatprep.subr.bf16.mxu0 0
      %434 = vmatpush2.bf16.msra.mxu0 0
      %435 = vmatprep.subr.bf16.mxu0 0
      %436 = vmatpush2.bf16.msra.mxu0 0
      %437 = vmatprep.subr.bf16.mxu0 0
      %438 = vmatpush2.bf16.msra.mxu0 0
      %439 = vmatprep.subr.bf16.mxu0 0
      %440 = vmatpush2.bf16.msra.mxu0 0
      %441 = vmatprep.subr.bf16.mxu0 0
      %442 = vmatpush2.bf16.msra.mxu0 0
      %443 = vmatprep.subr.bf16.mxu0 0
      %444 = vmatpush2.bf16.msra.mxu0 0
      %445 = vmatprep.subr.bf16.mxu0 0
      %446 = vmatpush2.bf16.msra.mxu0 0
      %447 = vmatprep.mubr.bf16.mxu0 0
      %448 = vmatmul.mubr.bf16.gmra.mxu0 %v413
      %v449 = vpop.f32.mrf.mxu0
      %v450 = vadd.f32 0.0, %v449
      %v451 = vpop.f32.mrf.mxu0
      %v452 = vpop.f32.mrf.mxu0
      %v453 = vadd.f32 0.0, %v452
      %v454 = vpop.f32.mrf.mxu0
      %455 = vdwg.mxu0
      %456 = vrot.lane.b32.xlu0 %v208, 112
      %v457 = vpop.permute.xlu0 %456
      %458 = vrot.lane.b32.xlu0 %v209, 112
      %v459 = vpop.permute.xlu0 %458
      %v461 = vsel %vm210, %v457, 0
      %v464 = vsel %vm210, %v459, 0
      %466 = vmatprep.subr.bf16.mxu0 0
      %467 = vmatpush1.bf16.xpose.msra.mxu0 0
      %468 = vmatprep.subr.bf16.mxu0 0
      %469 = vmatpush1.bf16.xpose.msra.mxu0 0
      %470 = vmatprep.subr.bf16.mxu0 0
      %471 = vmatpush1.bf16.xpose.msra.mxu0 0
      %472 = vmatprep.subr.bf16.mxu0 0
      %473 = vmatpush1.bf16.xpose.msra.mxu0 0
      %474 = vmatprep.subr.bf16.mxu0 0
      %475 = vmatpush1.bf16.xpose.msra.mxu0 0
      %476 = vmatprep.subr.bf16.mxu0 0
      %477 = vmatpush1.bf16.xpose.msra.mxu0 0
      %478 = vmatprep.subr.bf16.mxu0 0
      %479 = vmatpush1.bf16.xpose.msra.mxu0 0
      %480 = vmatprep.subr.bf16.mxu0 0
      %481 = vmatpush1.bf16.xpose.msra.mxu0 %v464
      %482 = vmatprep.subr.bf16.mxu0 0
      %483 = vmatpush2.bf16.xpose.msra.mxu0 0
      %484 = vmatprep.subr.bf16.mxu0 0
      %485 = vmatpush2.bf16.xpose.msra.mxu0 0
      %486 = vmatprep.subr.bf16.mxu0 0
      %487 = vmatpush2.bf16.xpose.msra.mxu0 0
      %488 = vmatprep.subr.bf16.mxu0 0
      %489 = vmatpush2.bf16.xpose.msra.mxu0 0
      %490 = vmatprep.subr.bf16.mxu0 0
      %491 = vmatpush2.bf16.xpose.msra.mxu0 0
      %492 = vmatprep.subr.bf16.mxu0 0
      %493 = vmatpush2.bf16.xpose.msra.mxu0 0
      %494 = vmatprep.subr.bf16.mxu0 0
      %495 = vmatpush2.bf16.xpose.msra.mxu0 0
      %496 = vmatprep.subr.bf16.mxu0 0
      %497 = vmatpush2.bf16.xpose.msra.mxu0 0
      %498 = vmatprep.mubr.bf16.mxu0 0
      %499 = vmatmul.mubr.bf16.gmra.mxu0 %v461
      %v500 = vpop.f32.mrf.mxu0
      %v501 = vadd.f32 0.0, %v500
      %v502 = vpop.f32.mrf.mxu0
      %v503 = vpop.f32.mrf.mxu0
      %v504 = vadd.f32 0.0, %v503
      %v505 = vpop.f32.mrf.mxu0
      %506 = vdwg.mxu0
      %v507 = vmul.f32 %v501, 0.35355338
      %v508 = vmul.f32 %v504, 0.35355338
      %v509 = vsel %vm260, %v507, -inf
      %510 = vmax.xlane.f32.xlu0 %v509
      %v511 = vpop.xlane.xlu0 %510
      %v512 = vsel %vm260, %v508, -inf
      %513 = vmax.xlane.f32.xlu0 %v512
      %v514 = vpop.xlane.xlu0 %513
      %v515 = vsub.f32 %v507, %v511
      %v516 = vsub.f32 %v508, %v514
      %v517 = vmul.f32 %v515, 1.442695
      %v518 = vpow.pop %v517
      %v519 = vmul.f32 %v516, 1.442695
      %v520 = vpow.pop %v519
      %v521 = vsel %vm260, %v518, 0.0
      %522 = vadd.xlane.f32.xlu0 %v521
      %v523 = vpop.xlane.xlu0 %522
      %v524 = vsel %vm260, %v520, 0.0
      %525 = vadd.xlane.f32.xlu0 %v524
      %v526 = vpop.xlane.xlu0 %525
      %v527 = vrcp.pop %v523
      %v528 = vrcp.pop %v526
      %v529 = vmul.f32 %v518, %v527
      %v530 = vmul.f32 %v520, %v528
      %v531 = vpack.c.bf16 %v530, %v529
      %532 = vrot.lane.b32.xlu0 %v209, 48
      %v533 = vpop.permute.xlu0 %532
      %v536 = vsel %vm260, %v531, 0
      %538 = vmatprep.subr.bf16.mxu0 0
      %539 = vmatpush1.bf16.msra.mxu0 0
      %540 = vmatprep.subr.bf16.mxu0 0
      %541 = vmatpush1.bf16.msra.mxu0 0
      %542 = vmatprep.subr.bf16.mxu0 0
      %543 = vmatpush1.bf16.msra.mxu0 0
      %544 = vmatprep.subr.bf16.mxu0 0
      %545 = vmatpush1.bf16.msra.mxu0 0
      %546 = vmatprep.subr.bf16.mxu0 0
      %547 = vmatpush1.bf16.msra.mxu0 0
      %548 = vmatprep.subr.bf16.mxu0 0
      %549 = vmatpush1.bf16.msra.mxu0 0
      %550 = vmatprep.subr.bf16.mxu0 0
      %551 = vmatpush1.bf16.msra.mxu0 0
      %552 = vmatprep.subr.bf16.mxu0 0
      %553 = vmatpush1.bf16.msra.mxu0 %v533
      %554 = vmatprep.subr.bf16.mxu0 0
      %555 = vmatpush2.bf16.msra.mxu0 0
      %556 = vmatprep.subr.bf16.mxu0 0
      %557 = vmatpush2.bf16.msra.mxu0 0
      %558 = vmatprep.subr.bf16.mxu0 0
      %559 = vmatpush2.bf16.msra.mxu0 0
      %560 = vmatprep.subr.bf16.mxu0 0
      %561 = vmatpush2.bf16.msra.mxu0 0
      %562 = vmatprep.subr.bf16.mxu0 0
      %563 = vmatpush2.bf16.msra.mxu0 0
      %564 = vmatprep.subr.bf16.mxu0 0
      %565 = vmatpush2.bf16.msra.mxu0 0
      %566 = vmatprep.subr.bf16.mxu0 0
      %567 = vmatpush2.bf16.msra.mxu0 0
      %568 = vmatprep.subr.bf16.mxu0 0
      %569 = vmatpush2.bf16.msra.mxu0 0
      %570 = vmatprep.mubr.bf16.mxu0 0
      %571 = vmatmul.mubr.bf16.gmra.mxu0 %v536
      %v572 = vpop.f32.mrf.mxu0
      %v573 = vadd.f32 0.0, %v572
      %v574 = vpop.f32.mrf.mxu0
      %v575 = vpop.f32.mrf.mxu0
      %v576 = vadd.f32 0.0, %v575
      %v577 = vpop.f32.mrf.mxu0
      %578 = vdwg.mxu0
      %579 = vrot.lane.b32.xlu0 %v208, 104
      %v580 = vpop.permute.xlu0 %579
      %581 = vrot.lane.b32.xlu0 %v209, 104
      %v582 = vpop.permute.xlu0 %581
      %v584 = vsel %vm210, %v580, 0
      %v587 = vsel %vm210, %v582, 0
      %589 = vmatprep.subr.bf16.mxu0 0
      %590 = vmatpush1.bf16.xpose.msra.mxu0 0
      %591 = vmatprep.subr.bf16.mxu0 0
      %592 = vmatpush1.bf16.xpose.msra.mxu0 0
      %593 = vmatprep.subr.bf16.mxu0 0
      %594 = vmatpush1.bf16.xpose.msra.mxu0 0
      %595 = vmatprep.subr.bf16.mxu0 0
      %596 = vmatpush1.bf16.xpose.msra.mxu0 0
      %597 = vmatprep.subr.bf16.mxu0 0
      %598 = vmatpush1.bf16.xpose.msra.mxu0 0
      %599 = vmatprep.subr.bf16.mxu0 0
      %600 = vmatpush1.bf16.xpose.msra.mxu0 0
      %601 = vmatprep.subr.bf16.mxu0 0
      %602 = vmatpush1.bf16.xpose.msra.mxu0 0
      %603 = vmatprep.subr.bf16.mxu0 0
      %604 = vmatpush1.bf16.xpose.msra.mxu0 %v587
      %605 = vmatprep.subr.bf16.mxu0 0
      %606 = vmatpush2.bf16.xpose.msra.mxu0 0
      %607 = vmatprep.subr.bf16.mxu0 0
      %608 = vmatpush2.bf16.xpose.msra.mxu0 0
      %609 = vmatprep.subr.bf16.mxu0 0
      %610 = vmatpush2.bf16.xpose.msra.mxu0 0
      %611 = vmatprep.subr.bf16.mxu0 0
      %612 = vmatpush2.bf16.xpose.msra.mxu0 0
      %613 = vmatprep.subr.bf16.mxu0 0
      %614 = vmatpush2.bf16.xpose.msra.mxu0 0
      %615 = vmatprep.subr.bf16.mxu0 0
      %616 = vmatpush2.bf16.xpose.msra.mxu0 0
      %617 = vmatprep.subr.bf16.mxu0 0
      %618 = vmatpush2.bf16.xpose.msra.mxu0 0
      %619 = vmatprep.subr.bf16.mxu0 0
      %620 = vmatpush2.bf16.xpose.msra.mxu0 0
      %621 = vmatprep.mubr.bf16.mxu0 0
      %622 = vmatmul.mubr.bf16.gmra.mxu0 %v584
      %v623 = vpop.f32.mrf.mxu0
      %v624 = vadd.f32 0.0, %v623
      %v625 = vpop.f32.mrf.mxu0
      %v626 = vpop.f32.mrf.mxu0
      %v627 = vadd.f32 0.0, %v626
      %v628 = vpop.f32.mrf.mxu0
      %629 = vdwg.mxu0
      %v630 = vmul.f32 %v624, 0.35355338
      %v631 = vmul.f32 %v627, 0.35355338
      %v632 = vsel %vm260, %v630, -inf
      %633 = vmax.xlane.f32.xlu0 %v632
      %v634 = vpop.xlane.xlu0 %633
      %v635 = vsel %vm260, %v631, -inf
      %636 = vmax.xlane.f32.xlu0 %v635
      %v637 = vpop.xlane.xlu0 %636
      %v638 = vsub.f32 %v630, %v634
      %v639 = vsub.f32 %v631, %v637
      %v640 = vmul.f32 %v638, 1.442695
      %v641 = vpow.pop %v640
      %v642 = vmul.f32 %v639, 1.442695
      %v643 = vpow.pop %v642
      %v644 = vsel %vm260, %v641, 0.0
      %645 = vadd.xlane.f32.xlu0 %v644
      %v646 = vpop.xlane.xlu0 %645
      %v647 = vsel %vm260, %v643, 0.0
      %648 = vadd.xlane.f32.xlu0 %v647
      %v649 = vpop.xlane.xlu0 %648
      %v650 = vrcp.pop %v646
      %v651 = vrcp.pop %v649
      %v652 = vmul.f32 %v641, %v650
      %v653 = vmul.f32 %v643, %v651
      %v654 = vpack.c.bf16 %v653, %v652
      %655 = vrot.lane.b32.xlu0 %v209, 40
      %v656 = vpop.permute.xlu0 %655
      %v659 = vsel %vm260, %v654, 0
      %661 = vmatprep.subr.bf16.mxu0 0
      %662 = vmatpush1.bf16.msra.mxu0 0
      %663 = vmatprep.subr.bf16.mxu0 0
      %664 = vmatpush1.bf16.msra.mxu0 0
      %665 = vmatprep.subr.bf16.mxu0 0
      %666 = vmatpush1.bf16.msra.mxu0 0
      %667 = vmatprep.subr.bf16.mxu0 0
      %668 = vmatpush1.bf16.msra.mxu0 0
      %669 = vmatprep.subr.bf16.mxu0 0
      %670 = vmatpush1.bf16.msra.mxu0 0
      %671 = vmatprep.subr.bf16.mxu0 0
      %672 = vmatpush1.bf16.msra.mxu0 0
      %673 = vmatprep.subr.bf16.mxu0 0
      %674 = vmatpush1.bf16.msra.mxu0 0
      %675 = vmatprep.subr.bf16.mxu0 0
      %676 = vmatpush1.bf16.msra.mxu0 %v656
      %677 = vmatprep.subr.bf16.mxu0 0
      %678 = vmatpush2.bf16.msra.mxu0 0
      %679 = vmatprep.subr.bf16.mxu0 0
      %680 = vmatpush2.bf16.msra.mxu0 0
      %681 = vmatprep.subr.bf16.mxu0 0
      %682 = vmatpush2.bf16.msra.mxu0 0
      %683 = vmatprep.subr.bf16.mxu0 0
      %684 = vmatpush2.bf16.msra.mxu0 0
      %685 = vmatprep.subr.bf16.mxu0 0
      %686 = vmatpush2.bf16.msra.mxu0 0
      %687 = vmatprep.subr.bf16.mxu0 0
      %688 = vmatpush2.bf16.msra.mxu0 0
      %689 = vmatprep.subr.bf16.mxu0 0
      %690 = vmatpush2.bf16.msra.mxu0 0
      %691 = vmatprep.subr.bf16.mxu0 0
      %692 = vmatpush2.bf16.msra.mxu0 0
      %693 = vmatprep.mubr.bf16.mxu0 0
      %694 = vmatmul.mubr.bf16.gmra.mxu0 %v659
      %v695 = vpop.f32.mrf.mxu0
      %v696 = vadd.f32 0.0, %v695
      %v697 = vpop.f32.mrf.mxu0
      %v698 = vpop.f32.mrf.mxu0
      %v699 = vadd.f32 0.0, %v698
      %v700 = vpop.f32.mrf.mxu0
      %701 = vdwg.mxu0
      %702 = vrot.lane.b32.xlu0 %v208, 96
      %v703 = vpop.permute.xlu0 %702
      %704 = vrot.lane.b32.xlu0 %v209, 96
      %v705 = vpop.permute.xlu0 %704
      %v707 = vsel %vm210, %v703, 0
      %v710 = vsel %vm210, %v705, 0
      %712 = vmatprep.subr.bf16.mxu0 0
      %713 = vmatpush1.bf16.xpose.msra.mxu0 0
      %714 = vmatprep.subr.bf16.mxu0 0
      %715 = vmatpush1.bf16.xpose.msra.mxu0 0
      %716 = vmatprep.subr.bf16.mxu0 0
      %717 = vmatpush1.bf16.xpose.msra.mxu0 0
      %718 = vmatprep.subr.bf16.mxu0 0
      %719 = vmatpush1.bf16.xpose.msra.mxu0 0
      %720 = vmatprep.subr.bf16.mxu0 0
      %721 = vmatpush1.bf16.xpose.msra.mxu0 0
      %722 = vmatprep.subr.bf16.mxu0 0
      %723 = vmatpush1.bf16.xpose.msra.mxu0 0
      %724 = vmatprep.subr.bf16.mxu0 0
      %725 = vmatpush1.bf16.xpose.msra.mxu0 0
      %726 = vmatprep.subr.bf16.mxu0 0
      %727 = vmatpush1.bf16.xpose.msra.mxu0 %v710
      %728 = vmatprep.subr.bf16.mxu0 0
      %729 = vmatpush2.bf16.xpose.msra.mxu0 0
      %730 = vmatprep.subr.bf16.mxu0 0
      %731 = vmatpush2.bf16.xpose.msra.mxu0 0
      %732 = vmatprep.subr.bf16.mxu0 0
      %733 = vmatpush2.bf16.xpose.msra.mxu0 0
      %734 = vmatprep.subr.bf16.mxu0 0
      %735 = vmatpush2.bf16.xpose.msra.mxu0 0
      %736 = vmatprep.subr.bf16.mxu0 0
      %737 = vmatpush2.bf16.xpose.msra.mxu0 0
      %738 = vmatprep.subr.bf16.mxu0 0
      %739 = vmatpush2.bf16.xpose.msra.mxu0 0
      %740 = vmatprep.subr.bf16.mxu0 0
      %741 = vmatpush2.bf16.xpose.msra.mxu0 0
      %742 = vmatprep.subr.bf16.mxu0 0
      %743 = vmatpush2.bf16.xpose.msra.mxu0 0
      %744 = vmatprep.mubr.bf16.mxu0 0
      %745 = vmatmul.mubr.bf16.gmra.mxu0 %v707
      %v746 = vpop.f32.mrf.mxu0
      %v747 = vadd.f32 0.0, %v746
      %v748 = vpop.f32.mrf.mxu0
      %v749 = vpop.f32.mrf.mxu0
      %v750 = vadd.f32 0.0, %v749
      %v751 = vpop.f32.mrf.mxu0
      %752 = vdwg.mxu0
      %v753 = vmul.f32 %v747, 0.35355338
      %v754 = vmul.f32 %v750, 0.35355338
      %v755 = vsel %vm260, %v753, -inf
      %756 = vmax.xlane.f32.xlu0 %v755
      %v757 = vpop.xlane.xlu0 %756
      %v758 = vsel %vm260, %v754, -inf
      %759 = vmax.xlane.f32.xlu0 %v758
      %v760 = vpop.xlane.xlu0 %759
      %v761 = vsub.f32 %v753, %v757
      %v762 = vsub.f32 %v754, %v760
      %v763 = vmul.f32 %v761, 1.442695
      %v764 = vpow.pop %v763
      %v765 = vmul.f32 %v762, 1.442695
      %v766 = vpow.pop %v765
      %v767 = vsel %vm260, %v764, 0.0
      %768 = vadd.xlane.f32.xlu0 %v767
      %v769 = vpop.xlane.xlu0 %768
      %v770 = vsel %vm260, %v766, 0.0
      %771 = vadd.xlane.f32.xlu0 %v770
      %v772 = vpop.xlane.xlu0 %771
      %v773 = vrcp.pop %v769
      %v774 = vrcp.pop %v772
      %v775 = vmul.f32 %v764, %v773
      %v776 = vmul.f32 %v766, %v774
      %v777 = vpack.c.bf16 %v776, %v775
      %778 = vrot.lane.b32.xlu0 %v209, 32
      %v779 = vpop.permute.xlu0 %778
      %v782 = vsel %vm260, %v777, 0
      %784 = vmatprep.subr.bf16.mxu0 0
      %785 = vmatpush1.bf16.msra.mxu0 0
      %786 = vmatprep.subr.bf16.mxu0 0
      %787 = vmatpush1.bf16.msra.mxu0 0
      %788 = vmatprep.subr.bf16.mxu0 0
      %789 = vmatpush1.bf16.msra.mxu0 0
      %790 = vmatprep.subr.bf16.mxu0 0
      %791 = vmatpush1.bf16.msra.mxu0 0
      %792 = vmatprep.subr.bf16.mxu0 0
      %793 = vmatpush1.bf16.msra.mxu0 0
      %794 = vmatprep.subr.bf16.mxu0 0
      %795 = vmatpush1.bf16.msra.mxu0 0
      %796 = vmatprep.subr.bf16.mxu0 0
      %797 = vmatpush1.bf16.msra.mxu0 0
      %798 = vmatprep.subr.bf16.mxu0 0
      %799 = vmatpush1.bf16.msra.mxu0 %v779
      %800 = vmatprep.subr.bf16.mxu0 0
      %801 = vmatpush2.bf16.msra.mxu0 0
      %802 = vmatprep.subr.bf16.mxu0 0
      %803 = vmatpush2.bf16.msra.mxu0 0
      %804 = vmatprep.subr.bf16.mxu0 0
      %805 = vmatpush2.bf16.msra.mxu0 0
      %806 = vmatprep.subr.bf16.mxu0 0
      %807 = vmatpush2.bf16.msra.mxu0 0
      %808 = vmatprep.subr.bf16.mxu0 0
      %809 = vmatpush2.bf16.msra.mxu0 0
      %810 = vmatprep.subr.bf16.mxu0 0
      %811 = vmatpush2.bf16.msra.mxu0 0
      %812 = vmatprep.subr.bf16.mxu0 0
      %813 = vmatpush2.bf16.msra.mxu0 0
      %814 = vmatprep.subr.bf16.mxu0 0
      %815 = vmatpush2.bf16.msra.mxu0 0
      %816 = vmatprep.mubr.bf16.mxu0 0
      %817 = vmatmul.mubr.bf16.gmra.mxu0 %v782
      %v818 = vpop.f32.mrf.mxu0
      %v819 = vadd.f32 0.0, %v818
      %v820 = vpop.f32.mrf.mxu0
      %v821 = vpop.f32.mrf.mxu0
      %v822 = vadd.f32 0.0, %v821
      %v823 = vpop.f32.mrf.mxu0
      %824 = vdwg.mxu0
      %825 = vrot.lane.b32.xlu0 %v208, 88
      %v826 = vpop.permute.xlu0 %825
      %827 = vrot.lane.b32.xlu0 %v209, 88
      %v828 = vpop.permute.xlu0 %827
      %v830 = vsel %vm210, %v826, 0
      %v833 = vsel %vm210, %v828, 0
      %835 = vmatprep.subr.bf16.mxu0 0
      %836 = vmatpush1.bf16.xpose.msra.mxu0 0
      %837 = vmatprep.subr.bf16.mxu0 0
      %838 = vmatpush1.bf16.xpose.msra.mxu0 0
      %839 = vmatprep.subr.bf16.mxu0 0
      %840 = vmatpush1.bf16.xpose.msra.mxu0 0
      %841 = vmatprep.subr.bf16.mxu0 0
      %842 = vmatpush1.bf16.xpose.msra.mxu0 0
      %843 = vmatprep.subr.bf16.mxu0 0
      %844 = vmatpush1.bf16.xpose.msra.mxu0 0
      %845 = vmatprep.subr.bf16.mxu0 0
      %846 = vmatpush1.bf16.xpose.msra.mxu0 0
      %847 = vmatprep.subr.bf16.mxu0 0
      %848 = vmatpush1.bf16.xpose.msra.mxu0 0
      %849 = vmatprep.subr.bf16.mxu0 0
      %850 = vmatpush1.bf16.xpose.msra.mxu0 %v833
      %851 = vmatprep.subr.bf16.mxu0 0
      %852 = vmatpush2.bf16.xpose.msra.mxu0 0
      %853 = vmatprep.subr.bf16.mxu0 0
      %854 = vmatpush2.bf16.xpose.msra.mxu0 0
      %855 = vmatprep.subr.bf16.mxu0 0
      %856 = vmatpush2.bf16.xpose.msra.mxu0 0
      %857 = vmatprep.subr.bf16.mxu0 0
      %858 = vmatpush2.bf16.xpose.msra.mxu0 0
      %859 = vmatprep.subr.bf16.mxu0 0
      %860 = vmatpush2.bf16.xpose.msra.mxu0 0
      %861 = vmatprep.subr.bf16.mxu0 0
      %862 = vmatpush2.bf16.xpose.msra.mxu0 0
      %863 = vmatprep.subr.bf16.mxu0 0
      %864 = vmatpush2.bf16.xpose.msra.mxu0 0
      %865 = vmatprep.subr.bf16.mxu0 0
      %866 = vmatpush2.bf16.xpose.msra.mxu0 0
      %867 = vmatprep.mubr.bf16.mxu0 0
      %868 = vmatmul.mubr.bf16.gmra.mxu0 %v830
      %v869 = vpop.f32.mrf.mxu0
      %v870 = vadd.f32 0.0, %v869
      %v871 = vpop.f32.mrf.mxu0
      %v872 = vpop.f32.mrf.mxu0
      %v873 = vadd.f32 0.0, %v872
      %v874 = vpop.f32.mrf.mxu0
      %875 = vdwg.mxu0
      %v876 = vmul.f32 %v870, 0.35355338
      %v877 = vmul.f32 %v873, 0.35355338
      %v878 = vsel %vm260, %v876, -inf
      %879 = vmax.xlane.f32.xlu0 %v878
      %v880 = vpop.xlane.xlu0 %879
      %v881 = vsel %vm260, %v877, -inf
      %882 = vmax.xlane.f32.xlu0 %v881
      %v883 = vpop.xlane.xlu0 %882
      %v884 = vsub.f32 %v876, %v880
      %v885 = vsub.f32 %v877, %v883
      %v886 = vmul.f32 %v884, 1.442695
      %v887 = vpow.pop %v886
      %v888 = vmul.f32 %v885, 1.442695
      %v889 = vpow.pop %v888
      %v890 = vsel %vm260, %v887, 0.0
      %891 = vadd.xlane.f32.xlu0 %v890
      %v892 = vpop.xlane.xlu0 %891
      %v893 = vsel %vm260, %v889, 0.0
      %894 = vadd.xlane.f32.xlu0 %v893
      %v895 = vpop.xlane.xlu0 %894
      %v896 = vrcp.pop %v892
      %v897 = vrcp.pop %v895
      %v898 = vmul.f32 %v887, %v896
      %v899 = vmul.f32 %v889, %v897
      %v900 = vpack.c.bf16 %v899, %v898
      %901 = vrot.lane.b32.xlu0 %v209, 24
      %v902 = vpop.permute.xlu0 %901
      %v905 = vsel %vm260, %v900, 0
      %907 = vmatprep.subr.bf16.mxu0 0
      %908 = vmatpush1.bf16.msra.mxu0 0
      %909 = vmatprep.subr.bf16.mxu0 0
      %910 = vmatpush1.bf16.msra.mxu0 0
      %911 = vmatprep.subr.bf16.mxu0 0
      %912 = vmatpush1.bf16.msra.mxu0 0
      %913 = vmatprep.subr.bf16.mxu0 0
      %914 = vmatpush1.bf16.msra.mxu0 0
      %915 = vmatprep.subr.bf16.mxu0 0
      %916 = vmatpush1.bf16.msra.mxu0 0
      %917 = vmatprep.subr.bf16.mxu0 0
      %918 = vmatpush1.bf16.msra.mxu0 0
      %919 = vmatprep.subr.bf16.mxu0 0
      %920 = vmatpush1.bf16.msra.mxu0 0
      %921 = vmatprep.subr.bf16.mxu0 0
      %922 = vmatpush1.bf16.msra.mxu0 %v902
      %923 = vmatprep.subr.bf16.mxu0 0
      %924 = vmatpush2.bf16.msra.mxu0 0
      %925 = vmatprep.subr.bf16.mxu0 0
      %926 = vmatpush2.bf16.msra.mxu0 0
      %927 = vmatprep.subr.bf16.mxu0 0
      %928 = vmatpush2.bf16.msra.mxu0 0
      %929 = vmatprep.subr.bf16.mxu0 0
      %930 = vmatpush2.bf16.msra.mxu0 0
      %931 = vmatprep.subr.bf16.mxu0 0
      %932 = vmatpush2.bf16.msra.mxu0 0
      %933 = vmatprep.subr.bf16.mxu0 0
      %934 = vmatpush2.bf16.msra.mxu0 0
      %935 = vmatprep.subr.bf16.mxu0 0
      %936 = vmatpush2.bf16.msra.mxu0 0
      %937 = vmatprep.subr.bf16.mxu0 0
      %938 = vmatpush2.bf16.msra.mxu0 0
      %939 = vmatprep.mubr.bf16.mxu0 0
      %940 = vmatmul.mubr.bf16.gmra.mxu0 %v905
      %v941 = vpop.f32.mrf.mxu0
      %v942 = vadd.f32 0.0, %v941
      %v943 = vpop.f32.mrf.mxu0
      %v944 = vpop.f32.mrf.mxu0
      %v945 = vadd.f32 0.0, %v944
      %v946 = vpop.f32.mrf.mxu0
      %947 = vdwg.mxu0
      %948 = vrot.lane.b32.xlu0 %v208, 80
      %v949 = vpop.permute.xlu0 %948
      %950 = vrot.lane.b32.xlu0 %v209, 80
      %v951 = vpop.permute.xlu0 %950
      %v953 = vsel %vm210, %v949, 0
      %v956 = vsel %vm210, %v951, 0
      %958 = vmatprep.subr.bf16.mxu0 0
      %959 = vmatpush1.bf16.xpose.msra.mxu0 0
      %960 = vmatprep.subr.bf16.mxu0 0
      %961 = vmatpush1.bf16.xpose.msra.mxu0 0
      %962 = vmatprep.subr.bf16.mxu0 0
      %963 = vmatpush1.bf16.xpose.msra.mxu0 0
      %964 = vmatprep.subr.bf16.mxu0 0
      %965 = vmatpush1.bf16.xpose.msra.mxu0 0
      %966 = vmatprep.subr.bf16.mxu0 0
      %967 = vmatpush1.bf16.xpose.msra.mxu0 0
      %968 = vmatprep.subr.bf16.mxu0 0
      %969 = vmatpush1.bf16.xpose.msra.mxu0 0
      %970 = vmatprep.subr.bf16.mxu0 0
      %971 = vmatpush1.bf16.xpose.msra.mxu0 0
      %972 = vmatprep.subr.bf16.mxu0 0
      %973 = vmatpush1.bf16.xpose.msra.mxu0 %v956
      %974 = vmatprep.subr.bf16.mxu0 0
      %975 = vmatpush2.bf16.xpose.msra.mxu0 0
      %976 = vmatprep.subr.bf16.mxu0 0
      %977 = vmatpush2.bf16.xpose.msra.mxu0 0
      %978 = vmatprep.subr.bf16.mxu0 0
      %979 = vmatpush2.bf16.xpose.msra.mxu0 0
      %980 = vmatprep.subr.bf16.mxu0 0
      %981 = vmatpush2.bf16.xpose.msra.mxu0 0
      %982 = vmatprep.subr.bf16.mxu0 0
      %983 = vmatpush2.bf16.xpose.msra.mxu0 0
      %984 = vmatprep.subr.bf16.mxu0 0
      %985 = vmatpush2.bf16.xpose.msra.mxu0 0
      %986 = vmatprep.subr.bf16.mxu0 0
      %987 = vmatpush2.bf16.xpose.msra.mxu0 0
      %988 = vmatprep.subr.bf16.mxu0 0
      %989 = vmatpush2.bf16.xpose.msra.mxu0 0
      %990 = vmatprep.mubr.bf16.mxu0 0
      %991 = vmatmul.mubr.bf16.gmra.mxu0 %v953
      %v992 = vpop.f32.mrf.mxu0
      %v993 = vadd.f32 0.0, %v992
      %v994 = vpop.f32.mrf.mxu0
      %v995 = vpop.f32.mrf.mxu0
      %v996 = vadd.f32 0.0, %v995
      %v997 = vpop.f32.mrf.mxu0
      %998 = vdwg.mxu0
      %v999 = vmul.f32 %v993, 0.35355338
      %v1000 = vmul.f32 %v996, 0.35355338
      %v1001 = vsel %vm260, %v999, -inf
      %1002 = vmax.xlane.f32.xlu0 %v1001
      %v1003 = vpop.xlane.xlu0 %1002
      %v1004 = vsel %vm260, %v1000, -inf
      %1005 = vmax.xlane.f32.xlu0 %v1004
      %v1006 = vpop.xlane.xlu0 %1005
      %v1007 = vsub.f32 %v999, %v1003
      %v1008 = vsub.f32 %v1000, %v1006
      %v1009 = vmul.f32 %v1007, 1.442695
      %v1010 = vpow.pop %v1009
      %v1011 = vmul.f32 %v1008, 1.442695
      %v1012 = vpow.pop %v1011
      %v1013 = vsel %vm260, %v1010, 0.0
      %1014 = vadd.xlane.f32.xlu0 %v1013
      %v1015 = vpop.xlane.xlu0 %1014
      %v1016 = vsel %vm260, %v1012, 0.0
      %1017 = vadd.xlane.f32.xlu0 %v1016
      %v1018 = vpop.xlane.xlu0 %1017
      %v1019 = vrcp.pop %v1015
      %v1020 = vrcp.pop %v1018
      %v1021 = vmul.f32 %v1010, %v1019
      %v1022 = vmul.f32 %v1012, %v1020
      %v1023 = vpack.c.bf16 %v1022, %v1021
      %1024 = vrot.lane.b32.xlu0 %v209, 16
      %v1025 = vpop.permute.xlu0 %1024
      %v1028 = vsel %vm260, %v1023, 0
      %1030 = vmatprep.subr.bf16.mxu0 0
      %1031 = vmatpush1.bf16.msra.mxu0 0
      %1032 = vmatprep.subr.bf16.mxu0 0
      %1033 = vmatpush1.bf16.msra.mxu0 0
      %1034 = vmatprep.subr.bf16.mxu0 0
      %1035 = vmatpush1.bf16.msra.mxu0 0
      %1036 = vmatprep.subr.bf16.mxu0 0
      %1037 = vmatpush1.bf16.msra.mxu0 0
      %1038 = vmatprep.subr.bf16.mxu0 0
      %1039 = vmatpush1.bf16.msra.mxu0 0
      %1040 = vmatprep.subr.bf16.mxu0 0
      %1041 = vmatpush1.bf16.msra.mxu0 0
      %1042 = vmatprep.subr.bf16.mxu0 0
      %1043 = vmatpush1.bf16.msra.mxu0 0
      %1044 = vmatprep.subr.bf16.mxu0 0
      %1045 = vmatpush1.bf16.msra.mxu0 %v1025
      %1046 = vmatprep.subr.bf16.mxu0 0
      %1047 = vmatpush2.bf16.msra.mxu0 0
      %1048 = vmatprep.subr.bf16.mxu0 0
      %1049 = vmatpush2.bf16.msra.mxu0 0
      %1050 = vmatprep.subr.bf16.mxu0 0
      %1051 = vmatpush2.bf16.msra.mxu0 0
      %1052 = vmatprep.subr.bf16.mxu0 0
      %1053 = vmatpush2.bf16.msra.mxu0 0
      %1054 = vmatprep.subr.bf16.mxu0 0
      %1055 = vmatpush2.bf16.msra.mxu0 0
      %1056 = vmatprep.subr.bf16.mxu0 0
      %1057 = vmatpush2.bf16.msra.mxu0 0
      %1058 = vmatprep.subr.bf16.mxu0 0
      %1059 = vmatpush2.bf16.msra.mxu0 0
      %1060 = vmatprep.subr.bf16.mxu0 0
      %1061 = vmatpush2.bf16.msra.mxu0 0
      %1062 = vmatprep.mubr.bf16.mxu0 0
      %1063 = vmatmul.mubr.bf16.gmra.mxu0 %v1028
      %v1064 = vpop.f32.mrf.mxu0
      %v1065 = vadd.f32 0.0, %v1064
      %v1066 = vpop.f32.mrf.mxu0
      %v1067 = vpop.f32.mrf.mxu0
      %v1068 = vadd.f32 0.0, %v1067
      %v1069 = vpop.f32.mrf.mxu0
      %1070 = vdwg.mxu0
      %1071 = vrot.lane.b32.xlu0 %v208, 72
      %v1072 = vpop.permute.xlu0 %1071
      %1073 = vrot.lane.b32.xlu0 %v209, 72
      %v1074 = vpop.permute.xlu0 %1073
      %v1076 = vsel %vm210, %v1072, 0
      %v1079 = vsel %vm210, %v1074, 0
      %1081 = vmatprep.subr.bf16.mxu0 0
      %1082 = vmatpush1.bf16.xpose.msra.mxu0 0
      %1083 = vmatprep.subr.bf16.mxu0 0
      %1084 = vmatpush1.bf16.xpose.msra.mxu0 0
      %1085 = vmatprep.subr.bf16.mxu0 0
      %1086 = vmatpush1.bf16.xpose.msra.mxu0 0
      %1087 = vmatprep.subr.bf16.mxu0 0
      %1088 = vmatpush1.bf16.xpose.msra.mxu0 0
      %1089 = vmatprep.subr.bf16.mxu0 0
      %1090 = vmatpush1.bf16.xpose.msra.mxu0 0
      %1091 = vmatprep.subr.bf16.mxu0 0
      %1092 = vmatpush1.bf16.xpose.msra.mxu0 0
      %1093 = vmatprep.subr.bf16.mxu0 0
      %1094 = vmatpush1.bf16.xpose.msra.mxu0 0
      %1095 = vmatprep.subr.bf16.mxu0 0
      %1096 = vmatpush1.bf16.xpose.msra.mxu0 %v1079
      %1097 = vmatprep.subr.bf16.mxu0 0
      %1098 = vmatpush2.bf16.xpose.msra.mxu0 0
      %1099 = vmatprep.subr.bf16.mxu0 0
      %1100 = vmatpush2.bf16.xpose.msra.mxu0 0
      %1101 = vmatprep.subr.bf16.mxu0 0
      %1102 = vmatpush2.bf16.xpose.msra.mxu0 0
      %1103 = vmatprep.subr.bf16.mxu0 0
      %1104 = vmatpush2.bf16.xpose.msra.mxu0 0
      %1105 = vmatprep.subr.bf16.mxu0 0
      %1106 = vmatpush2.bf16.xpose.msra.mxu0 0
      %1107 = vmatprep.subr.bf16.mxu0 0
      %1108 = vmatpush2.bf16.xpose.msra.mxu0 0
      %1109 = vmatprep.subr.bf16.mxu0 0
      %1110 = vmatpush2.bf16.xpose.msra.mxu0 0
      %1111 = vmatprep.subr.bf16.mxu0 0
      %1112 = vmatpush2.bf16.xpose.msra.mxu0 0
      %1113 = vmatprep.mubr.bf16.mxu0 0
      %1114 = vmatmul.mubr.bf16.gmra.mxu0 %v1076
      %v1115 = vpop.f32.mrf.mxu0
      %v1116 = vadd.f32 0.0, %v1115
      %v1117 = vpop.f32.mrf.mxu0
      %v1118 = vpop.f32.mrf.mxu0
      %v1119 = vadd.f32 0.0, %v1118
      %v1120 = vpop.f32.mrf.mxu0
      %1121 = vdwg.mxu0
      %v1122 = vmul.f32 %v1116, 0.35355338
      %v1123 = vmul.f32 %v1119, 0.35355338
      %v1124 = vsel %vm260, %v1122, -inf
      %1125 = vmax.xlane.f32.xlu0 %v1124
      %v1126 = vpop.xlane.xlu0 %1125
      %v1127 = vsel %vm260, %v1123, -inf
      %1128 = vmax.xlane.f32.xlu0 %v1127
      %v1129 = vpop.xlane.xlu0 %1128
      %v1130 = vsub.f32 %v1122, %v1126
      %v1131 = vsub.f32 %v1123, %v1129
      %v1132 = vmul.f32 %v1130, 1.442695
      %v1133 = vpow.pop %v1132
      %v1134 = vmul.f32 %v1131, 1.442695
      %v1135 = vpow.pop %v1134
      %v1136 = vsel %vm260, %v1133, 0.0
      %1137 = vadd.xlane.f32.xlu0 %v1136
      %v1138 = vpop.xlane.xlu0 %1137
      %v1139 = vsel %vm260, %v1135, 0.0
      %1140 = vadd.xlane.f32.xlu0 %v1139
      %v1141 = vpop.xlane.xlu0 %1140
      %v1142 = vrcp.pop %v1138
      %v1143 = vrcp.pop %v1141
      %v1144 = vmul.f32 %v1133, %v1142
      %v1145 = vmul.f32 %v1135, %v1143
      %v1146 = vpack.c.bf16 %v1145, %v1144
      %1147 = vrot.lane.b32.xlu0 %v209, 8
      %v1148 = vpop.permute.xlu0 %1147
      %v1151 = vsel %vm260, %v1146, 0
      %1153 = vmatprep.subr.bf16.mxu0 0
      %1154 = vmatpush1.bf16.msra.mxu0 0
      %1155 = vmatprep.subr.bf16.mxu0 0
      %1156 = vmatpush1.bf16.msra.mxu0 0
      %1157 = vmatprep.subr.bf16.mxu0 0
      %1158 = vmatpush1.bf16.msra.mxu0 0
      %1159 = vmatprep.subr.bf16.mxu0 0
      %1160 = vmatpush1.bf16.msra.mxu0 0
      %1161 = vmatprep.subr.bf16.mxu0 0
      %1162 = vmatpush1.bf16.msra.mxu0 0
      %1163 = vmatprep.subr.bf16.mxu0 0
      %1164 = vmatpush1.bf16.msra.mxu0 0
      %1165 = vmatprep.subr.bf16.mxu0 0
      %1166 = vmatpush1.bf16.msra.mxu0 0
      %1167 = vmatprep.subr.bf16.mxu0 0
      %1168 = vmatpush1.bf16.msra.mxu0 %v1148
      %1169 = vmatprep.subr.bf16.mxu0 0
      %1170 = vmatpush2.bf16.msra.mxu0 0
      %1171 = vmatprep.subr.bf16.mxu0 0
      %1172 = vmatpush2.bf16.msra.mxu0 0
      %1173 = vmatprep.subr.bf16.mxu0 0
      %1174 = vmatpush2.bf16.msra.mxu0 0
      %1175 = vmatprep.subr.bf16.mxu0 0
      %1176 = vmatpush2.bf16.msra.mxu0 0
      %1177 = vmatprep.subr.bf16.mxu0 0
      %1178 = vmatpush2.bf16.msra.mxu0 0
      %1179 = vmatprep.subr.bf16.mxu0 0
      %1180 = vmatpush2.bf16.msra.mxu0 0
      %1181 = vmatprep.subr.bf16.mxu0 0
      %1182 = vmatpush2.bf16.msra.mxu0 0
      %1183 = vmatprep.subr.bf16.mxu0 0
      %1184 = vmatpush2.bf16.msra.mxu0 0
      %1185 = vmatprep.mubr.bf16.mxu0 0
      %1186 = vmatmul.mubr.bf16.gmra.mxu0 %v1151
      %v1187 = vpop.f32.mrf.mxu0
      %v1188 = vadd.f32 0.0, %v1187
      %v1189 = vpop.f32.mrf.mxu0
      %v1190 = vpop.f32.mrf.mxu0
      %v1191 = vadd.f32 0.0, %v1190
      %v1192 = vpop.f32.mrf.mxu0
      %1193 = vdwg.mxu0
      %1196 = vrot.lane.b32.xlu0 %v450, 8
      %v1197 = vpop.permute.xlu0 %1196
      %1198 = vrot.lane.b32.xlu0 %v453, 8
      %v1199 = vpop.permute.xlu0 %1198
      %1204 = vrot.lane.b32.xlu0 %v573, 16
      %v1205 = vpop.permute.xlu0 %1204
      %1206 = vrot.lane.b32.xlu0 %v576, 16
      %v1207 = vpop.permute.xlu0 %1206
      %1212 = vrot.lane.b32.xlu0 %v696, 24
      %v1213 = vpop.permute.xlu0 %1212
      %1214 = vrot.lane.b32.xlu0 %v699, 24
      %v1215 = vpop.permute.xlu0 %1214
      %1220 = vrot.lane.b32.xlu0 %v819, 32
      %v1221 = vpop.permute.xlu0 %1220
      %1222 = vrot.lane.b32.xlu0 %v822, 32
      %v1223 = vpop.permute.xlu0 %1222
      %1228 = vrot.lane.b32.xlu0 %v942, 40
      %v1229 = vpop.permute.xlu0 %1228
      %1230 = vrot.lane.b32.xlu0 %v945, 40
      %v1231 = vpop.permute.xlu0 %1230
      %1236 = vrot.lane.b32.xlu0 %v1065, 48
      %v1237 = vpop.permute.xlu0 %1236
      %1238 = vrot.lane.b32.xlu0 %v1068, 48
      %v1239 = vpop.permute.xlu0 %1238
      %1244 = vrot.lane.b32.xlu0 %v1188, 56
      %v1245 = vpop.permute.xlu0 %1244
      %1246 = vrot.lane.b32.xlu0 %v1191, 56
      %v1247 = vpop.permute.xlu0 %1246
      %v1250 = vsel %vm210, %v326, %v1197
      %v1251 = vsel %vm210, %v329, %v1199
      %v1252 = vsel %vm260, %v1250, %v1205
      %v1253 = vsel %vm260, %v1251, %v1207
      %vm1254 = vcmask 195584
      %v1255 = vsel %vm1254, %v1252, %v1213
      %v1256 = vsel %vm1254, %v1253, %v1215
      %vm1257 = vcmask 261120
      %v1258 = vsel %vm1257, %v1255, %v1221
      %v1259 = vsel %vm1257, %v1256, %v1223
      %vm1260 = vcmask 326656
      %v1261 = vsel %vm1260, %v1258, %v1229
      %v1262 = vsel %vm1260, %v1259, %v1231
      %vm1263 = vcmask 392192
      %v1264 = vsel %vm1263, %v1261, %v1237
      %v1265 = vsel %vm1263, %v1262, %v1239
      %vm1266 = vcmask 457728
      %v1267 = vsel %vm1266, %v1264, %v1245
      %v1268 = vsel %vm1266, %v1265, %v1247
      %vm1269 = vcmask 523264
      %1270 = vst.msk [vmem:[%s201] sm:$0xff] %vm1269, %v1267
      %1271 = vst.msk [vmem:[%s201 + $0x8] sm:$0xff] %vm1269, %v1268
      %s1272 = smul.u32 2, %s18
      %p1273 = scmp.lt.s32.totalorder %s17, 1
      %s1274 = scalar_select %p1273, %s17, 1
      %p1275 = scmp.lt.s32.totalorder %s1272, 1
      %s1276 = scalar_select %p1275, %s1272, 1
      %s1277 = smul.addr %s1274, 2
      %s1278 = sadd.s32 %s1276, %s1277
      %s1279 = smul.addr %s1278, 8
      %s1280 = scalar_lea.vmem %s2, %s1279
      // Predicated region
      $region29: #{completion_transformer_forward.61} parent=27 // pred_check
        %p1281 = pneg %p99
      $region30: #{completion_transformer_forward.61} parent=27 // pred_check_branch
        %1283 = sbr.rel (%p1281) target = $region32
      $region31: #{completion_transformer_forward.61} parent=27 // pred_region
        %s1284 = smul.u32 2, %s18
      $region32: #{completion_transformer_forward.61} parent=27 // pred_fallthru
        _
    $region28: #{completion_transformer_forward.61} parent=5 // pred_fallthru
      _
    %p1285 = scmp.le.s32.totalorder 2, %s8
    // Predicated region
    $region33: #{completion_transformer_forward.61} parent=5 // pred_check
      %p1286 = pneg %p1285
    $region34: #{completion_transformer_forward.61} parent=5 // pred_check_branch
      %1288 = sbr.rel (%p1286) target = $region36
    $region35: #{completion_transformer_forward.61} parent=5 // pred_region
      %s1289 = ssub.s32 %s8, 2
      // Predicated region
      $region37: #{completion_transformer_forward.61} parent=35 // pred_check
        %p1290 = pneg %p105
      $region38: #{completion_transformer_forward.61} parent=35 // pred_check_branch
        %1292 = sbr.rel (%p1290) target = $region40
      $region39: #{completion_transformer_forward.61} parent=35 // pred_region
        %s1293 = smul.u32 2, %s20
        %p1294 = scmp.lt.s32.totalorder %s19, 1
        %s1295 = scalar_select %p1294, %s19, 1
        %p1296 = scmp.lt.s32.totalorder %s1293, 1
        %s1297 = scalar_select %p1296, %s1293, 1
        %s1298 = smul.addr %s1295, 2
        %s1299 = sadd.s32 %s1297, %s1298
        %s1300 = smul.addr %s1299, 8
        %s1301 = scalar_lea.vmem %s2, %s1300
      $region40: #{completion_transformer_forward.61} parent=35 // pred_fallthru
        _
    $region36: #{completion_transformer_forward.61} parent=5 // pred_fallthru
      _
  $region6: #{completion_transformer_forward.61} parent=0 // loop_footer
    %s12 = sadd.s32 1, %s8
  $region7: #{completion_transformer_forward.61} parent=0 // loop_footer_branch
    %7 = sbr.rel target = $region3
  $region8: #{completion_transformer_forward.61} parent=0 // loop_exit
    _

</llo_original>
